<compile_context>
chip_gen: v6e
topology: v6e:2x2x1
jax: 0.10.0
libtpu: 0.0.40
codegen_flags: <defaults>
</compile_context>

<pallas_src>
import functools
import math

import jax
import jax.numpy as jnp
from jax import lax
from jax.experimental import pallas as pl
from jax.experimental.pallas import tpu as pltpu


_COMPILER_PARAMS = pltpu.CompilerParams(
    dimension_semantics=("parallel",),          # batch grid -> both TCs on v7x
    vmem_limit_bytes=32 * 1024 * 1024,          # explicit scoped-VMEM budget (safe on all chips)
)


# ---------------------------------------------------------------------------
# Positional-encoding buffer (identical math to the PyTorch __init__)
# ---------------------------------------------------------------------------
def make_positional_encoding(d_model: int, max_len: int = 1700) -> jnp.ndarray:
    position = jnp.arange(max_len, dtype=jnp.float32)[:, None]            # (L, 1)
    div_term = jnp.exp(jnp.arange(0, d_model, 2, dtype=jnp.float32)
                       * (-math.log(10000.0) / d_model))                  # (ceil(D/2),)
    angles = position * div_term                                          # (L, ceil(D/2))
    pe = jnp.zeros((max_len, d_model), dtype=jnp.float32)
    pe = pe.at[:, 0::2].set(jnp.sin(angles))
    n_cos = pe[:, 1::2].shape[-1]
    pe = pe.at[:, 1::2].set(jnp.cos(angles)[:, :n_cos])
    return pe                                                             # (L, D)


def _erf_approx(z):
    # Abramowitz & Stegun 7.1.26 (|err| <= 1.5e-7): exact-GELU semantics using only
    # exp/mul/add/select, which are guaranteed to lower in Mosaic.
    a1, a2, a3, a4, a5 = 0.254829592, -0.284496736, 1.421413741, -1.453152027, 1.061405429
    p = 0.3275911
    az = jnp.abs(z)
    t = 1.0 / (1.0 + p * az)
    poly = ((((a5 * t + a4) * t + a3) * t + a2) * t + a1) * t
    y = 1.0 - poly * jnp.exp(-az * az)
    return jnp.where(z < 0.0, -y, y)


# ---------------------------------------------------------------------------
# Single fused kernel: embedding + pe + L transformer blocks + pooling head
# ---------------------------------------------------------------------------
def _eye_enc_kernel(x_ref, cw_ref, cb_ref, pe_ref,
                    g1_ref, b1_ref, wq_ref, wk_ref, wv_ref, wo_ref, bo_ref,
                    g2_ref, b2_ref, w1_ref, c1_ref, w2_ref, c2_ref,
                    gf_ref, bf_ref, o_ref,
                    *, num_layers, num_heads, head_size, scale, eps):
    xin = x_ref[0].astype(jnp.float32)                   # (T, C)  row 0 = zeroed cls slot
    cw = cw_ref[...].astype(jnp.float32)                 # (C, D)  conv1d(ksize=1) weight
    T, C = xin.shape
    D = cw.shape[1]

    # --- token embedding (1x1 conv) + cls token + positional encoding -------
    # C == 3 is tiny: broadcast MACs on the VPU instead of a K=3 MXU matmul.
    emb = jnp.zeros((T, D), jnp.float32)
    for c in range(C):
        emb = emb + xin[:, c:c + 1] * cw[c:c + 1, :]
    rows = lax.broadcasted_iota(jnp.int32, (T, 1), 0)
    not_cls = (rows > 0).astype(jnp.float32)             # cls row gets no conv bias
    x = emb + not_cls * cb_ref[...].astype(jnp.float32) + pe_ref[...].astype(jnp.float32)

    def _ln(v, g, b):
        mu = jnp.mean(v, axis=-1, keepdims=True)
        var = jnp.mean(jnp.square(v - mu), axis=-1, keepdims=True)
        return (v - mu) * lax.rsqrt(var + eps) * g + b

    # --- pre-norm transformer blocks (static unroll over layers) ------------
    for l in range(num_layers):
        xn = _ln(x, g1_ref[l].astype(jnp.float32), b1_ref[l].astype(jnp.float32))
        q = jnp.dot(xn, wq_ref[l].astype(jnp.float32), preferred_element_type=jnp.float32)
        k = jnp.dot(xn, wk_ref[l].astype(jnp.float32), preferred_element_type=jnp.float32)
        v = jnp.dot(xn, wv_ref[l].astype(jnp.float32), preferred_element_type=jnp.float32)
        wo = wo_ref[l].astype(jnp.float32)

        # concat(heads) @ Wo  ==  sum_h head_h @ Wo[h*hs:(h+1)*hs, :]  (avoids lane concat)
        attn = jnp.zeros_like(x)
        for h in range(num_heads):                       # num_heads is small & static
            s0, s1 = h * head_size, (h + 1) * head_size
            qh, kh, vh = q[:, s0:s1], k[:, s0:s1], v[:, s0:s1]
            scores = lax.dot_general(qh, kh, (((1,), (1,)), ((), ())),
                                     preferred_element_type=jnp.float32) * scale
            scores = scores - jnp.max(scores, axis=-1, keepdims=True)
            pr = jnp.exp(scores)
            pr = pr / jnp.sum(pr, axis=-1, keepdims=True)
            oh = jnp.dot(pr, vh, preferred_element_type=jnp.float32)      # (T, hs)
            attn = attn + jnp.dot(oh, wo[s0:s1, :], preferred_element_type=jnp.float32)
        x = x + attn + bo_ref[l].astype(jnp.float32)

        xn2 = _ln(x, g2_ref[l].astype(jnp.float32), b2_ref[l].astype(jnp.float32))
        h1 = jnp.dot(xn2, w1_ref[l].astype(jnp.float32),
                     preferred_element_type=jnp.float32) + c1_ref[l].astype(jnp.float32)
        h1 = 0.5 * h1 * (1.0 + _erf_approx(h1 * 0.7071067811865476))      # exact GELU
        h2 = jnp.dot(h1, w2_ref[l].astype(jnp.float32),
                     preferred_element_type=jnp.float32) + c2_ref[l].astype(jnp.float32)
        x = x + h2
    # TODO(synk): for very long sequences, tile the attention (flash-style K/V loop)
    # instead of holding the full (T, T) score matrix per head in VMEM.

    # --- final layernorm + cls/mean pooling + second layernorm --------------
    gf = gf_ref[...].astype(jnp.float32)
    bf = bf_ref[...].astype(jnp.float32)
    y = _ln(x, gf, bf)                                   # (T, D)
    cls_tok = y[0:1, :]                                  # (1, D)
    pooled = jnp.sum(y * not_cls, axis=0, keepdims=True) / float(T - 1)
    pooled = _ln(pooled, gf, bf)
    o_ref[0, 0:1, :] = pooled.astype(o_ref.dtype)        # row 0 -> normed mean token
    o_ref[0, 1:2, :] = cls_tok.astype(o_ref.dtype)       # row 1 -> cls token


def eye_transformer_enc_forward(input_ids, params, *, num_heads, eps=1e-5):
    conv_w, conv_b, pe = params["conv_w"], params["conv_b"], params["pe"]
    blocks = params["blocks"]
    B, C, S = input_ids.shape
    D = conv_w.shape[1]
    T = S + 1
    L = len(blocks)
    hdim = blocks[0]["wq"].shape[1]
    assert hdim % num_heads == 0
    head_size = hdim // num_heads
    hidden = blocks[0]["w1"].shape[1]
    dt = input_ids.dtype

    # Layout glue (plain JAX): channels-last + zeroed cls-slot row -> one aligned (T, C)
    # tile per batch element inside the kernel.
    x_t = jnp.swapaxes(input_ids, 1, 2)                                   # (B, S, C)
    x_t = jnp.concatenate([jnp.zeros((B, 1, C), dt), x_t], axis=1)        # (B, T, C)
    pe_slice = pe[:T].astype(dt)                                          # (T, D)

    def stk(name, shape=None):
        a = jnp.stack([blk[name] for blk in blocks], axis=0).astype(dt)
        return a if shape is None else a.reshape(shape)

    g1 = stk("g1", (L, 1, D)); b1 = stk("b1", (L, 1, D))
    wq = stk("wq"); wk = stk("wk"); wv = stk("wv")
    wo = stk("wo"); bo = stk("bo", (L, 1, D))
    g2 = stk("g2", (L, 1, D)); b2 = stk("b2", (L, 1, D))
    w1 = stk("w1"); c1 = stk("c1", (L, 1, hidden))
    w2 = stk("w2"); c2 = stk("c2", (L, 1, D))

    kern = functools.partial(_eye_enc_kernel, num_layers=L, num_heads=num_heads,
                             head_size=head_size, scale=float(D) ** -0.5, eps=eps)

    def fullspec(shape):
        nd = len(shape)
        return pl.BlockSpec(shape, lambda b, _nd=nd: (0,) * _nd)

    out = pl.pallas_call(
        kern,
        out_shape=jax.ShapeDtypeStruct((B, 2, D), dt),
        grid=(B,),
        in_specs=[
            pl.BlockSpec((1, T, C), lambda b: (b, 0, 0)),                 # input tokens
            fullspec((C, D)), fullspec((1, D)), fullspec((T, D)),         # conv_w, conv_b, pe
            fullspec((L, 1, D)), fullspec((L, 1, D)),                     # g1, b1
            fullspec((L, D, hdim)), fullspec((L, D, hdim)), fullspec((L, D, hdim)),  # wq, wk, wv
            fullspec((L, hdim, D)), fullspec((L, 1, D)),                  # wo, bo
            fullspec((L, 1, D)), fullspec((L, 1, D)),                     # g2, b2
            fullspec((L, D, hidden)), fullspec((L, 1, hidden)),           # w1, c1
            fullspec((L, hidden, D)), fullspec((L, 1, D)),                # w2, c2
            fullspec((1, D)), fullspec((1, D)),                           # g_final, b_final
        ],
        out_specs=pl.BlockSpec((1, 2, D), lambda b: (b, 0, 0)),
        compiler_params=_COMPILER_PARAMS,
    )(x_t, conv_w.astype(dt), conv_b.reshape(1, D).astype(dt), pe_slice,
      g1, b1, wq, wk, wv, wo, bo, g2, b2, w1, c1, w2, c2,
      params["g_final"].reshape(1, D).astype(dt),
      params["b_final"].reshape(1, D).astype(dt))

    # row-major (B, 2, D) -> (B, 2D) reproduces torch.cat((mean, cls), dim=1)
    return out.reshape(B, 2 * D)


# ---------------------------------------------------------------------------
# Deterministic parameter construction + pure-JAX reference
# ---------------------------------------------------------------------------
def init_params(key, d_model, num_heads, num_layers, max_len, mlp_ratio=4):
    head_size = d_model // num_heads
    hdim = num_heads * head_size
    hidden = mlp_ratio * d_model
    keys = iter(jax.random.split(key, 2 + 10 * num_layers))

    def nrm(shape, std=0.02):
        return jax.random.normal(next(keys), shape, jnp.float32) * std

    params = {
        "conv_w": nrm((3, d_model), std=0.5),
        "conv_b": nrm((d_model,), std=0.02),
        "pe": make_positional_encoding(d_model, max_len),
        "g_final": jnp.ones((d_model,), jnp.float32),
        "b_final": jnp.zeros((d_model,), jnp.float32),
        "blocks": [],
    }
    for _ in range(num_layers):
        params["blocks"].append({
            "g1": jnp.ones((d_model,), jnp.float32),
            "b1": jnp.zeros((d_model,), jnp.float32),
            "wq": nrm((d_model, hdim)), "wk": nrm((d_model, hdim)), "wv": nrm((d_model, hdim)),
            "wo": nrm((hdim, d_model)), "bo": nrm((d_model,)),
            "g2": jnp.ones((d_model,), jnp.float32),
            "b2": jnp.zeros((d_model,), jnp.float32),
            "w1": nrm((d_model, hidden)), "c1": nrm((hidden,)),
            "w2": nrm((hidden, d_model)), "c2": nrm((d_model,)),
        })
    return params


def _layer_norm_ref(v, g, b, eps):
    mu = jnp.mean(v, axis=-1, keepdims=True)
    var = jnp.mean(jnp.square(v - mu), axis=-1, keepdims=True)
    return (v - mu) * lax.rsqrt(var + eps) * g + b


def reference_forward(input_ids, params, *, num_heads, eps=1e-5):
    hp = lax.Precision.HIGHEST
    conv_w, conv_b, pe = params["conv_w"], params["conv_b"], params["pe"]
    B, C, S = input_ids.shape
    D = conv_w.shape[1]
    emb = jnp.einsum("bcs,cd->bsd", input_ids, conv_w, precision=hp) + conv_b
    x = jnp.concatenate([jnp.zeros((B, 1, D), emb.dtype), emb], axis=1)
    x = x + pe[None, : S + 1, :]
    scale = float(D) ** -0.5
    hs = D // num_heads
    for blk in params["blocks"]:
        xn = _layer_norm_ref(x, blk["g1"], blk["b1"], eps)
        q = jnp.einsum("btd,de->bte", xn, blk["wq"], precision=hp)
        k = jnp.einsum("btd,de->bte", xn, blk["wk"], precision=hp)
        v = jnp.einsum("btd,de->bte", xn, blk["wv"], precision=hp)
        heads = []
        for h in range(num_heads):
            sl = slice(h * hs, (h + 1) * hs)
            s = jnp.einsum("bqe,bke->bqk", q[..., sl], k[..., sl], precision=hp) * scale
            p = jax.nn.softmax(s, axis=-1)
            heads.append(jnp.einsum("bqk,bke->bqe", p, v[..., sl], precision=hp))
        attn = jnp.concatenate(heads, axis=-1)
        attn = jnp.einsum("bte,ed->btd", attn, blk["wo"], precision=hp) + blk["bo"]
        x = x + attn
        xn2 = _layer_norm_ref(x, blk["g2"], blk["b2"], eps)
        h1 = jnp.einsum("btd,dh->bth", xn2, blk["w1"], precision=hp) + blk["c1"]
        h1 = 0.5 * h1 * (1.0 + lax.erf(h1 / jnp.sqrt(jnp.float32(2.0))))
        h2 = jnp.einsum("bth,hd->btd", h1, blk["w2"], precision=hp) + blk["c2"]
        x = x + h2
    y = _layer_norm_ref(x, params["g_final"], params["b_final"], eps)
    cls_tok = y[:, 0, :]
    pooled = jnp.mean(y[:, 1:, :], axis=1)
    pooled = _layer_norm_ref(pooled, params["g_final"], params["b_final"], eps)
    return jnp.concatenate([pooled, cls_tok], axis=-1)


if __name__ == "__main__":
    # Small shapes consistent with the module: input_ids is [batch, 3, seq_len].
    batch, channels, seq_len = 2, 3, 16
    d_model, num_heads, num_layers = 32, 4, 2
    max_len = 64   # smaller max_len for the test; semantics identical to 1700

    key = jax.random.PRNGKey(0)
    k_x, k_p = jax.random.split(key)
    input_ids = jax.random.normal(k_x, (batch, channels, seq_len), dtype=jnp.float32)
    params = init_params(k_p, d_model, num_heads, num_layers, max_len)

    out = eye_transformer_enc_forward(input_ids, params, num_heads=num_heads)
    out = jax.block_until_ready(out)

    ref = reference_forward(input_ids, params, num_heads=num_heads)
    assert out.shape == (batch, 2 * d_model)
    assert bool(jnp.allclose(out, ref, atol=2e-3, rtol=2e-3)), "mismatch vs. reference"

    print("KERNEL_OK")
</pallas_src>

<mosaic_0001>
module attributes {stable_mosaic.version = 11 : i64} {
  func.func @_eye_enc_kernel(%arg0: i32, %arg1: memref<1x17x3xf32, #tpu.memory_space<vmem>>, %arg2: memref<3x32xf32, #tpu.memory_space<vmem>>, %arg3: memref<1x32xf32, #tpu.memory_space<vmem>>, %arg4: memref<17x32xf32, #tpu.memory_space<vmem>>, %arg5: memref<2x1x32xf32, #tpu.memory_space<vmem>>, %arg6: memref<2x1x32xf32, #tpu.memory_space<vmem>>, %arg7: memref<2x32x32xf32, #tpu.memory_space<vmem>>, %arg8: memref<2x32x32xf32, #tpu.memory_space<vmem>>, %arg9: memref<2x32x32xf32, #tpu.memory_space<vmem>>, %arg10: memref<2x32x32xf32, #tpu.memory_space<vmem>>, %arg11: memref<2x1x32xf32, #tpu.memory_space<vmem>>, %arg12: memref<2x1x32xf32, #tpu.memory_space<vmem>>, %arg13: memref<2x1x32xf32, #tpu.memory_space<vmem>>, %arg14: memref<2x32x128xf32, #tpu.memory_space<vmem>>, %arg15: memref<2x1x128xf32, #tpu.memory_space<vmem>>, %arg16: memref<2x128x32xf32, #tpu.memory_space<vmem>>, %arg17: memref<2x1x32xf32, #tpu.memory_space<vmem>>, %arg18: memref<1x32xf32, #tpu.memory_space<vmem>>, %arg19: memref<1x32xf32, #tpu.memory_space<vmem>>, %arg20: memref<1x2x32xf32, #tpu.memory_space<vmem>>) attributes {dimension_semantics = [#tpu.dimension_semantics<parallel>], iteration_bounds = array<i64: 2>, scalar_prefetch = 0 : i64, scratch_operands = 0 : i64, tpu.core_type = #tpu.core_type<tc>, window_params = [{transform_indices = @transform_0, window_bounds = array<i64: 1, 17, 3>}, {pipeline_mode = #tpu.pipeline_mode<synchronous>, transform_indices = @transform_1, window_bounds = array<i64: 3, 32>}, {pipeline_mode = #tpu.pipeline_mode<synchronous>, transform_indices = @transform_2, window_bounds = array<i64: 1, 32>}, {pipeline_mode = #tpu.pipeline_mode<synchronous>, transform_indices = @transform_3, window_bounds = array<i64: 17, 32>}, {pipeline_mode = #tpu.pipeline_mode<synchronous>, transform_indices = @transform_4, window_bounds = array<i64: 2, 1, 32>}, {pipeline_mode = #tpu.pipeline_mode<synchronous>, transform_indices = @transform_5, window_bounds = array<i64: 2, 1, 32>}, {pipeline_mode = #tpu.pipeline_mode<synchronous>, transform_indices = @transform_6, window_bounds = array<i64: 2, 32, 32>}, {pipeline_mode = #tpu.pipeline_mode<synchronous>, transform_indices = @transform_7, window_bounds = array<i64: 2, 32, 32>}, {pipeline_mode = #tpu.pipeline_mode<synchronous>, transform_indices = @transform_8, window_bounds = array<i64: 2, 32, 32>}, {pipeline_mode = #tpu.pipeline_mode<synchronous>, transform_indices = @transform_9, window_bounds = array<i64: 2, 32, 32>}, {pipeline_mode = #tpu.pipeline_mode<synchronous>, transform_indices = @transform_10, window_bounds = array<i64: 2, 1, 32>}, {pipeline_mode = #tpu.pipeline_mode<synchronous>, transform_indices = @transform_11, window_bounds = array<i64: 2, 1, 32>}, {pipeline_mode = #tpu.pipeline_mode<synchronous>, transform_indices = @transform_12, window_bounds = array<i64: 2, 1, 32>}, {pipeline_mode = #tpu.pipeline_mode<synchronous>, transform_indices = @transform_13, window_bounds = array<i64: 2, 32, 128>}, {pipeline_mode = #tpu.pipeline_mode<synchronous>, transform_indices = @transform_14, window_bounds = array<i64: 2, 1, 128>}, {pipeline_mode = #tpu.pipeline_mode<synchronous>, transform_indices = @transform_15, window_bounds = array<i64: 2, 128, 32>}, {pipeline_mode = #tpu.pipeline_mode<synchronous>, transform_indices = @transform_16, window_bounds = array<i64: 2, 1, 32>}, {pipeline_mode = #tpu.pipeline_mode<synchronous>, transform_indices = @transform_17, window_bounds = array<i64: 1, 32>}, {pipeline_mode = #tpu.pipeline_mode<synchronous>, transform_indices = @transform_18, window_bounds = array<i64: 1, 32>}, {transform_indices = @transform_19, window_bounds = array<i64: 1, 2, 32>}]} {
    %c0 = arith.constant 0 : index
    %c0_0 = arith.constant 0 : index
    %c0_1 = arith.constant 0 : index
    %0 = vector.load %arg1[%c0, %c0_0, %c0_1] : memref<1x17x3xf32, #tpu.memory_space<vmem>>, vector<1x17x3xf32>
    %1 = vector.shape_cast %0 : vector<1x17x3xf32> to vector<17x3xf32>
    %c0_2 = arith.constant 0 : index
    %c0_3 = arith.constant 0 : index
    %2 = vector.load %arg2[%c0_2, %c0_3] : memref<3x32xf32, #tpu.memory_space<vmem>>, vector<3x32xf32>
    %cst = arith.constant 0.000000e+00 : f32
    %3 = vector.broadcast %cst : f32 to vector<17x32xf32>
    %4 = vector.extract_strided_slice %1 {offsets = [0, 0], sizes = [17, 1], strides = [1, 1]} : vector<17x3xf32> to vector<17x1xf32>
    %5 = vector.extract_strided_slice %2 {offsets = [0, 0], sizes = [1, 32], strides = [1, 1]} : vector<3x32xf32> to vector<1x32xf32>
    %6 = vector.broadcast %4 : vector<17x1xf32> to vector<17x32xf32>
    %7 = vector.broadcast %5 : vector<1x32xf32> to vector<17x32xf32>
    %8 = arith.mulf %6, %7 : vector<17x32xf32>
    %9 = arith.addf %3, %8 : vector<17x32xf32>
    %10 = vector.extract_strided_slice %1 {offsets = [0, 1], sizes = [17, 1], strides = [1, 1]} : vector<17x3xf32> to vector<17x1xf32>
    %11 = vector.extract_strided_slice %2 {offsets = [1, 0], sizes = [1, 32], strides = [1, 1]} : vector<3x32xf32> to vector<1x32xf32>
    %12 = vector.broadcast %10 : vector<17x1xf32> to vector<17x32xf32>
    %13 = vector.broadcast %11 : vector<1x32xf32> to vector<17x32xf32>
    %14 = arith.mulf %12, %13 : vector<17x32xf32>
    %15 = arith.addf %9, %14 : vector<17x32xf32>
    %16 = vector.extract_strided_slice %1 {offsets = [0, 2], sizes = [17, 1], strides = [1, 1]} : vector<17x3xf32> to vector<17x1xf32>
    %17 = vector.extract_strided_slice %2 {offsets = [2, 0], sizes = [1, 32], strides = [1, 1]} : vector<3x32xf32> to vector<1x32xf32>
    %18 = vector.broadcast %16 : vector<17x1xf32> to vector<17x32xf32>
    %19 = vector.broadcast %17 : vector<1x32xf32> to vector<17x32xf32>
    %20 = arith.mulf %18, %19 : vector<17x32xf32>
    %21 = arith.addf %15, %20 : vector<17x32xf32>
    %22 = tpu.iota {dimensions = array<i32: 0>} : vector<17x1xi32>
    %c0_i32 = arith.constant 0 : i32
    %23 = vector.broadcast %c0_i32 : i32 to vector<17x1xi32>
    %24 = arith.cmpi sgt, %22, %23 : vector<17x1xi32>
    %25 = arith.extui %24 : vector<17x1xi1> to vector<17x1xi32>
    %26 = arith.sitofp %25 : vector<17x1xi32> to vector<17x1xf32>
    %c0_4 = arith.constant 0 : index
    %c0_5 = arith.constant 0 : index
    %27 = vector.load %arg3[%c0_4, %c0_5] : memref<1x32xf32, #tpu.memory_space<vmem>>, vector<1x32xf32>
    %28 = vector.broadcast %26 : vector<17x1xf32> to vector<17x32xf32>
    %29 = vector.broadcast %27 : vector<1x32xf32> to vector<17x32xf32>
    %30 = arith.mulf %28, %29 : vector<17x32xf32>
    %31 = arith.addf %21, %30 : vector<17x32xf32>
    %c0_6 = arith.constant 0 : index
    %c0_7 = arith.constant 0 : index
    %32 = vector.load %arg4[%c0_6, %c0_7] : memref<17x32xf32, #tpu.memory_space<vmem>>, vector<17x32xf32>
    %33 = arith.addf %31, %32 : vector<17x32xf32>
    %c0_8 = arith.constant 0 : index
    %c0_9 = arith.constant 0 : index
    %c0_10 = arith.constant 0 : index
    %34 = vector.load %arg5[%c0_8, %c0_9, %c0_10] : memref<2x1x32xf32, #tpu.memory_space<vmem>>, vector<1x1x32xf32>
    %35 = vector.shape_cast %34 : vector<1x1x32xf32> to vector<1x32xf32>
    %c0_11 = arith.constant 0 : index
    %c0_12 = arith.constant 0 : index
    %c0_13 = arith.constant 0 : index
    %36 = vector.load %arg6[%c0_11, %c0_12, %c0_13] : memref<2x1x32xf32, #tpu.memory_space<vmem>>, vector<1x1x32xf32>
    %37 = vector.shape_cast %36 : vector<1x1x32xf32> to vector<1x32xf32>
    %cst_14 = arith.constant dense<0.000000e+00> : vector<17xf32>
    %38 = vector.multi_reduction <add>, %33, %cst_14 [1] : vector<17x32xf32> to vector<17xf32>
    %39 = vector.shape_cast %38 : vector<17xf32> to vector<17x1xf32>
    %cst_15 = arith.constant 3.200000e+01 : f32
    %40 = vector.broadcast %cst_15 : f32 to vector<17x1xf32>
    %41 = arith.divf %39, %40 : vector<17x1xf32>
    %42 = vector.broadcast %41 : vector<17x1xf32> to vector<17x32xf32>
    %43 = arith.subf %33, %42 : vector<17x32xf32>
    %44 = arith.mulf %43, %43 : vector<17x32xf32>
    %cst_16 = arith.constant dense<0.000000e+00> : vector<17xf32>
    %45 = vector.multi_reduction <add>, %44, %cst_16 [1] : vector<17x32xf32> to vector<17xf32>
    %46 = vector.shape_cast %45 : vector<17xf32> to vector<17x1xf32>
    %cst_17 = arith.constant 3.200000e+01 : f32
    %47 = vector.broadcast %cst_17 : f32 to vector<17x1xf32>
    %48 = arith.divf %46, %47 : vector<17x1xf32>
    %49 = vector.broadcast %41 : vector<17x1xf32> to vector<17x32xf32>
    %50 = arith.subf %33, %49 : vector<17x32xf32>
    %cst_18 = arith.constant 9.99999974E-6 : f32
    %51 = vector.broadcast %cst_18 : f32 to vector<17x1xf32>
    %52 = arith.addf %48, %51 : vector<17x1xf32>
    %53 = math.rsqrt %52 : vector<17x1xf32>
    %54 = vector.broadcast %53 : vector<17x1xf32> to vector<17x32xf32>
    %55 = arith.mulf %50, %54 : vector<17x32xf32>
    %56 = vector.broadcast %35 : vector<1x32xf32> to vector<17x32xf32>
    %57 = arith.mulf %55, %56 : vector<17x32xf32>
    %58 = vector.broadcast %37 : vector<1x32xf32> to vector<17x32xf32>
    %59 = arith.addf %57, %58 : vector<17x32xf32>
    %c0_19 = arith.constant 0 : index
    %c0_20 = arith.constant 0 : index
    %c0_21 = arith.constant 0 : index
    %60 = vector.load %arg7[%c0_19, %c0_20, %c0_21] : memref<2x32x32xf32, #tpu.memory_space<vmem>>, vector<1x32x32xf32>
    %61 = vector.shape_cast %60 : vector<1x32x32xf32> to vector<32x32xf32>
    %cst_22 = arith.constant dense<0.000000e+00> : vector<17x32xf32>
    %62 = tpu.matmul %59, %61, %cst_22 {dimension_numbers = #tpu.dot_dimension_numbers<[1], [0], [0], [1], [0, 0, 1, 1], [], []>} : vector<17x32xf32>, vector<32x32xf32>, vector<17x32xf32> -> vector<17x32xf32>
    %c0_23 = arith.constant 0 : index
    %c0_24 = arith.constant 0 : index
    %c0_25 = arith.constant 0 : index
    %63 = vector.load %arg8[%c0_23, %c0_24, %c0_25] : memref<2x32x32xf32, #tpu.memory_space<vmem>>, vector<1x32x32xf32>
    %64 = vector.shape_cast %63 : vector<1x32x32xf32> to vector<32x32xf32>
    %cst_26 = arith.constant dense<0.000000e+00> : vector<17x32xf32>
    %65 = tpu.matmul %59, %64, %cst_26 {dimension_numbers = #tpu.dot_dimension_numbers<[1], [0], [0], [1], [0, 0, 1, 1], [], []>} : vector<17x32xf32>, vector<32x32xf32>, vector<17x32xf32> -> vector<17x32xf32>
    %c0_27 = arith.constant 0 : index
    %c0_28 = arith.constant 0 : index
    %c0_29 = arith.constant 0 : index
    %66 = vector.load %arg9[%c0_27, %c0_28, %c0_29] : memref<2x32x32xf32, #tpu.memory_space<vmem>>, vector<1x32x32xf32>
    %67 = vector.shape_cast %66 : vector<1x32x32xf32> to vector<32x32xf32>
    %cst_30 = arith.constant dense<0.000000e+00> : vector<17x32xf32>
    %68 = tpu.matmul %59, %67, %cst_30 {dimension_numbers = #tpu.dot_dimension_numbers<[1], [0], [0], [1], [0, 0, 1, 1], [], []>} : vector<17x32xf32>, vector<32x32xf32>, vector<17x32xf32> -> vector<17x32xf32>
    %c0_31 = arith.constant 0 : index
    %c0_32 = arith.constant 0 : index
    %c0_33 = arith.constant 0 : index
    %69 = vector.load %arg10[%c0_31, %c0_32, %c0_33] : memref<2x32x32xf32, #tpu.memory_space<vmem>>, vector<1x32x32xf32>
    %70 = vector.shape_cast %69 : vector<1x32x32xf32> to vector<32x32xf32>
    %cst_34 = arith.constant 0.000000e+00 : f32
    %71 = vector.broadcast %cst_34 : f32 to vector<17x32xf32>
    %72 = vector.extract_strided_slice %62 {offsets = [0, 0], sizes = [17, 8], strides = [1, 1]} : vector<17x32xf32> to vector<17x8xf32>
    %73 = vector.extract_strided_slice %65 {offsets = [0, 0], sizes = [17, 8], strides = [1, 1]} : vector<17x32xf32> to vector<17x8xf32>
    %74 = vector.extract_strided_slice %68 {offsets = [0, 0], sizes = [17, 8], strides = [1, 1]} : vector<17x32xf32> to vector<17x8xf32>
    %cst_35 = arith.constant dense<0.000000e+00> : vector<17x17xf32>
    %75 = tpu.matmul %72, %73, %cst_35 {dimension_numbers = #tpu.dot_dimension_numbers<[1], [1], [0], [0], [0, 0, 1, 0], [], []>} : vector<17x8xf32>, vector<17x8xf32>, vector<17x17xf32> -> vector<17x17xf32>
    %cst_36 = arith.constant 0.176776692 : f32
    %76 = vector.broadcast %cst_36 : f32 to vector<17x17xf32>
    %77 = arith.mulf %75, %76 : vector<17x17xf32>
    %cst_37 = arith.constant dense<0xFF800000> : vector<17xf32>
    %78 = vector.multi_reduction <maximumf>, %77, %cst_37 [1] : vector<17x17xf32> to vector<17xf32>
    %79 = vector.shape_cast %78 : vector<17xf32> to vector<17x1xf32>
    %80 = vector.broadcast %79 : vector<17x1xf32> to vector<17x17xf32>
    %81 = arith.subf %77, %80 : vector<17x17xf32>
    %82 = math.exp %81 : vector<17x17xf32>
    %cst_38 = arith.constant dense<0.000000e+00> : vector<17xf32>
    %83 = vector.multi_reduction <add>, %82, %cst_38 [1] : vector<17x17xf32> to vector<17xf32>
    %84 = vector.shape_cast %83 : vector<17xf32> to vector<17x1xf32>
    %85 = vector.broadcast %84 : vector<17x1xf32> to vector<17x17xf32>
    %86 = arith.divf %82, %85 : vector<17x17xf32>
    %cst_39 = arith.constant dense<0.000000e+00> : vector<17x8xf32>
    %87 = tpu.matmul %86, %74, %cst_39 {dimension_numbers = #tpu.dot_dimension_numbers<[1], [0], [0], [1], [0, 0, 1, 1], [], []>} : vector<17x17xf32>, vector<17x8xf32>, vector<17x8xf32> -> vector<17x8xf32>
    %88 = vector.extract_strided_slice %70 {offsets = [0, 0], sizes = [8, 32], strides = [1, 1]} : vector<32x32xf32> to vector<8x32xf32>
    %cst_40 = arith.constant dense<0.000000e+00> : vector<17x32xf32>
    %89 = tpu.matmul %87, %88, %cst_40 {dimension_numbers = #tpu.dot_dimension_numbers<[1], [0], [0], [1], [0, 0, 1, 1], [], []>} : vector<17x8xf32>, vector<8x32xf32>, vector<17x32xf32> -> vector<17x32xf32>
    %90 = arith.addf %71, %89 : vector<17x32xf32>
    %91 = vector.extract_strided_slice %62 {offsets = [0, 8], sizes = [17, 8], strides = [1, 1]} : vector<17x32xf32> to vector<17x8xf32>
    %92 = vector.extract_strided_slice %65 {offsets = [0, 8], sizes = [17, 8], strides = [1, 1]} : vector<17x32xf32> to vector<17x8xf32>
    %93 = vector.extract_strided_slice %68 {offsets = [0, 8], sizes = [17, 8], strides = [1, 1]} : vector<17x32xf32> to vector<17x8xf32>
    %cst_41 = arith.constant dense<0.000000e+00> : vector<17x17xf32>
    %94 = tpu.matmul %91, %92, %cst_41 {dimension_numbers = #tpu.dot_dimension_numbers<[1], [1], [0], [0], [0, 0, 1, 0], [], []>} : vector<17x8xf32>, vector<17x8xf32>, vector<17x17xf32> -> vector<17x17xf32>
    %cst_42 = arith.constant 0.176776692 : f32
    %95 = vector.broadcast %cst_42 : f32 to vector<17x17xf32>
    %96 = arith.mulf %94, %95 : vector<17x17xf32>
    %cst_43 = arith.constant dense<0xFF800000> : vector<17xf32>
    %97 = vector.multi_reduction <maximumf>, %96, %cst_43 [1] : vector<17x17xf32> to vector<17xf32>
    %98 = vector.shape_cast %97 : vector<17xf32> to vector<17x1xf32>
    %99 = vector.broadcast %98 : vector<17x1xf32> to vector<17x17xf32>
    %100 = arith.subf %96, %99 : vector<17x17xf32>
    %101 = math.exp %100 : vector<17x17xf32>
    %cst_44 = arith.constant dense<0.000000e+00> : vector<17xf32>
    %102 = vector.multi_reduction <add>, %101, %cst_44 [1] : vector<17x17xf32> to vector<17xf32>
    %103 = vector.shape_cast %102 : vector<17xf32> to vector<17x1xf32>
    %104 = vector.broadcast %103 : vector<17x1xf32> to vector<17x17xf32>
    %105 = arith.divf %101, %104 : vector<17x17xf32>
    %cst_45 = arith.constant dense<0.000000e+00> : vector<17x8xf32>
    %106 = tpu.matmul %105, %93, %cst_45 {dimension_numbers = #tpu.dot_dimension_numbers<[1], [0], [0], [1], [0, 0, 1, 1], [], []>} : vector<17x17xf32>, vector<17x8xf32>, vector<17x8xf32> -> vector<17x8xf32>
    %107 = vector.extract_strided_slice %70 {offsets = [8, 0], sizes = [8, 32], strides = [1, 1]} : vector<32x32xf32> to vector<8x32xf32>
    %cst_46 = arith.constant dense<0.000000e+00> : vector<17x32xf32>
    %108 = tpu.matmul %106, %107, %cst_46 {dimension_numbers = #tpu.dot_dimension_numbers<[1], [0], [0], [1], [0, 0, 1, 1], [], []>} : vector<17x8xf32>, vector<8x32xf32>, vector<17x32xf32> -> vector<17x32xf32>
    %109 = arith.addf %90, %108 : vector<17x32xf32>
    %110 = vector.extract_strided_slice %62 {offsets = [0, 16], sizes = [17, 8], strides = [1, 1]} : vector<17x32xf32> to vector<17x8xf32>
    %111 = vector.extract_strided_slice %65 {offsets = [0, 16], sizes = [17, 8], strides = [1, 1]} : vector<17x32xf32> to vector<17x8xf32>
    %112 = vector.extract_strided_slice %68 {offsets = [0, 16], sizes = [17, 8], strides = [1, 1]} : vector<17x32xf32> to vector<17x8xf32>
    %cst_47 = arith.constant dense<0.000000e+00> : vector<17x17xf32>
    %113 = tpu.matmul %110, %111, %cst_47 {dimension_numbers = #tpu.dot_dimension_numbers<[1], [1], [0], [0], [0, 0, 1, 0], [], []>} : vector<17x8xf32>, vector<17x8xf32>, vector<17x17xf32> -> vector<17x17xf32>
    %cst_48 = arith.constant 0.176776692 : f32
    %114 = vector.broadcast %cst_48 : f32 to vector<17x17xf32>
    %115 = arith.mulf %113, %114 : vector<17x17xf32>
    %cst_49 = arith.constant dense<0xFF800000> : vector<17xf32>
    %116 = vector.multi_reduction <maximumf>, %115, %cst_49 [1] : vector<17x17xf32> to vector<17xf32>
    %117 = vector.shape_cast %116 : vector<17xf32> to vector<17x1xf32>
    %118 = vector.broadcast %117 : vector<17x1xf32> to vector<17x17xf32>
    %119 = arith.subf %115, %118 : vector<17x17xf32>
    %120 = math.exp %119 : vector<17x17xf32>
    %cst_50 = arith.constant dense<0.000000e+00> : vector<17xf32>
    %121 = vector.multi_reduction <add>, %120, %cst_50 [1] : vector<17x17xf32> to vector<17xf32>
    %122 = vector.shape_cast %121 : vector<17xf32> to vector<17x1xf32>
    %123 = vector.broadcast %122 : vector<17x1xf32> to vector<17x17xf32>
    %124 = arith.divf %120, %123 : vector<17x17xf32>
    %cst_51 = arith.constant dense<0.000000e+00> : vector<17x8xf32>
    %125 = tpu.matmul %124, %112, %cst_51 {dimension_numbers = #tpu.dot_dimension_numbers<[1], [0], [0], [1], [0, 0, 1, 1], [], []>} : vector<17x17xf32>, vector<17x8xf32>, vector<17x8xf32> -> vector<17x8xf32>
    %126 = vector.extract_strided_slice %70 {offsets = [16, 0], sizes = [8, 32], strides = [1, 1]} : vector<32x32xf32> to vector<8x32xf32>
    %cst_52 = arith.constant dense<0.000000e+00> : vector<17x32xf32>
    %127 = tpu.matmul %125, %126, %cst_52 {dimension_numbers = #tpu.dot_dimension_numbers<[1], [0], [0], [1], [0, 0, 1, 1], [], []>} : vector<17x8xf32>, vector<8x32xf32>, vector<17x32xf32> -> vector<17x32xf32>
    %128 = arith.addf %109, %127 : vector<17x32xf32>
    %129 = vector.extract_strided_slice %62 {offsets = [0, 24], sizes = [17, 8], strides = [1, 1]} : vector<17x32xf32> to vector<17x8xf32>
    %130 = vector.extract_strided_slice %65 {offsets = [0, 24], sizes = [17, 8], strides = [1, 1]} : vector<17x32xf32> to vector<17x8xf32>
    %131 = vector.extract_strided_slice %68 {offsets = [0, 24], sizes = [17, 8], strides = [1, 1]} : vector<17x32xf32> to vector<17x8xf32>
    %cst_53 = arith.constant dense<0.000000e+00> : vector<17x17xf32>
    %132 = tpu.matmul %129, %130, %cst_53 {dimension_numbers = #tpu.dot_dimension_numbers<[1], [1], [0], [0], [0, 0, 1, 0], [], []>} : vector<17x8xf32>, vector<17x8xf32>, vector<17x17xf32> -> vector<17x17xf32>
    %cst_54 = arith.constant 0.176776692 : f32
    %133 = vector.broadcast %cst_54 : f32 to vector<17x17xf32>
    %134 = arith.mulf %132, %133 : vector<17x17xf32>
    %cst_55 = arith.constant dense<0xFF800000> : vector<17xf32>
    %135 = vector.multi_reduction <maximumf>, %134, %cst_55 [1] : vector<17x17xf32> to vector<17xf32>
    %136 = vector.shape_cast %135 : vector<17xf32> to vector<17x1xf32>
    %137 = vector.broadcast %136 : vector<17x1xf32> to vector<17x17xf32>
    %138 = arith.subf %134, %137 : vector<17x17xf32>
    %139 = math.exp %138 : vector<17x17xf32>
    %cst_56 = arith.constant dense<0.000000e+00> : vector<17xf32>
    %140 = vector.multi_reduction <add>, %139, %cst_56 [1] : vector<17x17xf32> to vector<17xf32>
    %141 = vector.shape_cast %140 : vector<17xf32> to vector<17x1xf32>
    %142 = vector.broadcast %141 : vector<17x1xf32> to vector<17x17xf32>
    %143 = arith.divf %139, %142 : vector<17x17xf32>
    %cst_57 = arith.constant dense<0.000000e+00> : vector<17x8xf32>
    %144 = tpu.matmul %143, %131, %cst_57 {dimension_numbers = #tpu.dot_dimension_numbers<[1], [0], [0], [1], [0, 0, 1, 1], [], []>} : vector<17x17xf32>, vector<17x8xf32>, vector<17x8xf32> -> vector<17x8xf32>
    %145 = vector.extract_strided_slice %70 {offsets = [24, 0], sizes = [8, 32], strides = [1, 1]} : vector<32x32xf32> to vector<8x32xf32>
    %cst_58 = arith.constant dense<0.000000e+00> : vector<17x32xf32>
    %146 = tpu.matmul %144, %145, %cst_58 {dimension_numbers = #tpu.dot_dimension_numbers<[1], [0], [0], [1], [0, 0, 1, 1], [], []>} : vector<17x8xf32>, vector<8x32xf32>, vector<17x32xf32> -> vector<17x32xf32>
    %147 = arith.addf %128, %146 : vector<17x32xf32>
    %148 = arith.addf %33, %147 : vector<17x32xf32>
    %c0_59 = arith.constant 0 : index
    %c0_60 = arith.constant 0 : index
    %c0_61 = arith.constant 0 : index
    %149 = vector.load %arg11[%c0_59, %c0_60, %c0_61] : memref<2x1x32xf32, #tpu.memory_space<vmem>>, vector<1x1x32xf32>
    %150 = vector.shape_cast %149 : vector<1x1x32xf32> to vector<1x32xf32>
    %151 = vector.broadcast %150 : vector<1x32xf32> to vector<17x32xf32>
    %152 = arith.addf %148, %151 : vector<17x32xf32>
    %c0_62 = arith.constant 0 : index
    %c0_63 = arith.constant 0 : index
    %c0_64 = arith.constant 0 : index
    %153 = vector.load %arg12[%c0_62, %c0_63, %c0_64] : memref<2x1x32xf32, #tpu.memory_space<vmem>>, vector<1x1x32xf32>
    %154 = vector.shape_cast %153 : vector<1x1x32xf32> to vector<1x32xf32>
    %c0_65 = arith.constant 0 : index
    %c0_66 = arith.constant 0 : index
    %c0_67 = arith.constant 0 : index
    %155 = vector.load %arg13[%c0_65, %c0_66, %c0_67] : memref<2x1x32xf32, #tpu.memory_space<vmem>>, vector<1x1x32xf32>
    %156 = vector.shape_cast %155 : vector<1x1x32xf32> to vector<1x32xf32>
    %cst_68 = arith.constant dense<0.000000e+00> : vector<17xf32>
    %157 = vector.multi_reduction <add>, %152, %cst_68 [1] : vector<17x32xf32> to vector<17xf32>
    %158 = vector.shape_cast %157 : vector<17xf32> to vector<17x1xf32>
    %cst_69 = arith.constant 3.200000e+01 : f32
    %159 = vector.broadcast %cst_69 : f32 to vector<17x1xf32>
    %160 = arith.divf %158, %159 : vector<17x1xf32>
    %161 = vector.broadcast %160 : vector<17x1xf32> to vector<17x32xf32>
    %162 = arith.subf %152, %161 : vector<17x32xf32>
    %163 = arith.mulf %162, %162 : vector<17x32xf32>
    %cst_70 = arith.constant dense<0.000000e+00> : vector<17xf32>
    %164 = vector.multi_reduction <add>, %163, %cst_70 [1] : vector<17x32xf32> to vector<17xf32>
    %165 = vector.shape_cast %164 : vector<17xf32> to vector<17x1xf32>
    %cst_71 = arith.constant 3.200000e+01 : f32
    %166 = vector.broadcast %cst_71 : f32 to vector<17x1xf32>
    %167 = arith.divf %165, %166 : vector<17x1xf32>
    %168 = vector.broadcast %160 : vector<17x1xf32> to vector<17x32xf32>
    %169 = arith.subf %152, %168 : vector<17x32xf32>
    %cst_72 = arith.constant 9.99999974E-6 : f32
    %170 = vector.broadcast %cst_72 : f32 to vector<17x1xf32>
    %171 = arith.addf %167, %170 : vector<17x1xf32>
    %172 = math.rsqrt %171 : vector<17x1xf32>
    %173 = vector.broadcast %172 : vector<17x1xf32> to vector<17x32xf32>
    %174 = arith.mulf %169, %173 : vector<17x32xf32>
    %175 = vector.broadcast %154 : vector<1x32xf32> to vector<17x32xf32>
    %176 = arith.mulf %174, %175 : vector<17x32xf32>
    %177 = vector.broadcast %156 : vector<1x32xf32> to vector<17x32xf32>
    %178 = arith.addf %176, %177 : vector<17x32xf32>
    %c0_73 = arith.constant 0 : index
    %c0_74 = arith.constant 0 : index
    %c0_75 = arith.constant 0 : index
    %179 = vector.load %arg14[%c0_73, %c0_74, %c0_75] : memref<2x32x128xf32, #tpu.memory_space<vmem>>, vector<1x32x128xf32>
    %180 = vector.shape_cast %179 : vector<1x32x128xf32> to vector<32x128xf32>
    %cst_76 = arith.constant dense<0.000000e+00> : vector<17x128xf32>
    %181 = tpu.matmul %178, %180, %cst_76 {dimension_numbers = #tpu.dot_dimension_numbers<[1], [0], [0], [1], [0, 0, 1, 1], [], []>} : vector<17x32xf32>, vector<32x128xf32>, vector<17x128xf32> -> vector<17x128xf32>
    %c0_77 = arith.constant 0 : index
    %c0_78 = arith.constant 0 : index
    %c0_79 = arith.constant 0 : index
    %182 = vector.load %arg15[%c0_77, %c0_78, %c0_79] : memref<2x1x128xf32, #tpu.memory_space<vmem>>, vector<1x1x128xf32>
    %183 = vector.shape_cast %182 : vector<1x1x128xf32> to vector<1x128xf32>
    %184 = vector.broadcast %183 : vector<1x128xf32> to vector<17x128xf32>
    %185 = arith.addf %181, %184 : vector<17x128xf32>
    %cst_80 = arith.constant 5.000000e-01 : f32
    %186 = vector.broadcast %cst_80 : f32 to vector<17x128xf32>
    %187 = arith.mulf %186, %185 : vector<17x128xf32>
    %cst_81 = arith.constant 0.707106769 : f32
    %188 = vector.broadcast %cst_81 : f32 to vector<17x128xf32>
    %189 = arith.mulf %185, %188 : vector<17x128xf32>
    %190 = math.absf %189 : vector<17x128xf32>
    %cst_82 = arith.constant 0.327591091 : f32
    %191 = vector.broadcast %cst_82 : f32 to vector<17x128xf32>
    %192 = arith.mulf %191, %190 : vector<17x128xf32>
    %cst_83 = arith.constant 1.000000e+00 : f32
    %193 = vector.broadcast %cst_83 : f32 to vector<17x128xf32>
    %194 = arith.addf %193, %192 : vector<17x128xf32>
    %cst_84 = arith.constant 1.000000e+00 : f32
    %195 = vector.broadcast %cst_84 : f32 to vector<17x128xf32>
    %196 = arith.divf %195, %194 : vector<17x128xf32>
    %cst_85 = arith.constant 1.06140542 : f32
    %197 = vector.broadcast %cst_85 : f32 to vector<17x128xf32>
    %198 = arith.mulf %197, %196 : vector<17x128xf32>
    %cst_86 = arith.constant -1.45315206 : f32
    %199 = vector.broadcast %cst_86 : f32 to vector<17x128xf32>
    %200 = arith.addf %198, %199 : vector<17x128xf32>
    %201 = arith.mulf %200, %196 : vector<17x128xf32>
    %cst_87 = arith.constant 1.42141378 : f32
    %202 = vector.broadcast %cst_87 : f32 to vector<17x128xf32>
    %203 = arith.addf %201, %202 : vector<17x128xf32>
    %204 = arith.mulf %203, %196 : vector<17x128xf32>
    %cst_88 = arith.constant -0.284496725 : f32
    %205 = vector.broadcast %cst_88 : f32 to vector<17x128xf32>
    %206 = arith.addf %204, %205 : vector<17x128xf32>
    %207 = arith.mulf %206, %196 : vector<17x128xf32>
    %cst_89 = arith.constant 0.254829586 : f32
    %208 = vector.broadcast %cst_89 : f32 to vector<17x128xf32>
    %209 = arith.addf %207, %208 : vector<17x128xf32>
    %210 = arith.mulf %209, %196 : vector<17x128xf32>
    %cst_90 = arith.constant 0.000000e+00 : f32
    %211 = vector.broadcast %cst_90 : f32 to vector<17x128xf32>
    %212 = arith.subf %211, %190 : vector<17x128xf32>
    %213 = arith.mulf %212, %190 : vector<17x128xf32>
    %214 = math.exp %213 : vector<17x128xf32>
    %215 = arith.mulf %210, %214 : vector<17x128xf32>
    %cst_91 = arith.constant 1.000000e+00 : f32
    %216 = vector.broadcast %cst_91 : f32 to vector<17x128xf32>
    %217 = arith.subf %216, %215 : vector<17x128xf32>
    %cst_92 = arith.constant 0.000000e+00 : f32
    %218 = vector.broadcast %cst_92 : f32 to vector<17x128xf32>
    %219 = arith.cmpf olt, %189, %218 : vector<17x128xf32>
    %cst_93 = arith.constant 0.000000e+00 : f32
    %220 = vector.broadcast %cst_93 : f32 to vector<17x128xf32>
    %221 = arith.subf %220, %217 : vector<17x128xf32>
    %222 = arith.select %219, %221, %217 : vector<17x128xi1>, vector<17x128xf32>
    %cst_94 = arith.constant 1.000000e+00 : f32
    %223 = vector.broadcast %cst_94 : f32 to vector<17x128xf32>
    %224 = arith.addf %223, %222 : vector<17x128xf32>
    %225 = arith.mulf %187, %224 : vector<17x128xf32>
    %c0_95 = arith.constant 0 : index
    %c0_96 = arith.constant 0 : index
    %c0_97 = arith.constant 0 : index
    %226 = vector.load %arg16[%c0_95, %c0_96, %c0_97] : memref<2x128x32xf32, #tpu.memory_space<vmem>>, vector<1x128x32xf32>
    %227 = vector.shape_cast %226 : vector<1x128x32xf32> to vector<128x32xf32>
    %cst_98 = arith.constant dense<0.000000e+00> : vector<17x32xf32>
    %228 = tpu.matmul %225, %227, %cst_98 {dimension_numbers = #tpu.dot_dimension_numbers<[1], [0], [0], [1], [0, 0, 1, 1], [], []>} : vector<17x128xf32>, vector<128x32xf32>, vector<17x32xf32> -> vector<17x32xf32>
    %c0_99 = arith.constant 0 : index
    %c0_100 = arith.constant 0 : index
    %c0_101 = arith.constant 0 : index
    %229 = vector.load %arg17[%c0_99, %c0_100, %c0_101] : memref<2x1x32xf32, #tpu.memory_space<vmem>>, vector<1x1x32xf32>
    %230 = vector.shape_cast %229 : vector<1x1x32xf32> to vector<1x32xf32>
    %231 = vector.broadcast %230 : vector<1x32xf32> to vector<17x32xf32>
    %232 = arith.addf %228, %231 : vector<17x32xf32>
    %233 = arith.addf %152, %232 : vector<17x32xf32>
    %c1 = arith.constant 1 : index
    %c0_102 = arith.constant 0 : index
    %c0_103 = arith.constant 0 : index
    %234 = vector.load %arg5[%c1, %c0_102, %c0_103] : memref<2x1x32xf32, #tpu.memory_space<vmem>>, vector<1x1x32xf32>
    %235 = vector.shape_cast %234 : vector<1x1x32xf32> to vector<1x32xf32>
    %c1_104 = arith.constant 1 : index
    %c0_105 = arith.constant 0 : index
    %c0_106 = arith.constant 0 : index
    %236 = vector.load %arg6[%c1_104, %c0_105, %c0_106] : memref<2x1x32xf32, #tpu.memory_space<vmem>>, vector<1x1x32xf32>
    %237 = vector.shape_cast %236 : vector<1x1x32xf32> to vector<1x32xf32>
    %cst_107 = arith.constant dense<0.000000e+00> : vector<17xf32>
    %238 = vector.multi_reduction <add>, %233, %cst_107 [1] : vector<17x32xf32> to vector<17xf32>
    %239 = vector.shape_cast %238 : vector<17xf32> to vector<17x1xf32>
    %cst_108 = arith.constant 3.200000e+01 : f32
    %240 = vector.broadcast %cst_108 : f32 to vector<17x1xf32>
    %241 = arith.divf %239, %240 : vector<17x1xf32>
    %242 = vector.broadcast %241 : vector<17x1xf32> to vector<17x32xf32>
    %243 = arith.subf %233, %242 : vector<17x32xf32>
    %244 = arith.mulf %243, %243 : vector<17x32xf32>
    %cst_109 = arith.constant dense<0.000000e+00> : vector<17xf32>
    %245 = vector.multi_reduction <add>, %244, %cst_109 [1] : vector<17x32xf32> to vector<17xf32>
    %246 = vector.shape_cast %245 : vector<17xf32> to vector<17x1xf32>
    %cst_110 = arith.constant 3.200000e+01 : f32
    %247 = vector.broadcast %cst_110 : f32 to vector<17x1xf32>
    %248 = arith.divf %246, %247 : vector<17x1xf32>
    %249 = vector.broadcast %241 : vector<17x1xf32> to vector<17x32xf32>
    %250 = arith.subf %233, %249 : vector<17x32xf32>
    %cst_111 = arith.constant 9.99999974E-6 : f32
    %251 = vector.broadcast %cst_111 : f32 to vector<17x1xf32>
    %252 = arith.addf %248, %251 : vector<17x1xf32>
    %253 = math.rsqrt %252 : vector<17x1xf32>
    %254 = vector.broadcast %253 : vector<17x1xf32> to vector<17x32xf32>
    %255 = arith.mulf %250, %254 : vector<17x32xf32>
    %256 = vector.broadcast %235 : vector<1x32xf32> to vector<17x32xf32>
    %257 = arith.mulf %255, %256 : vector<17x32xf32>
    %258 = vector.broadcast %237 : vector<1x32xf32> to vector<17x32xf32>
    %259 = arith.addf %257, %258 : vector<17x32xf32>
    %c1_112 = arith.constant 1 : index
    %c0_113 = arith.constant 0 : index
    %c0_114 = arith.constant 0 : index
    %260 = vector.load %arg7[%c1_112, %c0_113, %c0_114] : memref<2x32x32xf32, #tpu.memory_space<vmem>>, vector<1x32x32xf32>
    %261 = vector.shape_cast %260 : vector<1x32x32xf32> to vector<32x32xf32>
    %cst_115 = arith.constant dense<0.000000e+00> : vector<17x32xf32>
    %262 = tpu.matmul %259, %261, %cst_115 {dimension_numbers = #tpu.dot_dimension_numbers<[1], [0], [0], [1], [0, 0, 1, 1], [], []>} : vector<17x32xf32>, vector<32x32xf32>, vector<17x32xf32> -> vector<17x32xf32>
    %c1_116 = arith.constant 1 : index
    %c0_117 = arith.constant 0 : index
    %c0_118 = arith.constant 0 : index
    %263 = vector.load %arg8[%c1_116, %c0_117, %c0_118] : memref<2x32x32xf32, #tpu.memory_space<vmem>>, vector<1x32x32xf32>
    %264 = vector.shape_cast %263 : vector<1x32x32xf32> to vector<32x32xf32>
    %cst_119 = arith.constant dense<0.000000e+00> : vector<17x32xf32>
    %265 = tpu.matmul %259, %264, %cst_119 {dimension_numbers = #tpu.dot_dimension_numbers<[1], [0], [0], [1], [0, 0, 1, 1], [], []>} : vector<17x32xf32>, vector<32x32xf32>, vector<17x32xf32> -> vector<17x32xf32>
    %c1_120 = arith.constant 1 : index
    %c0_121 = arith.constant 0 : index
    %c0_122 = arith.constant 0 : index
    %266 = vector.load %arg9[%c1_120, %c0_121, %c0_122] : memref<2x32x32xf32, #tpu.memory_space<vmem>>, vector<1x32x32xf32>
    %267 = vector.shape_cast %266 : vector<1x32x32xf32> to vector<32x32xf32>
    %cst_123 = arith.constant dense<0.000000e+00> : vector<17x32xf32>
    %268 = tpu.matmul %259, %267, %cst_123 {dimension_numbers = #tpu.dot_dimension_numbers<[1], [0], [0], [1], [0, 0, 1, 1], [], []>} : vector<17x32xf32>, vector<32x32xf32>, vector<17x32xf32> -> vector<17x32xf32>
    %c1_124 = arith.constant 1 : index
    %c0_125 = arith.constant 0 : index
    %c0_126 = arith.constant 0 : index
    %269 = vector.load %arg10[%c1_124, %c0_125, %c0_126] : memref<2x32x32xf32, #tpu.memory_space<vmem>>, vector<1x32x32xf32>
    %270 = vector.shape_cast %269 : vector<1x32x32xf32> to vector<32x32xf32>
    %cst_127 = arith.constant 0.000000e+00 : f32
    %271 = vector.broadcast %cst_127 : f32 to vector<17x32xf32>
    %272 = vector.extract_strided_slice %262 {offsets = [0, 0], sizes = [17, 8], strides = [1, 1]} : vector<17x32xf32> to vector<17x8xf32>
    %273 = vector.extract_strided_slice %265 {offsets = [0, 0], sizes = [17, 8], strides = [1, 1]} : vector<17x32xf32> to vector<17x8xf32>
    %274 = vector.extract_strided_slice %268 {offsets = [0, 0], sizes = [17, 8], strides = [1, 1]} : vector<17x32xf32> to vector<17x8xf32>
    %cst_128 = arith.constant dense<0.000000e+00> : vector<17x17xf32>
    %275 = tpu.matmul %272, %273, %cst_128 {dimension_numbers = #tpu.dot_dimension_numbers<[1], [1], [0], [0], [0, 0, 1, 0], [], []>} : vector<17x8xf32>, vector<17x8xf32>, vector<17x17xf32> -> vector<17x17xf32>
    %cst_129 = arith.constant 0.176776692 : f32
    %276 = vector.broadcast %cst_129 : f32 to vector<17x17xf32>
    %277 = arith.mulf %275, %276 : vector<17x17xf32>
    %cst_130 = arith.constant dense<0xFF800000> : vector<17xf32>
    %278 = vector.multi_reduction <maximumf>, %277, %cst_130 [1] : vector<17x17xf32> to vector<17xf32>
    %279 = vector.shape_cast %278 : vector<17xf32> to vector<17x1xf32>
    %280 = vector.broadcast %279 : vector<17x1xf32> to vector<17x17xf32>
    %281 = arith.subf %277, %280 : vector<17x17xf32>
    %282 = math.exp %281 : vector<17x17xf32>
    %cst_131 = arith.constant dense<0.000000e+00> : vector<17xf32>
    %283 = vector.multi_reduction <add>, %282, %cst_131 [1] : vector<17x17xf32> to vector<17xf32>
    %284 = vector.shape_cast %283 : vector<17xf32> to vector<17x1xf32>
    %285 = vector.broadcast %284 : vector<17x1xf32> to vector<17x17xf32>
    %286 = arith.divf %282, %285 : vector<17x17xf32>
    %cst_132 = arith.constant dense<0.000000e+00> : vector<17x8xf32>
    %287 = tpu.matmul %286, %274, %cst_132 {dimension_numbers = #tpu.dot_dimension_numbers<[1], [0], [0], [1], [0, 0, 1, 1], [], []>} : vector<17x17xf32>, vector<17x8xf32>, vector<17x8xf32> -> vector<17x8xf32>
    %288 = vector.extract_strided_slice %270 {offsets = [0, 0], sizes = [8, 32], strides = [1, 1]} : vector<32x32xf32> to vector<8x32xf32>
    %cst_133 = arith.constant dense<0.000000e+00> : vector<17x32xf32>
    %289 = tpu.matmul %287, %288, %cst_133 {dimension_numbers = #tpu.dot_dimension_numbers<[1], [0], [0], [1], [0, 0, 1, 1], [], []>} : vector<17x8xf32>, vector<8x32xf32>, vector<17x32xf32> -> vector<17x32xf32>
    %290 = arith.addf %271, %289 : vector<17x32xf32>
    %291 = vector.extract_strided_slice %262 {offsets = [0, 8], sizes = [17, 8], strides = [1, 1]} : vector<17x32xf32> to vector<17x8xf32>
    %292 = vector.extract_strided_slice %265 {offsets = [0, 8], sizes = [17, 8], strides = [1, 1]} : vector<17x32xf32> to vector<17x8xf32>
    %293 = vector.extract_strided_slice %268 {offsets = [0, 8], sizes = [17, 8], strides = [1, 1]} : vector<17x32xf32> to vector<17x8xf32>
    %cst_134 = arith.constant dense<0.000000e+00> : vector<17x17xf32>
    %294 = tpu.matmul %291, %292, %cst_134 {dimension_numbers = #tpu.dot_dimension_numbers<[1], [1], [0], [0], [0, 0, 1, 0], [], []>} : vector<17x8xf32>, vector<17x8xf32>, vector<17x17xf32> -> vector<17x17xf32>
    %cst_135 = arith.constant 0.176776692 : f32
    %295 = vector.broadcast %cst_135 : f32 to vector<17x17xf32>
    %296 = arith.mulf %294, %295 : vector<17x17xf32>
    %cst_136 = arith.constant dense<0xFF800000> : vector<17xf32>
    %297 = vector.multi_reduction <maximumf>, %296, %cst_136 [1] : vector<17x17xf32> to vector<17xf32>
    %298 = vector.shape_cast %297 : vector<17xf32> to vector<17x1xf32>
    %299 = vector.broadcast %298 : vector<17x1xf32> to vector<17x17xf32>
    %300 = arith.subf %296, %299 : vector<17x17xf32>
    %301 = math.exp %300 : vector<17x17xf32>
    %cst_137 = arith.constant dense<0.000000e+00> : vector<17xf32>
    %302 = vector.multi_reduction <add>, %301, %cst_137 [1] : vector<17x17xf32> to vector<17xf32>
    %303 = vector.shape_cast %302 : vector<17xf32> to vector<17x1xf32>
    %304 = vector.broadcast %303 : vector<17x1xf32> to vector<17x17xf32>
    %305 = arith.divf %301, %304 : vector<17x17xf32>
    %cst_138 = arith.constant dense<0.000000e+00> : vector<17x8xf32>
    %306 = tpu.matmul %305, %293, %cst_138 {dimension_numbers = #tpu.dot_dimension_numbers<[1], [0], [0], [1], [0, 0, 1, 1], [], []>} : vector<17x17xf32>, vector<17x8xf32>, vector<17x8xf32> -> vector<17x8xf32>
    %307 = vector.extract_strided_slice %270 {offsets = [8, 0], sizes = [8, 32], strides = [1, 1]} : vector<32x32xf32> to vector<8x32xf32>
    %cst_139 = arith.constant dense<0.000000e+00> : vector<17x32xf32>
    %308 = tpu.matmul %306, %307, %cst_139 {dimension_numbers = #tpu.dot_dimension_numbers<[1], [0], [0], [1], [0, 0, 1, 1], [], []>} : vector<17x8xf32>, vector<8x32xf32>, vector<17x32xf32> -> vector<17x32xf32>
    %309 = arith.addf %290, %308 : vector<17x32xf32>
    %310 = vector.extract_strided_slice %262 {offsets = [0, 16], sizes = [17, 8], strides = [1, 1]} : vector<17x32xf32> to vector<17x8xf32>
    %311 = vector.extract_strided_slice %265 {offsets = [0, 16], sizes = [17, 8], strides = [1, 1]} : vector<17x32xf32> to vector<17x8xf32>
    %312 = vector.extract_strided_slice %268 {offsets = [0, 16], sizes = [17, 8], strides = [1, 1]} : vector<17x32xf32> to vector<17x8xf32>
    %cst_140 = arith.constant dense<0.000000e+00> : vector<17x17xf32>
    %313 = tpu.matmul %310, %311, %cst_140 {dimension_numbers = #tpu.dot_dimension_numbers<[1], [1], [0], [0], [0, 0, 1, 0], [], []>} : vector<17x8xf32>, vector<17x8xf32>, vector<17x17xf32> -> vector<17x17xf32>
    %cst_141 = arith.constant 0.176776692 : f32
    %314 = vector.broadcast %cst_141 : f32 to vector<17x17xf32>
    %315 = arith.mulf %313, %314 : vector<17x17xf32>
    %cst_142 = arith.constant dense<0xFF800000> : vector<17xf32>
    %316 = vector.multi_reduction <maximumf>, %315, %cst_142 [1] : vector<17x17xf32> to vector<17xf32>
    %317 = vector.shape_cast %316 : vector<17xf32> to vector<17x1xf32>
    %318 = vector.broadcast %317 : vector<17x1xf32> to vector<17x17xf32>
    %319 = arith.subf %315, %318 : vector<17x17xf32>
    %320 = math.exp %319 : vector<17x17xf32>
    %cst_143 = arith.constant dense<0.000000e+00> : vector<17xf32>
    %321 = vector.multi_reduction <add>, %320, %cst_143 [1] : vector<17x17xf32> to vector<17xf32>
    %322 = vector.shape_cast %321 : vector<17xf32> to vector<17x1xf32>
    %323 = vector.broadcast %322 : vector<17x1xf32> to vector<17x17xf32>
    %324 = arith.divf %320, %323 : vector<17x17xf32>
    %cst_144 = arith.constant dense<0.000000e+00> : vector<17x8xf32>
    %325 = tpu.matmul %324, %312, %cst_144 {dimension_numbers = #tpu.dot_dimension_numbers<[1], [0], [0], [1], [0, 0, 1, 1], [], []>} : vector<17x17xf32>, vector<17x8xf32>, vector<17x8xf32> -> vector<17x8xf32>
    %326 = vector.extract_strided_slice %270 {offsets = [16, 0], sizes = [8, 32], strides = [1, 1]} : vector<32x32xf32> to vector<8x32xf32>
    %cst_145 = arith.constant dense<0.000000e+00> : vector<17x32xf32>
    %327 = tpu.matmul %325, %326, %cst_145 {dimension_numbers = #tpu.dot_dimension_numbers<[1], [0], [0], [1], [0, 0, 1, 1], [], []>} : vector<17x8xf32>, vector<8x32xf32>, vector<17x32xf32> -> vector<17x32xf32>
    %328 = arith.addf %309, %327 : vector<17x32xf32>
    %329 = vector.extract_strided_slice %262 {offsets = [0, 24], sizes = [17, 8], strides = [1, 1]} : vector<17x32xf32> to vector<17x8xf32>
    %330 = vector.extract_strided_slice %265 {offsets = [0, 24], sizes = [17, 8], strides = [1, 1]} : vector<17x32xf32> to vector<17x8xf32>
    %331 = vector.extract_strided_slice %268 {offsets = [0, 24], sizes = [17, 8], strides = [1, 1]} : vector<17x32xf32> to vector<17x8xf32>
    %cst_146 = arith.constant dense<0.000000e+00> : vector<17x17xf32>
    %332 = tpu.matmul %329, %330, %cst_146 {dimension_numbers = #tpu.dot_dimension_numbers<[1], [1], [0], [0], [0, 0, 1, 0], [], []>} : vector<17x8xf32>, vector<17x8xf32>, vector<17x17xf32> -> vector<17x17xf32>
    %cst_147 = arith.constant 0.176776692 : f32
    %333 = vector.broadcast %cst_147 : f32 to vector<17x17xf32>
    %334 = arith.mulf %332, %333 : vector<17x17xf32>
    %cst_148 = arith.constant dense<0xFF800000> : vector<17xf32>
    %335 = vector.multi_reduction <maximumf>, %334, %cst_148 [1] : vector<17x17xf32> to vector<17xf32>
    %336 = vector.shape_cast %335 : vector<17xf32> to vector<17x1xf32>
    %337 = vector.broadcast %336 : vector<17x1xf32> to vector<17x17xf32>
    %338 = arith.subf %334, %337 : vector<17x17xf32>
    %339 = math.exp %338 : vector<17x17xf32>
    %cst_149 = arith.constant dense<0.000000e+00> : vector<17xf32>
    %340 = vector.multi_reduction <add>, %339, %cst_149 [1] : vector<17x17xf32> to vector<17xf32>
    %341 = vector.shape_cast %340 : vector<17xf32> to vector<17x1xf32>
    %342 = vector.broadcast %341 : vector<17x1xf32> to vector<17x17xf32>
    %343 = arith.divf %339, %342 : vector<17x17xf32>
    %cst_150 = arith.constant dense<0.000000e+00> : vector<17x8xf32>
    %344 = tpu.matmul %343, %331, %cst_150 {dimension_numbers = #tpu.dot_dimension_numbers<[1], [0], [0], [1], [0, 0, 1, 1], [], []>} : vector<17x17xf32>, vector<17x8xf32>, vector<17x8xf32> -> vector<17x8xf32>
    %345 = vector.extract_strided_slice %270 {offsets = [24, 0], sizes = [8, 32], strides = [1, 1]} : vector<32x32xf32> to vector<8x32xf32>
    %cst_151 = arith.constant dense<0.000000e+00> : vector<17x32xf32>
    %346 = tpu.matmul %344, %345, %cst_151 {dimension_numbers = #tpu.dot_dimension_numbers<[1], [0], [0], [1], [0, 0, 1, 1], [], []>} : vector<17x8xf32>, vector<8x32xf32>, vector<17x32xf32> -> vector<17x32xf32>
    %347 = arith.addf %328, %346 : vector<17x32xf32>
    %348 = arith.addf %233, %347 : vector<17x32xf32>
    %c1_152 = arith.constant 1 : index
    %c0_153 = arith.constant 0 : index
    %c0_154 = arith.constant 0 : index
    %349 = vector.load %arg11[%c1_152, %c0_153, %c0_154] : memref<2x1x32xf32, #tpu.memory_space<vmem>>, vector<1x1x32xf32>
    %350 = vector.shape_cast %349 : vector<1x1x32xf32> to vector<1x32xf32>
    %351 = vector.broadcast %350 : vector<1x32xf32> to vector<17x32xf32>
    %352 = arith.addf %348, %351 : vector<17x32xf32>
    %c1_155 = arith.constant 1 : index
    %c0_156 = arith.constant 0 : index
    %c0_157 = arith.constant 0 : index
    %353 = vector.load %arg12[%c1_155, %c0_156, %c0_157] : memref<2x1x32xf32, #tpu.memory_space<vmem>>, vector<1x1x32xf32>
    %354 = vector.shape_cast %353 : vector<1x1x32xf32> to vector<1x32xf32>
    %c1_158 = arith.constant 1 : index
    %c0_159 = arith.constant 0 : index
    %c0_160 = arith.constant 0 : index
    %355 = vector.load %arg13[%c1_158, %c0_159, %c0_160] : memref<2x1x32xf32, #tpu.memory_space<vmem>>, vector<1x1x32xf32>
    %356 = vector.shape_cast %355 : vector<1x1x32xf32> to vector<1x32xf32>
    %cst_161 = arith.constant dense<0.000000e+00> : vector<17xf32>
    %357 = vector.multi_reduction <add>, %352, %cst_161 [1] : vector<17x32xf32> to vector<17xf32>
    %358 = vector.shape_cast %357 : vector<17xf32> to vector<17x1xf32>
    %cst_162 = arith.constant 3.200000e+01 : f32
    %359 = vector.broadcast %cst_162 : f32 to vector<17x1xf32>
    %360 = arith.divf %358, %359 : vector<17x1xf32>
    %361 = vector.broadcast %360 : vector<17x1xf32> to vector<17x32xf32>
    %362 = arith.subf %352, %361 : vector<17x32xf32>
    %363 = arith.mulf %362, %362 : vector<17x32xf32>
    %cst_163 = arith.constant dense<0.000000e+00> : vector<17xf32>
    %364 = vector.multi_reduction <add>, %363, %cst_163 [1] : vector<17x32xf32> to vector<17xf32>
    %365 = vector.shape_cast %364 : vector<17xf32> to vector<17x1xf32>
    %cst_164 = arith.constant 3.200000e+01 : f32
    %366 = vector.broadcast %cst_164 : f32 to vector<17x1xf32>
    %367 = arith.divf %365, %366 : vector<17x1xf32>
    %368 = vector.broadcast %360 : vector<17x1xf32> to vector<17x32xf32>
    %369 = arith.subf %352, %368 : vector<17x32xf32>
    %cst_165 = arith.constant 9.99999974E-6 : f32
    %370 = vector.broadcast %cst_165 : f32 to vector<17x1xf32>
    %371 = arith.addf %367, %370 : vector<17x1xf32>
    %372 = math.rsqrt %371 : vector<17x1xf32>
    %373 = vector.broadcast %372 : vector<17x1xf32> to vector<17x32xf32>
    %374 = arith.mulf %369, %373 : vector<17x32xf32>
    %375 = vector.broadcast %354 : vector<1x32xf32> to vector<17x32xf32>
    %376 = arith.mulf %374, %375 : vector<17x32xf32>
    %377 = vector.broadcast %356 : vector<1x32xf32> to vector<17x32xf32>
    %378 = arith.addf %376, %377 : vector<17x32xf32>
    %c1_166 = arith.constant 1 : index
    %c0_167 = arith.constant 0 : index
    %c0_168 = arith.constant 0 : index
    %379 = vector.load %arg14[%c1_166, %c0_167, %c0_168] : memref<2x32x128xf32, #tpu.memory_space<vmem>>, vector<1x32x128xf32>
    %380 = vector.shape_cast %379 : vector<1x32x128xf32> to vector<32x128xf32>
    %cst_169 = arith.constant dense<0.000000e+00> : vector<17x128xf32>
    %381 = tpu.matmul %378, %380, %cst_169 {dimension_numbers = #tpu.dot_dimension_numbers<[1], [0], [0], [1], [0, 0, 1, 1], [], []>} : vector<17x32xf32>, vector<32x128xf32>, vector<17x128xf32> -> vector<17x128xf32>
    %c1_170 = arith.constant 1 : index
    %c0_171 = arith.constant 0 : index
    %c0_172 = arith.constant 0 : index
    %382 = vector.load %arg15[%c1_170, %c0_171, %c0_172] : memref<2x1x128xf32, #tpu.memory_space<vmem>>, vector<1x1x128xf32>
    %383 = vector.shape_cast %382 : vector<1x1x128xf32> to vector<1x128xf32>
    %384 = vector.broadcast %383 : vector<1x128xf32> to vector<17x128xf32>
    %385 = arith.addf %381, %384 : vector<17x128xf32>
    %cst_173 = arith.constant 5.000000e-01 : f32
    %386 = vector.broadcast %cst_173 : f32 to vector<17x128xf32>
    %387 = arith.mulf %386, %385 : vector<17x128xf32>
    %cst_174 = arith.constant 0.707106769 : f32
    %388 = vector.broadcast %cst_174 : f32 to vector<17x128xf32>
    %389 = arith.mulf %385, %388 : vector<17x128xf32>
    %390 = math.absf %389 : vector<17x128xf32>
    %cst_175 = arith.constant 0.327591091 : f32
    %391 = vector.broadcast %cst_175 : f32 to vector<17x128xf32>
    %392 = arith.mulf %391, %390 : vector<17x128xf32>
    %cst_176 = arith.constant 1.000000e+00 : f32
    %393 = vector.broadcast %cst_176 : f32 to vector<17x128xf32>
    %394 = arith.addf %393, %392 : vector<17x128xf32>
    %cst_177 = arith.constant 1.000000e+00 : f32
    %395 = vector.broadcast %cst_177 : f32 to vector<17x128xf32>
    %396 = arith.divf %395, %394 : vector<17x128xf32>
    %cst_178 = arith.constant 1.06140542 : f32
    %397 = vector.broadcast %cst_178 : f32 to vector<17x128xf32>
    %398 = arith.mulf %397, %396 : vector<17x128xf32>
    %cst_179 = arith.constant -1.45315206 : f32
    %399 = vector.broadcast %cst_179 : f32 to vector<17x128xf32>
    %400 = arith.addf %398, %399 : vector<17x128xf32>
    %401 = arith.mulf %400, %396 : vector<17x128xf32>
    %cst_180 = arith.constant 1.42141378 : f32
    %402 = vector.broadcast %cst_180 : f32 to vector<17x128xf32>
    %403 = arith.addf %401, %402 : vector<17x128xf32>
    %404 = arith.mulf %403, %396 : vector<17x128xf32>
    %cst_181 = arith.constant -0.284496725 : f32
    %405 = vector.broadcast %cst_181 : f32 to vector<17x128xf32>
    %406 = arith.addf %404, %405 : vector<17x128xf32>
    %407 = arith.mulf %406, %396 : vector<17x128xf32>
    %cst_182 = arith.constant 0.254829586 : f32
    %408 = vector.broadcast %cst_182 : f32 to vector<17x128xf32>
    %409 = arith.addf %407, %408 : vector<17x128xf32>
    %410 = arith.mulf %409, %396 : vector<17x128xf32>
    %cst_183 = arith.constant 0.000000e+00 : f32
    %411 = vector.broadcast %cst_183 : f32 to vector<17x128xf32>
    %412 = arith.subf %411, %390 : vector<17x128xf32>
    %413 = arith.mulf %412, %390 : vector<17x128xf32>
    %414 = math.exp %413 : vector<17x128xf32>
    %415 = arith.mulf %410, %414 : vector<17x128xf32>
    %cst_184 = arith.constant 1.000000e+00 : f32
    %416 = vector.broadcast %cst_184 : f32 to vector<17x128xf32>
    %417 = arith.subf %416, %415 : vector<17x128xf32>
    %cst_185 = arith.constant 0.000000e+00 : f32
    %418 = vector.broadcast %cst_185 : f32 to vector<17x128xf32>
    %419 = arith.cmpf olt, %389, %418 : vector<17x128xf32>
    %cst_186 = arith.constant 0.000000e+00 : f32
    %420 = vector.broadcast %cst_186 : f32 to vector<17x128xf32>
    %421 = arith.subf %420, %417 : vector<17x128xf32>
    %422 = arith.select %419, %421, %417 : vector<17x128xi1>, vector<17x128xf32>
    %cst_187 = arith.constant 1.000000e+00 : f32
    %423 = vector.broadcast %cst_187 : f32 to vector<17x128xf32>
    %424 = arith.addf %423, %422 : vector<17x128xf32>
    %425 = arith.mulf %387, %424 : vector<17x128xf32>
    %c1_188 = arith.constant 1 : index
    %c0_189 = arith.constant 0 : index
    %c0_190 = arith.constant 0 : index
    %426 = vector.load %arg16[%c1_188, %c0_189, %c0_190] : memref<2x128x32xf32, #tpu.memory_space<vmem>>, vector<1x128x32xf32>
    %427 = vector.shape_cast %426 : vector<1x128x32xf32> to vector<128x32xf32>
    %cst_191 = arith.constant dense<0.000000e+00> : vector<17x32xf32>
    %428 = tpu.matmul %425, %427, %cst_191 {dimension_numbers = #tpu.dot_dimension_numbers<[1], [0], [0], [1], [0, 0, 1, 1], [], []>} : vector<17x128xf32>, vector<128x32xf32>, vector<17x32xf32> -> vector<17x32xf32>
    %c1_192 = arith.constant 1 : index
    %c0_193 = arith.constant 0 : index
    %c0_194 = arith.constant 0 : index
    %429 = vector.load %arg17[%c1_192, %c0_193, %c0_194] : memref<2x1x32xf32, #tpu.memory_space<vmem>>, vector<1x1x32xf32>
    %430 = vector.shape_cast %429 : vector<1x1x32xf32> to vector<1x32xf32>
    %431 = vector.broadcast %430 : vector<1x32xf32> to vector<17x32xf32>
    %432 = arith.addf %428, %431 : vector<17x32xf32>
    %433 = arith.addf %352, %432 : vector<17x32xf32>
    %c0_195 = arith.constant 0 : index
    %c0_196 = arith.constant 0 : index
    %434 = vector.load %arg18[%c0_195, %c0_196] : memref<1x32xf32, #tpu.memory_space<vmem>>, vector<1x32xf32>
    %c0_197 = arith.constant 0 : index
    %c0_198 = arith.constant 0 : index
    %435 = vector.load %arg19[%c0_197, %c0_198] : memref<1x32xf32, #tpu.memory_space<vmem>>, vector<1x32xf32>
    %cst_199 = arith.constant dense<0.000000e+00> : vector<17xf32>
    %436 = vector.multi_reduction <add>, %433, %cst_199 [1] : vector<17x32xf32> to vector<17xf32>
    %437 = vector.shape_cast %436 : vector<17xf32> to vector<17x1xf32>
    %cst_200 = arith.constant 3.200000e+01 : f32
    %438 = vector.broadcast %cst_200 : f32 to vector<17x1xf32>
    %439 = arith.divf %437, %438 : vector<17x1xf32>
    %440 = vector.broadcast %439 : vector<17x1xf32> to vector<17x32xf32>
    %441 = arith.subf %433, %440 : vector<17x32xf32>
    %442 = arith.mulf %441, %441 : vector<17x32xf32>
    %cst_201 = arith.constant dense<0.000000e+00> : vector<17xf32>
    %443 = vector.multi_reduction <add>, %442, %cst_201 [1] : vector<17x32xf32> to vector<17xf32>
    %444 = vector.shape_cast %443 : vector<17xf32> to vector<17x1xf32>
    %cst_202 = arith.constant 3.200000e+01 : f32
    %445 = vector.broadcast %cst_202 : f32 to vector<17x1xf32>
    %446 = arith.divf %444, %445 : vector<17x1xf32>
    %447 = vector.broadcast %439 : vector<17x1xf32> to vector<17x32xf32>
    %448 = arith.subf %433, %447 : vector<17x32xf32>
    %cst_203 = arith.constant 9.99999974E-6 : f32
    %449 = vector.broadcast %cst_203 : f32 to vector<17x1xf32>
    %450 = arith.addf %446, %449 : vector<17x1xf32>
    %451 = math.rsqrt %450 : vector<17x1xf32>
    %452 = vector.broadcast %451 : vector<17x1xf32> to vector<17x32xf32>
    %453 = arith.mulf %448, %452 : vector<17x32xf32>
    %454 = vector.broadcast %434 : vector<1x32xf32> to vector<17x32xf32>
    %455 = arith.mulf %453, %454 : vector<17x32xf32>
    %456 = vector.broadcast %435 : vector<1x32xf32> to vector<17x32xf32>
    %457 = arith.addf %455, %456 : vector<17x32xf32>
    %458 = vector.extract_strided_slice %457 {offsets = [0, 0], sizes = [1, 32], strides = [1, 1]} : vector<17x32xf32> to vector<1x32xf32>
    %459 = vector.broadcast %26 : vector<17x1xf32> to vector<17x32xf32>
    %460 = arith.mulf %457, %459 : vector<17x32xf32>
    %cst_204 = arith.constant dense<0.000000e+00> : vector<32xf32>
    %461 = vector.multi_reduction <add>, %460, %cst_204 [0] : vector<17x32xf32> to vector<32xf32>
    %462 = vector.shape_cast %461 : vector<32xf32> to vector<1x32xf32>
    %cst_205 = arith.constant 1.600000e+01 : f32
    %463 = vector.broadcast %cst_205 : f32 to vector<1x32xf32>
    %464 = arith.divf %462, %463 : vector<1x32xf32>
    %cst_206 = arith.constant dense<0.000000e+00> : vector<1xf32>
    %465 = vector.multi_reduction <add>, %464, %cst_206 [1] : vector<1x32xf32> to vector<1xf32>
    %466 = vector.shape_cast %465 : vector<1xf32> to vector<1x1xf32>
    %cst_207 = arith.constant 3.200000e+01 : f32
    %467 = vector.broadcast %cst_207 : f32 to vector<1x1xf32>
    %468 = arith.divf %466, %467 : vector<1x1xf32>
    %469 = vector.broadcast %468 : vector<1x1xf32> to vector<1x32xf32>
    %470 = arith.subf %464, %469 : vector<1x32xf32>
    %471 = arith.mulf %470, %470 : vector<1x32xf32>
    %cst_208 = arith.constant dense<0.000000e+00> : vector<1xf32>
    %472 = vector.multi_reduction <add>, %471, %cst_208 [1] : vector<1x32xf32> to vector<1xf32>
    %473 = vector.shape_cast %472 : vector<1xf32> to vector<1x1xf32>
    %cst_209 = arith.constant 3.200000e+01 : f32
    %474 = vector.broadcast %cst_209 : f32 to vector<1x1xf32>
    %475 = arith.divf %473, %474 : vector<1x1xf32>
    %476 = vector.broadcast %468 : vector<1x1xf32> to vector<1x32xf32>
    %477 = arith.subf %464, %476 : vector<1x32xf32>
    %cst_210 = arith.constant 9.99999974E-6 : f32
    %478 = vector.broadcast %cst_210 : f32 to vector<1x1xf32>
    %479 = arith.addf %475, %478 : vector<1x1xf32>
    %480 = math.rsqrt %479 : vector<1x1xf32>
    %481 = vector.broadcast %480 : vector<1x1xf32> to vector<1x32xf32>
    %482 = arith.mulf %477, %481 : vector<1x32xf32>
    %483 = arith.mulf %482, %434 : vector<1x32xf32>
    %484 = arith.addf %483, %435 : vector<1x32xf32>
    %c0_211 = arith.constant 0 : index
    %c0_212 = arith.constant 0 : index
    %c0_213 = arith.constant 0 : index
    %485 = vector.load %arg20[%c0_211, %c0_212, %c0_213] : memref<1x2x32xf32, #tpu.memory_space<vmem>>, vector<1x1x32xf32>
    %486 = vector.shape_cast %485 : vector<1x1x32xf32> to vector<1x32xf32>
    %487 = vector.shape_cast %484 : vector<1x32xf32> to vector<1x1x32xf32>
    tpu.vector_store %arg20[%c0_211, %c0_212, %c0_213], %487 {strides = array<i32>} : memref<1x2x32xf32, #tpu.memory_space<vmem>>, vector<1x1x32xf32>,
    %c0_214 = arith.constant 0 : index
    %c1_215 = arith.constant 1 : index
    %c0_216 = arith.constant 0 : index
    %488 = vector.load %arg20[%c0_214, %c1_215, %c0_216] : memref<1x2x32xf32, #tpu.memory_space<vmem>>, vector<1x1x32xf32>
    %489 = vector.shape_cast %488 : vector<1x1x32xf32> to vector<1x32xf32>
    %490 = vector.shape_cast %458 : vector<1x32xf32> to vector<1x1x32xf32>
    tpu.vector_store %arg20[%c0_214, %c1_215, %c0_216], %490 {strides = array<i32>} : memref<1x2x32xf32, #tpu.memory_space<vmem>>, vector<1x1x32xf32>,
    return
  }
  func.func @transform_0(%arg0: i32) -> (i32, i32, i32) {
    %c0_i32 = arith.constant 0 : i32
    %c0_i32_0 = arith.constant 0 : i32
    %c0_i32_1 = arith.constant 0 : i32
    return %arg0, %c0_i32, %c0_i32_0 : i32, i32, i32
  }
  func.func @transform_1(%arg0: i32) -> (i32, i32) {
    %c0_i32 = arith.constant 0 : i32
    %c0_i32_0 = arith.constant 0 : i32
    %c0_i32_1 = arith.constant 0 : i32
    return %c0_i32, %c0_i32_0 : i32, i32
  }
  func.func @transform_2(%arg0: i32) -> (i32, i32) {
    %c0_i32 = arith.constant 0 : i32
    %c0_i32_0 = arith.constant 0 : i32
    %c0_i32_1 = arith.constant 0 : i32
    return %c0_i32, %c0_i32_0 : i32, i32
  }
  func.func @transform_3(%arg0: i32) -> (i32, i32) {
    %c0_i32 = arith.constant 0 : i32
    %c0_i32_0 = arith.constant 0 : i32
    %c0_i32_1 = arith.constant 0 : i32
    return %c0_i32, %c0_i32_0 : i32, i32
  }
  func.func @transform_4(%arg0: i32) -> (i32, i32, i32) {
    %c0_i32 = arith.constant 0 : i32
    %c0_i32_0 = arith.constant 0 : i32
    %c0_i32_1 = arith.constant 0 : i32
    %c0_i32_2 = arith.constant 0 : i32
    return %c0_i32, %c0_i32_0, %c0_i32_1 : i32, i32, i32
  }
  func.func @transform_5(%arg0: i32) -> (i32, i32, i32) {
    %c0_i32 = arith.constant 0 : i32
    %c0_i32_0 = arith.constant 0 : i32
    %c0_i32_1 = arith.constant 0 : i32
    %c0_i32_2 = arith.constant 0 : i32
    return %c0_i32, %c0_i32_0, %c0_i32_1 : i32, i32, i32
  }
  func.func @transform_6(%arg0: i32) -> (i32, i32, i32) {
    %c0_i32 = arith.constant 0 : i32
    %c0_i32_0 = arith.constant 0 : i32
    %c0_i32_1 = arith.constant 0 : i32
    %c0_i32_2 = arith.constant 0 : i32
    return %c0_i32, %c0_i32_0, %c0_i32_1 : i32, i32, i32
  }
  func.func @transform_7(%arg0: i32) -> (i32, i32, i32) {
    %c0_i32 = arith.constant 0 : i32
    %c0_i32_0 = arith.constant 0 : i32
    %c0_i32_1 = arith.constant 0 : i32
    %c0_i32_2 = arith.constant 0 : i32
    return %c0_i32, %c0_i32_0, %c0_i32_1 : i32, i32, i32
  }
  func.func @transform_8(%arg0: i32) -> (i32, i32, i32) {
    %c0_i32 = arith.constant 0 : i32
    %c0_i32_0 = arith.constant 0 : i32
    %c0_i32_1 = arith.constant 0 : i32
    %c0_i32_2 = arith.constant 0 : i32
    return %c0_i32, %c0_i32_0, %c0_i32_1 : i32, i32, i32
  }
  func.func @transform_9(%arg0: i32) -> (i32, i32, i32) {
    %c0_i32 = arith.constant 0 : i32
    %c0_i32_0 = arith.constant 0 : i32
    %c0_i32_1 = arith.constant 0 : i32
    %c0_i32_2 = arith.constant 0 : i32
    return %c0_i32, %c0_i32_0, %c0_i32_1 : i32, i32, i32
  }
  func.func @transform_10(%arg0: i32) -> (i32, i32, i32) {
    %c0_i32 = arith.constant 0 : i32
    %c0_i32_0 = arith.constant 0 : i32
    %c0_i32_1 = arith.constant 0 : i32
    %c0_i32_2 = arith.constant 0 : i32
    return %c0_i32, %c0_i32_0, %c0_i32_1 : i32, i32, i32
  }
  func.func @transform_11(%arg0: i32) -> (i32, i32, i32) {
    %c0_i32 = arith.constant 0 : i32
    %c0_i32_0 = arith.constant 0 : i32
    %c0_i32_1 = arith.constant 0 : i32
    %c0_i32_2 = arith.constant 0 : i32
    return %c0_i32, %c0_i32_0, %c0_i32_1 : i32, i32, i32
  }
  func.func @transform_12(%arg0: i32) -> (i32, i32, i32) {
    %c0_i32 = arith.constant 0 : i32
    %c0_i32_0 = arith.constant 0 : i32
    %c0_i32_1 = arith.constant 0 : i32
    %c0_i32_2 = arith.constant 0 : i32
    return %c0_i32, %c0_i32_0, %c0_i32_1 : i32, i32, i32
  }
  func.func @transform_13(%arg0: i32) -> (i32, i32, i32) {
    %c0_i32 = arith.constant 0 : i32
    %c0_i32_0 = arith.constant 0 : i32
    %c0_i32_1 = arith.constant 0 : i32
    %c0_i32_2 = arith.constant 0 : i32
    return %c0_i32, %c0_i32_0, %c0_i32_1 : i32, i32, i32
  }
  func.func @transform_14(%arg0: i32) -> (i32, i32, i32) {
    %c0_i32 = arith.constant 0 : i32
    %c0_i32_0 = arith.constant 0 : i32
    %c0_i32_1 = arith.constant 0 : i32
    %c0_i32_2 = arith.constant 0 : i32
    return %c0_i32, %c0_i32_0, %c0_i32_1 : i32, i32, i32
  }
  func.func @transform_15(%arg0: i32) -> (i32, i32, i32) {
    %c0_i32 = arith.constant 0 : i32
    %c0_i32_0 = arith.constant 0 : i32
    %c0_i32_1 = arith.constant 0 : i32
    %c0_i32_2 = arith.constant 0 : i32
    return %c0_i32, %c0_i32_0, %c0_i32_1 : i32, i32, i32
  }
  func.func @transform_16(%arg0: i32) -> (i32, i32, i32) {
    %c0_i32 = arith.constant 0 : i32
    %c0_i32_0 = arith.constant 0 : i32
    %c0_i32_1 = arith.constant 0 : i32
    %c0_i32_2 = arith.constant 0 : i32
    return %c0_i32, %c0_i32_0, %c0_i32_1 : i32, i32, i32
  }
  func.func @transform_17(%arg0: i32) -> (i32, i32) {
    %c0_i32 = arith.constant 0 : i32
    %c0_i32_0 = arith.constant 0 : i32
    %c0_i32_1 = arith.constant 0 : i32
    return %c0_i32, %c0_i32_0 : i32, i32
  }
  func.func @transform_18(%arg0: i32) -> (i32, i32) {
    %c0_i32 = arith.constant 0 : i32
    %c0_i32_0 = arith.constant 0 : i32
    %c0_i32_1 = arith.constant 0 : i32
    return %c0_i32, %c0_i32_0 : i32, i32
  }
  func.func @transform_19(%arg0: i32) -> (i32, i32, i32) {
    %c0_i32 = arith.constant 0 : i32
    %c0_i32_0 = arith.constant 0 : i32
    %c0_i32_1 = arith.constant 0 : i32
    return %arg0, %c0_i32, %c0_i32_0 : i32, i32, i32
  }
}

</mosaic_0001>

<llo_original>
// kernel: tpu_custom_call.1
$region0: #{tpu_custom_call.1}
  #allocation0 [shape = 'u32[]', space=smem, size = 0x4, offset = 0x4, fixed_abs, tag = 'smem constant byte address 0x4 - core index']
  #allocation1 [shape = 'u32[144,128]{1,0:T(1,128)}', space=vmem, size = 0x12000, scoped, tag = 'internal scratch']
  %s0 = inlined_call_operand.vmem [shape: f32[2,17,3], index: 0, kind: input, shape index: {}]
  %s1 = inlined_call_operand.vmem [shape: f32[3,32], index: 1, kind: input, shape index: {}]
  %s2 = inlined_call_operand.vmem [shape: f32[1,32], index: 2, kind: input, shape index: {}]
  %s3 = inlined_call_operand.hbm [shape: f32[17,32], index: 3, kind: input, shape index: {}]
  %s4 = inlined_call_operand.vmem [shape: f32[2,1,32], index: 4, kind: input, shape index: {}]
  %s5 = inlined_call_operand.vmem [shape: f32[2,1,32], index: 5, kind: input, shape index: {}]
  %s6 = inlined_call_operand.vmem [shape: f32[2,32,32], index: 6, kind: input, shape index: {}]
  %s7 = inlined_call_operand.vmem [shape: f32[2,32,32], index: 7, kind: input, shape index: {}]
  %s8 = inlined_call_operand.vmem [shape: f32[2,32,32], index: 8, kind: input, shape index: {}]
  %s9 = inlined_call_operand.vmem [shape: f32[2,32,32], index: 9, kind: input, shape index: {}]
  %s10 = inlined_call_operand.vmem [shape: f32[2,1,32], index: 10, kind: input, shape index: {}]
  %s11 = inlined_call_operand.vmem [shape: f32[2,1,32], index: 11, kind: input, shape index: {}]
  %s12 = inlined_call_operand.vmem [shape: f32[2,1,32], index: 12, kind: input, shape index: {}]
  %s13 = inlined_call_operand.vmem [shape: f32[2,32,128], index: 13, kind: input, shape index: {}]
  %s14 = inlined_call_operand.vmem [shape: f32[2,1,128], index: 14, kind: input, shape index: {}]
  %s15 = inlined_call_operand.vmem [shape: f32[2,128,32], index: 15, kind: input, shape index: {}]
  %s16 = inlined_call_operand.hbm [shape: f32[2,1,32], index: 16, kind: input, shape index: {}]
  %s17 = inlined_call_operand.hbm [shape: f32[1,32], index: 17, kind: input, shape index: {}]
  %s18 = inlined_call_operand.vmem [shape: f32[1,32], index: 18, kind: input, shape index: {}]
  %s19 = inlined_call_operand.hbm [shape: f32[2,2,32], index: 19, kind: output, shape index: {}]
  %s20 = sld [smem:[#allocation0]]
  $region121: #{tpu_custom_call.1} parent=0
    _
  %s22 = ssub.s32 1, %s20
  %s23 = scalar_select 0, %s22, %s20
  $region1: #{tpu_custom_call.1} parent=0
    #allocation2 [shape = 'u8[12288]{0}', space=vmem, size = 0x3000, scoped, tag = 'input window, operand 3, single buffered']
    #allocation3 [shape = 's32[2]{0}', space=sflag, size = 0x8, scoped, tag = 'scoped memory for tpu_custom_call.1']
    #allocation4 [shape = 's32[2]{0}', space=sflag, size = 0x8, scoped, tag = 'scoped memory for tpu_custom_call.1']
    #allocation5 [shape = 'u8[1024]{0}', space=vmem, size = 0x400, scoped, tag = 'input window, operand 16, single buffered']
    #allocation6 [shape = 's32[1]{0}', space=sflag, size = 0x4, scoped, tag = 'scoped memory for tpu_custom_call.1']
    #allocation7 [shape = 'u8[512]{0}', space=vmem, size = 0x400, scoped, tag = 'input window, operand 17, single buffered']
    #allocation8 [shape = 'u8[2048]{0}', space=vmem, size = 0x800, scoped, tag = 'output window, operand 0']
    %24 = vsyncpa [#allocation3], 0
    %25 = vsyncpa [#allocation6], 0
    %26 = vsyncpa [#allocation4], 0
    %s27 = scalar_lea.sflag [#allocation4], 1
    %28 = vsyncpa %s27, 0
    loop: start=0, step=1, limit=4
    $region2: #{tpu_custom_call.1} parent=1 // loop_pre_header
      _
    $region3: #{tpu_custom_call.1} parent=1 // loop_header
      %s30 = sphi 0, %s34
      %p31 = scmp.ge.s32.totalorder %s30, 4
      %s40 = sphi 0, %s42
      %s43 = sphi 0, %s40
      %s44 = sphi 0, %s43
      %s60 = sphi 0, %s44
      %s64 = sphi 0, %s64
      %s66 = sphi 0, %s64
      %s67 = sphi 0, %s66
      %s81 = sphi 0, %s67
      %s85 = sphi 0, %s85
      %s87 = sphi 0, %s85
      %s88 = sphi 0, %s87
      %s102 = sphi 0, %s88
      %s106 = sphi 0, %s106
      %s108 = sphi 0, %s106
      %s109 = sphi 0, %s108
      %s123 = sphi 0, %s109
      %s127 = sphi 0, %s127
      %s129 = sphi 0, %s127
      %s130 = sphi 0, %s129
      %s144 = sphi 0, %s130
      %s148 = sphi 0, %s148
      %s150 = sphi 0, %s148
      %s151 = sphi 0, %s150
      %s165 = sphi 0, %s151
      %s169 = sphi 0, %s169
      %s171 = sphi 0, %s169
      %s172 = sphi 0, %s171
      %s186 = sphi 0, %s172
      %s190 = sphi 0, %s190
      %s192 = sphi 0, %s190
      %s193 = sphi 0, %s192
      %s207 = sphi 0, %s193
      %s211 = sphi 0, %s211
      %s213 = sphi 0, %s211
      %s214 = sphi 0, %s213
      %s228 = sphi 0, %s214
      %s232 = sphi 0, %s232
      %s234 = sphi 0, %s232
      %s235 = sphi 0, %s234
      %s249 = sphi 0, %s235
      %s253 = sphi 0, %s253
      %s255 = sphi 0, %s253
      %s256 = sphi 0, %s255
      %s270 = sphi 0, %s256
      %s274 = sphi 0, %s274
      %s276 = sphi 0, %s274
      %s277 = sphi 0, %s276
      %s291 = sphi 0, %s277
      %s295 = sphi 0, %s295
      %s297 = sphi 0, %s295
      %s298 = sphi 0, %s297
      %s312 = sphi 0, %s298
      %s316 = sphi 0, %s316
      %s318 = sphi 0, %s316
      %s319 = sphi 0, %s318
      %s333 = sphi 0, %s319
      %s337 = sphi 0, %s337
      %s339 = sphi 0, %s337
      %s340 = sphi 0, %s339
      %s354 = sphi 0, %s340
      %s358 = sphi 0, %s358
      %s360 = sphi 0, %s358
      %s361 = sphi 0, %s360
      %s375 = sphi 0, %s361
      %s379 = sphi 0, %s379
      %s381 = sphi 0, %s379
      %s382 = sphi 0, %s381
      %s396 = sphi 0, %s382
      %s400 = sphi 0, %s400
      %s402 = sphi 0, %s400
      %s403 = sphi 0, %s402
      %s417 = sphi 0, %s403
      %s421 = sphi 0, %s421
      %s423 = sphi 0, %s421
      %s424 = sphi 0, %s423
      %s438 = sphi 0, %s424
      %s444 = sphi 0, %s446
      %s447 = sphi 0, %s444
      %s448 = sphi 0, %s447
      %s464 = sphi 0, %s448
    $region4: #{tpu_custom_call.1} parent=1 // loop_header_branch
      %33 = sbr.rel (%p31) target = $region8
    $region5: #{tpu_custom_call.1} parent=1 // loop_body
      %s35 = ssub.s32 %s30, 1
      %s36 = ssub.s32 %s30, 2
      %s37 = sadd.s32 %s30, 1
      %s38 = ssub.s32 %s30, %s37
      %p39 = scmp.eq.s32.totalorder %s38, 0
      %s41 = sadd.s32 %s40, 1
      %s42 = scalar_select %p39, %s40, %s41
      %p45 = pneg %p39
      %p46 = scmp.eq.s32.totalorder %s30, 1
      %p47 = por %p45, %p46
      %p48 = scmp.ne.s32.totalorder %s40, %s43
      %p49 = scmp.eq.s32.totalorder %s30, 0
      %p50 = por %p48, %p49
      %p51 = scmp.ne.s32.totalorder %s40, %s43
      %p52 = scmp.eq.s32.totalorder %s35, 1
      %p53 = por %p51, %p52
      %p54 = scmp.ne.s32.totalorder %s43, %s44
      %p55 = scmp.eq.s32.totalorder %s35, 0
      %p56 = por %p54, %p55
      %p57 = scmp.ne.s32.totalorder %s43, %s44
      %p58 = scmp.eq.s32.totalorder %s36, 1
      %p59 = por %p57, %p58
      %p61 = scmp.ne.s32.totalorder %s44, %s60
      %p62 = scmp.eq.s32.totalorder %s36, 0
      %p63 = por %p61, %p62
      %s65 = sadd.s32 %s64, 1
      %p68 = scmp.eq.s32.totalorder %s30, 1
      %p69 = scmp.ne.s32.totalorder %s64, %s66
      %p70 = scmp.eq.s32.totalorder %s30, 0
      %p71 = por %p69, %p70
      %p72 = scmp.ne.s32.totalorder %s64, %s66
      %p73 = scmp.eq.s32.totalorder %s35, 1
      %p74 = por %p72, %p73
      %p75 = scmp.ne.s32.totalorder %s66, %s67
      %p76 = scmp.eq.s32.totalorder %s35, 0
      %p77 = por %p75, %p76
      %p78 = scmp.ne.s32.totalorder %s66, %s67
      %p79 = scmp.eq.s32.totalorder %s36, 1
      %p80 = por %p78, %p79
      %p82 = scmp.ne.s32.totalorder %s67, %s81
      %p83 = scmp.eq.s32.totalorder %s36, 0
      %p84 = por %p82, %p83
      %s86 = sadd.s32 %s85, 1
      %p89 = scmp.eq.s32.totalorder %s30, 1
      %p90 = scmp.ne.s32.totalorder %s85, %s87
      %p91 = scmp.eq.s32.totalorder %s30, 0
      %p92 = por %p90, %p91
      %p93 = scmp.ne.s32.totalorder %s85, %s87
      %p94 = scmp.eq.s32.totalorder %s35, 1
      %p95 = por %p93, %p94
      %p96 = scmp.ne.s32.totalorder %s87, %s88
      %p97 = scmp.eq.s32.totalorder %s35, 0
      %p98 = por %p96, %p97
      %p99 = scmp.ne.s32.totalorder %s87, %s88
      %p100 = scmp.eq.s32.totalorder %s36, 1
      %p101 = por %p99, %p100
      %p103 = scmp.ne.s32.totalorder %s88, %s102
      %p104 = scmp.eq.s32.totalorder %s36, 0
      %p105 = por %p103, %p104
      %s107 = sadd.s32 %s106, 1
      %p110 = scmp.eq.s32.totalorder %s30, 1
      %p111 = scmp.ne.s32.totalorder %s106, %s108
      %p112 = scmp.eq.s32.totalorder %s30, 0
      %p113 = por %p111, %p112
      %p114 = scmp.ne.s32.totalorder %s106, %s108
      %p115 = scmp.eq.s32.totalorder %s35, 1
      %p116 = por %p114, %p115
      %p117 = scmp.ne.s32.totalorder %s108, %s109
      %p118 = scmp.eq.s32.totalorder %s35, 0
      %p119 = por %p117, %p118
      %p120 = scmp.ne.s32.totalorder %s108, %s109
      %p121 = scmp.eq.s32.totalorder %s36, 1
      %p122 = por %p120, %p121
      %p124 = scmp.ne.s32.totalorder %s109, %s123
      %p125 = scmp.eq.s32.totalorder %s36, 0
      %p126 = por %p124, %p125
      %s128 = sadd.s32 %s127, 1
      %p131 = scmp.eq.s32.totalorder %s30, 1
      %p132 = scmp.ne.s32.totalorder %s127, %s129
      %p133 = scmp.eq.s32.totalorder %s30, 0
      %p134 = por %p132, %p133
      %p135 = scmp.ne.s32.totalorder %s127, %s129
      %p136 = scmp.eq.s32.totalorder %s35, 1
      %p137 = por %p135, %p136
      %p138 = scmp.ne.s32.totalorder %s129, %s130
      %p139 = scmp.eq.s32.totalorder %s35, 0
      %p140 = por %p138, %p139
      %p141 = scmp.ne.s32.totalorder %s129, %s130
      %p142 = scmp.eq.s32.totalorder %s36, 1
      %p143 = por %p141, %p142
      %p145 = scmp.ne.s32.totalorder %s130, %s144
      %p146 = scmp.eq.s32.totalorder %s36, 0
      %p147 = por %p145, %p146
      %s149 = sadd.s32 %s148, 1
      %p152 = scmp.eq.s32.totalorder %s30, 1
      %p153 = scmp.ne.s32.totalorder %s148, %s150
      %p154 = scmp.eq.s32.totalorder %s30, 0
      %p155 = por %p153, %p154
      %p156 = scmp.ne.s32.totalorder %s148, %s150
      %p157 = scmp.eq.s32.totalorder %s35, 1
      %p158 = por %p156, %p157
      %p159 = scmp.ne.s32.totalorder %s150, %s151
      %p160 = scmp.eq.s32.totalorder %s35, 0
      %p161 = por %p159, %p160
      %p162 = scmp.ne.s32.totalorder %s150, %s151
      %p163 = scmp.eq.s32.totalorder %s36, 1
      %p164 = por %p162, %p163
      %p166 = scmp.ne.s32.totalorder %s151, %s165
      %p167 = scmp.eq.s32.totalorder %s36, 0
      %p168 = por %p166, %p167
      %s170 = sadd.s32 %s169, 1
      %p173 = scmp.eq.s32.totalorder %s30, 1
      %p174 = scmp.ne.s32.totalorder %s169, %s171
      %p175 = scmp.eq.s32.totalorder %s30, 0
      %p176 = por %p174, %p175
      %p177 = scmp.ne.s32.totalorder %s169, %s171
      %p178 = scmp.eq.s32.totalorder %s35, 1
      %p179 = por %p177, %p178
      %p180 = scmp.ne.s32.totalorder %s171, %s172
      %p181 = scmp.eq.s32.totalorder %s35, 0
      %p182 = por %p180, %p181
      %p183 = scmp.ne.s32.totalorder %s171, %s172
      %p184 = scmp.eq.s32.totalorder %s36, 1
      %p185 = por %p183, %p184
      %p187 = scmp.ne.s32.totalorder %s172, %s186
      %p188 = scmp.eq.s32.totalorder %s36, 0
      %p189 = por %p187, %p188
      %s191 = sadd.s32 %s190, 1
      %p194 = scmp.eq.s32.totalorder %s30, 1
      %p195 = scmp.ne.s32.totalorder %s190, %s192
      %p196 = scmp.eq.s32.totalorder %s30, 0
      %p197 = por %p195, %p196
      %p198 = scmp.ne.s32.totalorder %s190, %s192
      %p199 = scmp.eq.s32.totalorder %s35, 1
      %p200 = por %p198, %p199
      %p201 = scmp.ne.s32.totalorder %s192, %s193
      %p202 = scmp.eq.s32.totalorder %s35, 0
      %p203 = por %p201, %p202
      %p204 = scmp.ne.s32.totalorder %s192, %s193
      %p205 = scmp.eq.s32.totalorder %s36, 1
      %p206 = por %p204, %p205
      %p208 = scmp.ne.s32.totalorder %s193, %s207
      %p209 = scmp.eq.s32.totalorder %s36, 0
      %p210 = por %p208, %p209
      %s212 = sadd.s32 %s211, 1
      %p215 = scmp.eq.s32.totalorder %s30, 1
      %p216 = scmp.ne.s32.totalorder %s211, %s213
      %p217 = scmp.eq.s32.totalorder %s30, 0
      %p218 = por %p216, %p217
      %p219 = scmp.ne.s32.totalorder %s211, %s213
      %p220 = scmp.eq.s32.totalorder %s35, 1
      %p221 = por %p219, %p220
      %p222 = scmp.ne.s32.totalorder %s213, %s214
      %p223 = scmp.eq.s32.totalorder %s35, 0
      %p224 = por %p222, %p223
      %p225 = scmp.ne.s32.totalorder %s213, %s214
      %p226 = scmp.eq.s32.totalorder %s36, 1
      %p227 = por %p225, %p226
      %p229 = scmp.ne.s32.totalorder %s214, %s228
      %p230 = scmp.eq.s32.totalorder %s36, 0
      %p231 = por %p229, %p230
      %s233 = sadd.s32 %s232, 1
      %p236 = scmp.eq.s32.totalorder %s30, 1
      %p237 = scmp.ne.s32.totalorder %s232, %s234
      %p238 = scmp.eq.s32.totalorder %s30, 0
      %p239 = por %p237, %p238
      %p240 = scmp.ne.s32.totalorder %s232, %s234
      %p241 = scmp.eq.s32.totalorder %s35, 1
      %p242 = por %p240, %p241
      %p243 = scmp.ne.s32.totalorder %s234, %s235
      %p244 = scmp.eq.s32.totalorder %s35, 0
      %p245 = por %p243, %p244
      %p246 = scmp.ne.s32.totalorder %s234, %s235
      %p247 = scmp.eq.s32.totalorder %s36, 1
      %p248 = por %p246, %p247
      %p250 = scmp.ne.s32.totalorder %s235, %s249
      %p251 = scmp.eq.s32.totalorder %s36, 0
      %p252 = por %p250, %p251
      %s254 = sadd.s32 %s253, 1
      %p257 = scmp.eq.s32.totalorder %s30, 1
      %p258 = scmp.ne.s32.totalorder %s253, %s255
      %p259 = scmp.eq.s32.totalorder %s30, 0
      %p260 = por %p258, %p259
      %p261 = scmp.ne.s32.totalorder %s253, %s255
      %p262 = scmp.eq.s32.totalorder %s35, 1
      %p263 = por %p261, %p262
      %p264 = scmp.ne.s32.totalorder %s255, %s256
      %p265 = scmp.eq.s32.totalorder %s35, 0
      %p266 = por %p264, %p265
      %p267 = scmp.ne.s32.totalorder %s255, %s256
      %p268 = scmp.eq.s32.totalorder %s36, 1
      %p269 = por %p267, %p268
      %p271 = scmp.ne.s32.totalorder %s256, %s270
      %p272 = scmp.eq.s32.totalorder %s36, 0
      %p273 = por %p271, %p272
      %s275 = sadd.s32 %s274, 1
      %p278 = scmp.eq.s32.totalorder %s30, 1
      %p279 = scmp.ne.s32.totalorder %s274, %s276
      %p280 = scmp.eq.s32.totalorder %s30, 0
      %p281 = por %p279, %p280
      %p282 = scmp.ne.s32.totalorder %s274, %s276
      %p283 = scmp.eq.s32.totalorder %s35, 1
      %p284 = por %p282, %p283
      %p285 = scmp.ne.s32.totalorder %s276, %s277
      %p286 = scmp.eq.s32.totalorder %s35, 0
      %p287 = por %p285, %p286
      %p288 = scmp.ne.s32.totalorder %s276, %s277
      %p289 = scmp.eq.s32.totalorder %s36, 1
      %p290 = por %p288, %p289
      %p292 = scmp.ne.s32.totalorder %s277, %s291
      %p293 = scmp.eq.s32.totalorder %s36, 0
      %p294 = por %p292, %p293
      %s296 = sadd.s32 %s295, 1
      %p299 = scmp.eq.s32.totalorder %s30, 1
      %p300 = scmp.ne.s32.totalorder %s295, %s297
      %p301 = scmp.eq.s32.totalorder %s30, 0
      %p302 = por %p300, %p301
      %p303 = scmp.ne.s32.totalorder %s295, %s297
      %p304 = scmp.eq.s32.totalorder %s35, 1
      %p305 = por %p303, %p304
      %p306 = scmp.ne.s32.totalorder %s297, %s298
      %p307 = scmp.eq.s32.totalorder %s35, 0
      %p308 = por %p306, %p307
      %p309 = scmp.ne.s32.totalorder %s297, %s298
      %p310 = scmp.eq.s32.totalorder %s36, 1
      %p311 = por %p309, %p310
      %p313 = scmp.ne.s32.totalorder %s298, %s312
      %p314 = scmp.eq.s32.totalorder %s36, 0
      %p315 = por %p313, %p314
      %s317 = sadd.s32 %s316, 1
      %p320 = scmp.eq.s32.totalorder %s30, 1
      %p321 = scmp.ne.s32.totalorder %s316, %s318
      %p322 = scmp.eq.s32.totalorder %s30, 0
      %p323 = por %p321, %p322
      %p324 = scmp.ne.s32.totalorder %s316, %s318
      %p325 = scmp.eq.s32.totalorder %s35, 1
      %p326 = por %p324, %p325
      %p327 = scmp.ne.s32.totalorder %s318, %s319
      %p328 = scmp.eq.s32.totalorder %s35, 0
      %p329 = por %p327, %p328
      %p330 = scmp.ne.s32.totalorder %s318, %s319
      %p331 = scmp.eq.s32.totalorder %s36, 1
      %p332 = por %p330, %p331
      %p334 = scmp.ne.s32.totalorder %s319, %s333
      %p335 = scmp.eq.s32.totalorder %s36, 0
      %p336 = por %p334, %p335
      %s338 = sadd.s32 %s337, 1
      %p341 = scmp.eq.s32.totalorder %s30, 1
      %p342 = scmp.ne.s32.totalorder %s337, %s339
      %p343 = scmp.eq.s32.totalorder %s30, 0
      %p344 = por %p342, %p343
      %p345 = scmp.ne.s32.totalorder %s337, %s339
      %p346 = scmp.eq.s32.totalorder %s35, 1
      %p347 = por %p345, %p346
      %p348 = scmp.ne.s32.totalorder %s339, %s340
      %p349 = scmp.eq.s32.totalorder %s35, 0
      %p350 = por %p348, %p349
      %p351 = scmp.ne.s32.totalorder %s339, %s340
      %p352 = scmp.eq.s32.totalorder %s36, 1
      %p353 = por %p351, %p352
      %p355 = scmp.ne.s32.totalorder %s340, %s354
      %p356 = scmp.eq.s32.totalorder %s36, 0
      %p357 = por %p355, %p356
      %s359 = sadd.s32 %s358, 1
      %p362 = scmp.eq.s32.totalorder %s30, 1
      %p363 = scmp.ne.s32.totalorder %s358, %s360
      %p364 = scmp.eq.s32.totalorder %s30, 0
      %p365 = por %p363, %p364
      %p366 = scmp.ne.s32.totalorder %s358, %s360
      %p367 = scmp.eq.s32.totalorder %s35, 1
      %p368 = por %p366, %p367
      %p369 = scmp.ne.s32.totalorder %s360, %s361
      %p370 = scmp.eq.s32.totalorder %s35, 0
      %p371 = por %p369, %p370
      %p372 = scmp.ne.s32.totalorder %s360, %s361
      %p373 = scmp.eq.s32.totalorder %s36, 1
      %p374 = por %p372, %p373
      %p376 = scmp.ne.s32.totalorder %s361, %s375
      %p377 = scmp.eq.s32.totalorder %s36, 0
      %p378 = por %p376, %p377
      %s380 = sadd.s32 %s379, 1
      %p383 = scmp.eq.s32.totalorder %s30, 1
      %p384 = scmp.ne.s32.totalorder %s379, %s381
      %p385 = scmp.eq.s32.totalorder %s30, 0
      %p386 = por %p384, %p385
      %p387 = scmp.ne.s32.totalorder %s379, %s381
      %p388 = scmp.eq.s32.totalorder %s35, 1
      %p389 = por %p387, %p388
      %p390 = scmp.ne.s32.totalorder %s381, %s382
      %p391 = scmp.eq.s32.totalorder %s35, 0
      %p392 = por %p390, %p391
      %p393 = scmp.ne.s32.totalorder %s381, %s382
      %p394 = scmp.eq.s32.totalorder %s36, 1
      %p395 = por %p393, %p394
      %p397 = scmp.ne.s32.totalorder %s382, %s396
      %p398 = scmp.eq.s32.totalorder %s36, 0
      %p399 = por %p397, %p398
      %s401 = sadd.s32 %s400, 1
      %p404 = scmp.eq.s32.totalorder %s30, 1
      %p405 = scmp.ne.s32.totalorder %s400, %s402
      %p406 = scmp.eq.s32.totalorder %s30, 0
      %p407 = por %p405, %p406
      %p408 = scmp.ne.s32.totalorder %s400, %s402
      %p409 = scmp.eq.s32.totalorder %s35, 1
      %p410 = por %p408, %p409
      %p411 = scmp.ne.s32.totalorder %s402, %s403
      %p412 = scmp.eq.s32.totalorder %s35, 0
      %p413 = por %p411, %p412
      %p414 = scmp.ne.s32.totalorder %s402, %s403
      %p415 = scmp.eq.s32.totalorder %s36, 1
      %p416 = por %p414, %p415
      %p418 = scmp.ne.s32.totalorder %s403, %s417
      %p419 = scmp.eq.s32.totalorder %s36, 0
      %p420 = por %p418, %p419
      %s422 = sadd.s32 %s421, 1
      %p425 = scmp.eq.s32.totalorder %s30, 1
      %p426 = scmp.ne.s32.totalorder %s421, %s423
      %p427 = scmp.eq.s32.totalorder %s30, 0
      %p428 = por %p426, %p427
      %p429 = scmp.ne.s32.totalorder %s421, %s423
      %p430 = scmp.eq.s32.totalorder %s35, 1
      %p431 = por %p429, %p430
      %p432 = scmp.ne.s32.totalorder %s423, %s424
      %p433 = scmp.eq.s32.totalorder %s35, 0
      %p434 = por %p432, %p433
      %p435 = scmp.ne.s32.totalorder %s423, %s424
      %p436 = scmp.eq.s32.totalorder %s36, 1
      %p437 = por %p435, %p436
      %p439 = scmp.ne.s32.totalorder %s424, %s438
      %p440 = scmp.eq.s32.totalorder %s36, 0
      %p441 = por %p439, %p440
      %s442 = ssub.s32 %s30, %s37
      %p443 = scmp.eq.s32.totalorder %s442, 0
      %s445 = sadd.s32 %s444, 1
      %s446 = scalar_select %p443, %s444, %s445
      %p449 = pneg %p443
      %p450 = scmp.eq.s32.totalorder %s30, 1
      %p451 = por %p449, %p450
      %p452 = scmp.ne.s32.totalorder %s444, %s447
      %p453 = scmp.eq.s32.totalorder %s30, 0
      %p454 = por %p452, %p453
      %p455 = scmp.ne.s32.totalorder %s444, %s447
      %p456 = scmp.eq.s32.totalorder %s35, 1
      %p457 = por %p455, %p456
      %p458 = scmp.ne.s32.totalorder %s447, %s448
      %p459 = scmp.eq.s32.totalorder %s35, 0
      %p460 = por %p458, %p459
      %p461 = scmp.ne.s32.totalorder %s447, %s448
      %p462 = scmp.eq.s32.totalorder %s36, 1
      %p463 = por %p461, %p462
      %p465 = scmp.ne.s32.totalorder %s448, %s464
      %p466 = scmp.eq.s32.totalorder %s36, 0
      %p467 = por %p465, %p466
      %p468 = scmp.le.s32.totalorder 1, %s30
      %p469 = scmp.lt.s32.totalorder %s30, 3
      %p470 = pnand %p468, %p469
      %p471 = pneg %p470
      // Predicated region
      $region9: #{tpu_custom_call.1} parent=5 // pred_check
        _
      $region10: #{tpu_custom_call.1} parent=5 // pred_check_branch
        %473 = sbr.rel (%p470) target = $region12
      $region11: #{tpu_custom_call.1} parent=5 // pred_region
        %s474 = ssub.s32 %s30, 1
        // Predicated region
        $region13: #{tpu_custom_call.1} parent=11 // pred_check
          %p475 = pneg %p77
        $region14: #{tpu_custom_call.1} parent=11 // pred_check_branch
          %477 = sbr.rel (%p475) target = $region16
        $region15: #{tpu_custom_call.1} parent=11 // pred_region
          _
        $region16: #{tpu_custom_call.1} parent=11 // pred_fallthru
          _
        // Predicated region
        $region17: #{tpu_custom_call.1} parent=11 // pred_check
          %p478 = pneg %p98
        $region18: #{tpu_custom_call.1} parent=11 // pred_check_branch
          %480 = sbr.rel (%p478) target = $region20
        $region19: #{tpu_custom_call.1} parent=11 // pred_region
          _
        $region20: #{tpu_custom_call.1} parent=11 // pred_fallthru
          _
        // Predicated region
        $region21: #{tpu_custom_call.1} parent=11 // pred_check
          %p481 = pneg %p119
        $region22: #{tpu_custom_call.1} parent=11 // pred_check_branch
          %483 = sbr.rel (%p481) target = $region24
        $region23: #{tpu_custom_call.1} parent=11 // pred_region
          %s485 = ssub.s32 384, 384
          %486 = vsyncadd [#allocation3], %s485
          %s487 = sshll.u32 [#allocation2], 4
          %s488 = int_to_ptr.vmem [resolvable:$true] %s487
          %493 = dma.hbm_to_vmem [thread:$0]  %s3, 384, %s488, [#allocation3], 128, 128, 8
        $region24: #{tpu_custom_call.1} parent=11 // pred_fallthru
          _
        // Predicated region
        $region25: #{tpu_custom_call.1} parent=11 // pred_check
          %p494 = pneg %p140
        $region26: #{tpu_custom_call.1} parent=11 // pred_check_branch
          %496 = sbr.rel (%p494) target = $region28
        $region27: #{tpu_custom_call.1} parent=11 // pred_region
          _
        $region28: #{tpu_custom_call.1} parent=11 // pred_fallthru
          _
        // Predicated region
        $region29: #{tpu_custom_call.1} parent=11 // pred_check
          %p497 = pneg %p161
        $region30: #{tpu_custom_call.1} parent=11 // pred_check_branch
          %499 = sbr.rel (%p497) target = $region32
        $region31: #{tpu_custom_call.1} parent=11 // pred_region
          _
        $region32: #{tpu_custom_call.1} parent=11 // pred_fallthru
          _
        // Predicated region
        $region33: #{tpu_custom_call.1} parent=11 // pred_check
          %p500 = pneg %p182
        $region34: #{tpu_custom_call.1} parent=11 // pred_check_branch
          %502 = sbr.rel (%p500) target = $region36
        $region35: #{tpu_custom_call.1} parent=11 // pred_region
          _
        $region36: #{tpu_custom_call.1} parent=11 // pred_fallthru
          _
        // Predicated region
        $region37: #{tpu_custom_call.1} parent=11 // pred_check
          %p503 = pneg %p203
        $region38: #{tpu_custom_call.1} parent=11 // pred_check_branch
          %505 = sbr.rel (%p503) target = $region40
        $region39: #{tpu_custom_call.1} parent=11 // pred_region
          _
        $region40: #{tpu_custom_call.1} parent=11 // pred_fallthru
          _
        // Predicated region
        $region41: #{tpu_custom_call.1} parent=11 // pred_check
          %p506 = pneg %p224
        $region42: #{tpu_custom_call.1} parent=11 // pred_check_branch
          %508 = sbr.rel (%p506) target = $region44
        $region43: #{tpu_custom_call.1} parent=11 // pred_region
          _
        $region44: #{tpu_custom_call.1} parent=11 // pred_fallthru
          _
        // Predicated region
        $region45: #{tpu_custom_call.1} parent=11 // pred_check
          %p509 = pneg %p245
        $region46: #{tpu_custom_call.1} parent=11 // pred_check_branch
          %511 = sbr.rel (%p509) target = $region48
        $region47: #{tpu_custom_call.1} parent=11 // pred_region
          _
        $region48: #{tpu_custom_call.1} parent=11 // pred_fallthru
          _
        // Predicated region
        $region49: #{tpu_custom_call.1} parent=11 // pred_check
          %p512 = pneg %p266
        $region50: #{tpu_custom_call.1} parent=11 // pred_check_branch
          %514 = sbr.rel (%p512) target = $region52
        $region51: #{tpu_custom_call.1} parent=11 // pred_region
          _
        $region52: #{tpu_custom_call.1} parent=11 // pred_fallthru
          _
        // Predicated region
        $region53: #{tpu_custom_call.1} parent=11 // pred_check
          %p515 = pneg %p287
        $region54: #{tpu_custom_call.1} parent=11 // pred_check_branch
          %517 = sbr.rel (%p515) target = $region56
        $region55: #{tpu_custom_call.1} parent=11 // pred_region
          _
        $region56: #{tpu_custom_call.1} parent=11 // pred_fallthru
          _
        // Predicated region
        $region57: #{tpu_custom_call.1} parent=11 // pred_check
          %p518 = pneg %p308
        $region58: #{tpu_custom_call.1} parent=11 // pred_check_branch
          %520 = sbr.rel (%p518) target = $region60
        $region59: #{tpu_custom_call.1} parent=11 // pred_region
          _
        $region60: #{tpu_custom_call.1} parent=11 // pred_fallthru
          _
        // Predicated region
        $region61: #{tpu_custom_call.1} parent=11 // pred_check
          %p521 = pneg %p329
        $region62: #{tpu_custom_call.1} parent=11 // pred_check_branch
          %523 = sbr.rel (%p521) target = $region64
        $region63: #{tpu_custom_call.1} parent=11 // pred_region
          _
        $region64: #{tpu_custom_call.1} parent=11 // pred_fallthru
          _
        // Predicated region
        $region65: #{tpu_custom_call.1} parent=11 // pred_check
          %p524 = pneg %p350
        $region66: #{tpu_custom_call.1} parent=11 // pred_check_branch
          %526 = sbr.rel (%p524) target = $region68
        $region67: #{tpu_custom_call.1} parent=11 // pred_region
          _
        $region68: #{tpu_custom_call.1} parent=11 // pred_fallthru
          _
        // Predicated region
        $region69: #{tpu_custom_call.1} parent=11 // pred_check
          %p527 = pneg %p371
        $region70: #{tpu_custom_call.1} parent=11 // pred_check_branch
          %529 = sbr.rel (%p527) target = $region72
        $region71: #{tpu_custom_call.1} parent=11 // pred_region
          _
        $region72: #{tpu_custom_call.1} parent=11 // pred_fallthru
          _
        // Predicated region
        $region73: #{tpu_custom_call.1} parent=11 // pred_check
          %p530 = pneg %p392
        $region74: #{tpu_custom_call.1} parent=11 // pred_check_branch
          %532 = sbr.rel (%p530) target = $region76
        $region75: #{tpu_custom_call.1} parent=11 // pred_region
          %s534 = ssub.s32 32, 32
          %535 = vsyncadd [#allocation6], %s534
          %s536 = sshll.u32 [#allocation5], 4
          %s537 = int_to_ptr.vmem [resolvable:$true] %s536
          %542 = dma.hbm_to_vmem [thread:$0]  %s16, 32, %s537, [#allocation6], 16, 16, 1
        $region76: #{tpu_custom_call.1} parent=11 // pred_fallthru
          _
        // Predicated region
        $region77: #{tpu_custom_call.1} parent=11 // pred_check
          %p543 = pneg %p413
        $region78: #{tpu_custom_call.1} parent=11 // pred_check_branch
          %545 = sbr.rel (%p543) target = $region80
        $region79: #{tpu_custom_call.1} parent=11 // pred_region
          %s547 = ssub.s32 16, 16
          %548 = vsyncadd [#allocation6], %s547
          %s550 = sshll.u32 [#allocation7], 4
          %s551 = int_to_ptr.vmem [resolvable:$true] %s550
          %553 = dma.hbm_to_vmem [thread:$0]  %s17, 16, %s551, [#allocation6]
        $region80: #{tpu_custom_call.1} parent=11 // pred_fallthru
          _
        // Predicated region
        $region81: #{tpu_custom_call.1} parent=11 // pred_check
          %p554 = pneg %p434
        $region82: #{tpu_custom_call.1} parent=11 // pred_check_branch
          %556 = sbr.rel (%p554) target = $region84
        $region83: #{tpu_custom_call.1} parent=11 // pred_region
          _
        $region84: #{tpu_custom_call.1} parent=11 // pred_fallthru
          _
      $region12: #{tpu_custom_call.1} parent=5 // pred_fallthru
        _
      %p557 = scmp.lt.s32.totalorder %s30, 2
      // Predicated region
      $region85: #{tpu_custom_call.1} parent=5 // pred_check
        %p558 = pneg %p557
      $region86: #{tpu_custom_call.1} parent=5 // pred_check_branch
        %560 = sbr.rel (%p558) target = $region88
      $region87: #{tpu_custom_call.1} parent=5 // pred_region
        // Predicated region
        $region89: #{tpu_custom_call.1} parent=87 // pred_check
          %p561 = pneg %p50
        $region90: #{tpu_custom_call.1} parent=87 // pred_check_branch
          %563 = sbr.rel (%p561) target = $region92
        $region91: #{tpu_custom_call.1} parent=87 // pred_region
          %p564 = scmp.lt.s32.totalorder %s30, 1
          %s565 = scalar_select %p564, %s30, 1
          %s566 = smul.addr %s565, 3
          %s567 = smul.addr %s566, 8
          %s568 = scalar_lea.vmem %s0, %s567
        $region92: #{tpu_custom_call.1} parent=87 // pred_fallthru
          _
      $region88: #{tpu_custom_call.1} parent=5 // pred_fallthru
        _
      %p569 = scmp.le.s32.totalorder 1, %s30
      %p570 = scmp.lt.s32.totalorder %s30, 3
      %p571 = pnand %p569, %p570
      %p572 = pneg %p571
      // Predicated region
      $region93: #{tpu_custom_call.1} parent=5 // pred_check
        _
      $region94: #{tpu_custom_call.1} parent=5 // pred_check_branch
        %574 = sbr.rel (%p571) target = $region96
      $region95: #{tpu_custom_call.1} parent=5 // pred_region
        %s575 = ssub.s32 %s30, 1
        // Predicated region
        $region97: #{tpu_custom_call.1} parent=95 // pred_check
          %p576 = pneg %p119
        $region98: #{tpu_custom_call.1} parent=95 // pred_check_branch
          %578 = sbr.rel (%p576) target = $region100
        $region99: #{tpu_custom_call.1} parent=95 // pred_region
          %579 = dma.done [#allocation3], 384
        $region100: #{tpu_custom_call.1} parent=95 // pred_fallthru
          _
        // Predicated region
        $region101: #{tpu_custom_call.1} parent=95 // pred_check
          %p580 = pneg %p392
        $region102: #{tpu_custom_call.1} parent=95 // pred_check_branch
          %582 = sbr.rel (%p580) target = $region104
        $region103: #{tpu_custom_call.1} parent=95 // pred_region
          %583 = dma.done [#allocation6], 32
        $region104: #{tpu_custom_call.1} parent=95 // pred_fallthru
          _
        // Predicated region
        $region105: #{tpu_custom_call.1} parent=95 // pred_check
          %p584 = pneg %p413
        $region106: #{tpu_custom_call.1} parent=95 // pred_check_branch
          %586 = sbr.rel (%p584) target = $region108
        $region107: #{tpu_custom_call.1} parent=95 // pred_region
          %587 = dma.done [#allocation6], 16
        $region108: #{tpu_custom_call.1} parent=95 // pred_fallthru
          _
        %p588 = scmp.lt.s32.totalorder %s35, 1
        %s589 = scalar_select %p588, %s35, 1
        %s590 = smul.addr %s589, 3
        %s591 = smul.addr %s590, 8
        %s592 = scalar_lea.vmem %s0, %s591
        %p593 = pneg %p56
        %p594 = pneg %p53
        %p595 = pneg %p77
        %p596 = pneg %p74
        %p597 = pneg %p98
        %p598 = pneg %p95
        %p599 = pneg %p119
        %p600 = pneg %p116
        %p601 = pneg %p140
        %p602 = pneg %p137
        %p603 = pneg %p161
        %p604 = pneg %p158
        %p605 = pneg %p182
        %p606 = pneg %p179
        %p607 = pneg %p203
        %p608 = pneg %p200
        %p609 = pneg %p224
        %p610 = pneg %p221
        %p611 = pneg %p245
        %p612 = pneg %p242
        %p613 = pneg %p266
        %p614 = pneg %p263
        %p615 = pneg %p287
        %p616 = pneg %p284
        %p617 = pneg %p308
        %p618 = pneg %p305
        %p619 = pneg %p329
        %p620 = pneg %p326
        %p621 = pneg %p350
        %p622 = pneg %p347
        %p623 = pneg %p371
        %p624 = pneg %p368
        %p625 = pneg %p392
        %p626 = pneg %p389
        %p627 = pneg %p413
        %p628 = pneg %p410
        %p629 = pneg %p434
        %p630 = pneg %p431
        %p631 = pneg %p460
        %p632 = pneg %p457
        %s633 = sand.u32 %s447, 1
        %s634 = scalar_lea.sflag [#allocation4], %s633
        %s635 = sand.u32 %s447, 1
        %s636 = smul.addr %s635, 2
        %s637 = scalar_lea.vmem [#allocation8], %s636
        %p638 = scmp.lt.s32.totalorder %s35, 1
        %s639 = scalar_select %p638, %s35, 1
        %s640 = smul.addr %s639, 3
        %s641 = smul.addr %s640, 8
        %s642 = scalar_lea.vmem %s0, %s641
        %v643 = vld [vmem:[%s642] sm:$0xff]
        %v644 = vld [vmem:[%s642 + $0x8] sm:$0xff]
        %v645 = vld [vmem:[%s642 + $0x10] sm:$0x1]
        %v646 = vld [vmem:[%s1] sm:$0x7]
        %648 = vset.pattern.permute.xlu0 0
        %649 = vperm.xlu0 %648, %v643
        %v650 = vpop.permute.xlu0 %649
        %653 = vset.pattern.permute.xlu0 0
        %654 = vperm.xlu0 %653, %v644
        %v655 = vpop.permute.xlu0 %654
        %658 = vset.pattern.permute.xlu0 0
        %659 = vperm.xlu0 %658, %v645
        %v660 = vpop.permute.xlu0 %659
        %v662 = vlaneseq
        %v663 = vshrl.u32 %v662, 7
        %v664 = vsub.s32 0, %v663
        %v665 = vrot.slane %v646, %v664
        %v666 = vmul.f32 %v650, %v665
        %v667 = vmul.f32 %v655, %v665
        %v668 = vmul.f32 %v660, %v665
        %v669 = vadd.f32 %v666, 0.0
        %v670 = vadd.f32 %v667, 0.0
        %v671 = vadd.f32 %v668, 0.0
        %672 = vset.pattern.permute.xlu0 1
        %673 = vperm.xlu0 %672, %v643
        %v674 = vpop.permute.xlu0 %673
        %676 = vset.pattern.permute.xlu0 1
        %677 = vperm.xlu0 %676, %v644
        %v678 = vpop.permute.xlu0 %677
        %680 = vset.pattern.permute.xlu0 1
        %681 = vperm.xlu0 %680, %v645
        %v682 = vpop.permute.xlu0 %681
        %v684 = vlaneseq
        %v685 = vshrl.u32 %v684, 7
        %v686 = vsub.s32 1, %v685
        %v687 = vrot.slane %v646, %v686
        %v688 = vmul.f32 %v674, %v687
        %v689 = vmul.f32 %v678, %v687
        %v690 = vmul.f32 %v682, %v687
        %v691 = vadd.f32 %v669, %v688
        %v692 = vadd.f32 %v670, %v689
        %v693 = vadd.f32 %v671, %v690
        %694 = vset.pattern.permute.xlu0 2
        %695 = vperm.xlu0 %694, %v643
        %v696 = vpop.permute.xlu0 %695
        %698 = vset.pattern.permute.xlu0 2
        %699 = vperm.xlu0 %698, %v644
        %v700 = vpop.permute.xlu0 %699
        %702 = vset.pattern.permute.xlu0 2
        %703 = vperm.xlu0 %702, %v645
        %v704 = vpop.permute.xlu0 %703
        %v706 = vlaneseq
        %v707 = vshrl.u32 %v706, 7
        %v708 = vsub.s32 2, %v707
        %v709 = vrot.slane %v646, %v708
        %v710 = vmul.f32 %v696, %v709
        %v711 = vmul.f32 %v700, %v709
        %v712 = vmul.f32 %v704, %v709
        %v713 = vadd.f32 %v691, %v710
        %v714 = vadd.f32 %v692, %v711
        %v715 = vadd.f32 %v693, %v712
        %v716 = vlaneseq
        %v717 = vshrl.u32 %v716, 7
        %v718 = vadd.s32 %v717, 8
        %v719 = vadd.s32 %v717, 16
        %vm720 = vcmp.gt.s32.totalorder %v717, 0
        %vm721 = vcmp.gt.s32.totalorder %v718, 0
        %vm722 = vcmp.gt.s32.totalorder %v719, 0
        %v723 = vsel %vm720, 1, 0
        %v724 = vsel %vm721, 1, 0
        %v725 = vsel %vm722, 1, 0
        %v726 = vcvt.s32.f32 %v723
        %v727 = vcvt.s32.f32 %v724
        %v728 = vcvt.s32.f32 %v725
        %v729 = vld [vmem:[%s2] sm:$0x1]
        %v731 = vlaneseq
        %v732 = vshrl.u32 %v731, 7
        %v733 = vsub.s32 0, %v732
        %v734 = vrot.slane %v729, %v733
        %v736 = vmul.f32 %v726, %v734
        %v737 = vmul.f32 %v727, %v734
        %v738 = vmul.f32 %v728, %v734
        %v739 = vadd.f32 %v713, %v736
        %v740 = vadd.f32 %v714, %v737
        %v741 = vadd.f32 %v715, %v738
        %v742 = vld [vmem:[#allocation2] sm:$0xff]
        %v743 = vld [vmem:[#allocation2 + $0x8] sm:$0xff]
        %v744 = vld [vmem:[#allocation2 + $0x10] sm:$0x1]
        %v745 = vadd.f32 %v739, %v742
        %v746 = vadd.f32 %v740, %v743
        %v747 = vadd.f32 %v741, %v744
        %v748 = vld [vmem:[%s4] sm:$0x1]
        %v749 = vld [vmem:[%s5] sm:$0x1]
        %vm750 = vcmask 261120
        %v751 = vsel %vm750, %v745, 0.0
        %752 = vadd.xlane.f32.xlu0 %v751
        %v753 = vpop.xlane.xlu0 %752
        %v754 = vsel %vm750, %v746, 0.0
        %755 = vadd.xlane.f32.xlu0 %v754
        %v756 = vpop.xlane.xlu0 %755
        %vm757 = vcmask 253952
        %v758 = vsel %vm757, %v747, 0.0
        %759 = vadd.xlane.f32.xlu0 %v758
        %v760 = vpop.xlane.xlu0 %759
        %v761 = vrcp.pop 32.0
        %v762 = vmul.f32 %v753, %v761
        %v763 = vmul.f32 %v756, %v761
        %v764 = vmul.f32 %v760, %v761
        %v765 = vsub.f32 %v745, %v762
        %v766 = vsub.f32 %v746, %v763
        %v767 = vsub.f32 %v747, %v764
        %v768 = vmul.f32 %v765, %v765
        %v769 = vmul.f32 %v766, %v766
        %v770 = vmul.f32 %v767, %v767
        %v771 = vsel %vm750, %v768, 0.0
        %772 = vadd.xlane.f32.xlu0 %v771
        %v773 = vpop.xlane.xlu0 %772
        %v774 = vsel %vm750, %v769, 0.0
        %775 = vadd.xlane.f32.xlu0 %v774
        %v776 = vpop.xlane.xlu0 %775
        %v777 = vsel %vm757, %v770, 0.0
        %778 = vadd.xlane.f32.xlu0 %v777
        %v779 = vpop.xlane.xlu0 %778
        %v780 = vmul.f32 %v773, %v761
        %v781 = vmul.f32 %v776, %v761
        %v782 = vmul.f32 %v779, %v761
        %v783 = vadd.f32 %v780, 1e-05
        %v784 = vadd.f32 %v781, 1e-05
        %v785 = vadd.f32 %v782, 1e-05
        %v786 = vrsqrt.pop %v783
        %v787 = vrsqrt.pop %v784
        %v788 = vrsqrt.pop %v785
        %v789 = vmul.f32 %v765, %v786
        %v790 = vmul.f32 %v766, %v787
        %v791 = vmul.f32 %v767, %v788
        %v793 = vlaneseq
        %v794 = vshrl.u32 %v793, 7
        %v795 = vsub.s32 0, %v794
        %v796 = vrot.slane %v748, %v795
        %v798 = vmul.f32 %v789, %v796
        %v799 = vmul.f32 %v790, %v796
        %v800 = vmul.f32 %v791, %v796
        %v802 = vlaneseq
        %v803 = vshrl.u32 %v802, 7
        %v804 = vsub.s32 0, %v803
        %v805 = vrot.slane %v749, %v804
        %v807 = vadd.f32 %v798, %v805
        %v808 = vadd.f32 %v799, %v805
        %v809 = vadd.f32 %v800, %v805
        %v810 = vld [vmem:[%s6] sm:$0xff]
        %v811 = vld [vmem:[%s6 + $0x8] sm:$0xff]
        %v812 = vld [vmem:[%s6 + $0x10] sm:$0xff]
        %v813 = vld [vmem:[%s6 + $0x18] sm:$0xff]
        %v815 = vsel %vm750, %v807, 0
        %v818 = vsel %vm750, %v808, 0
        %v821 = vsel %vm750, %v809, 0
        %823 = vmatprep.subr.mxu0 0.0
        %824 = vmatpush1.msra.mxu0 0.0
        %825 = vmatprep.subr.mxu0 0.0
        %826 = vmatpush1.msra.mxu0 0.0
        %827 = vmatprep.subr.mxu0 0.0
        %828 = vmatpush1.msra.mxu0 0.0
        %829 = vmatprep.subr.mxu0 0.0
        %830 = vmatpush1.msra.mxu0 0.0
        %831 = vmatprep.subr.mxu0 0.0
        %832 = vmatpush1.msra.mxu0 0.0
        %833 = vmatprep.subr.mxu0 0.0
        %834 = vmatpush1.msra.mxu0 0.0
        %835 = vmatprep.subr.mxu0 0.0
        %836 = vmatpush1.msra.mxu0 0.0
        %837 = vmatprep.subr.mxu0 0.0
        %838 = vmatpush1.msra.mxu0 0.0
        %839 = vmatprep.subr.mxu0 0.0
        %840 = vmatpush1.msra.mxu0 0.0
        %841 = vmatprep.subr.mxu0 0.0
        %842 = vmatpush1.msra.mxu0 0.0
        %843 = vmatprep.subr.mxu0 0.0
        %844 = vmatpush1.msra.mxu0 0.0
        %845 = vmatprep.subr.mxu0 0.0
        %846 = vmatpush1.msra.mxu0 0.0
        %847 = vmatprep.subr.mxu0 0.0
        %848 = vmatpush1.msra.mxu0 %v813
        %849 = vmatprep.subr.mxu0 0.0
        %850 = vmatpush1.msra.mxu0 %v812
        %851 = vmatprep.subr.mxu0 0.0
        %852 = vmatpush1.msra.mxu0 %v811
        %853 = vmatprep.subr.mxu0 0.0
        %854 = vmatpush1.msra.mxu0 %v810
        %855 = vmatprep.subr.mxu0 0.0
        %856 = vmatpush2.msra.mxu0 0.0
        %857 = vmatprep.subr.mxu0 0.0
        %858 = vmatpush2.msra.mxu0 0.0
        %859 = vmatprep.subr.mxu0 0.0
        %860 = vmatpush2.msra.mxu0 0.0
        %861 = vmatprep.subr.mxu0 0.0
        %862 = vmatpush2.msra.mxu0 0.0
        %863 = vmatprep.subr.mxu0 0.0
        %864 = vmatpush2.msra.mxu0 0.0
        %865 = vmatprep.subr.mxu0 0.0
        %866 = vmatpush2.msra.mxu0 0.0
        %867 = vmatprep.subr.mxu0 0.0
        %868 = vmatpush2.msra.mxu0 0.0
        %869 = vmatprep.subr.mxu0 0.0
        %870 = vmatpush2.msra.mxu0 0.0
        %871 = vmatprep.subr.mxu0 0.0
        %872 = vmatpush2.msra.mxu0 0.0
        %873 = vmatprep.subr.mxu0 0.0
        %874 = vmatpush2.msra.mxu0 0.0
        %875 = vmatprep.subr.mxu0 0.0
        %876 = vmatpush2.msra.mxu0 0.0
        %877 = vmatprep.subr.mxu0 0.0
        %878 = vmatpush2.msra.mxu0 0.0
        %879 = vmatprep.subr.mxu0 0.0
        %880 = vmatpush2.msra.mxu0 0.0
        %881 = vmatprep.subr.mxu0 0.0
        %882 = vmatpush2.msra.mxu0 0.0
        %883 = vmatprep.subr.mxu0 0.0
        %884 = vmatpush2.msra.mxu0 0.0
        %885 = vmatprep.subr.mxu0 0.0
        %886 = vmatpush2.msra.mxu0 0.0
        %887 = vmatprep.mubr.f32.mxu0 0.0
        %888 = vmatmul.mubr.f32.gmra.mxu0 %v815
        %v889 = vpop.f32.mrf.mxu0
        %v890 = vadd.f32 0.0, %v889
        %v891 = vpop.f32.mrf.mxu0
        %892 = vmatprep.mubr.f32.mxu0 0.0
        %893 = vmatmul.mubr.f32.gmra.mxu0 %v818
        %v894 = vpop.f32.mrf.mxu0
        %v895 = vadd.f32 0.0, %v894
        %v896 = vpop.f32.mrf.mxu0
        %897 = vmatprep.mubr.f32.mxu0 0.0
        %898 = vmatmul.mubr.f32.gmra.mxu0 %v821
        %v899 = vpop.f32.mrf.mxu0
        %v900 = vadd.f32 0.0, %v899
        %v901 = vpop.f32.mrf.mxu0
        %902 = vdwg.mxu0
        %v903 = vld [vmem:[%s7] sm:$0xff]
        %v904 = vld [vmem:[%s7 + $0x8] sm:$0xff]
        %v905 = vld [vmem:[%s7 + $0x10] sm:$0xff]
        %v906 = vld [vmem:[%s7 + $0x18] sm:$0xff]
        %907 = vmatprep.subr.mxu0 0.0
        %908 = vmatpush1.msra.mxu0 0.0
        %909 = vmatprep.subr.mxu0 0.0
        %910 = vmatpush1.msra.mxu0 0.0
        %911 = vmatprep.subr.mxu0 0.0
        %912 = vmatpush1.msra.mxu0 0.0
        %913 = vmatprep.subr.mxu0 0.0
        %914 = vmatpush1.msra.mxu0 0.0
        %915 = vmatprep.subr.mxu0 0.0
        %916 = vmatpush1.msra.mxu0 0.0
        %917 = vmatprep.subr.mxu0 0.0
        %918 = vmatpush1.msra.mxu0 0.0
        %919 = vmatprep.subr.mxu0 0.0
        %920 = vmatpush1.msra.mxu0 0.0
        %921 = vmatprep.subr.mxu0 0.0
        %922 = vmatpush1.msra.mxu0 0.0
        %923 = vmatprep.subr.mxu0 0.0
        %924 = vmatpush1.msra.mxu0 0.0
        %925 = vmatprep.subr.mxu0 0.0
        %926 = vmatpush1.msra.mxu0 0.0
        %927 = vmatprep.subr.mxu0 0.0
        %928 = vmatpush1.msra.mxu0 0.0
        %929 = vmatprep.subr.mxu0 0.0
        %930 = vmatpush1.msra.mxu0 0.0
        %931 = vmatprep.subr.mxu0 0.0
        %932 = vmatpush1.msra.mxu0 %v906
        %933 = vmatprep.subr.mxu0 0.0
        %934 = vmatpush1.msra.mxu0 %v905
        %935 = vmatprep.subr.mxu0 0.0
        %936 = vmatpush1.msra.mxu0 %v904
        %937 = vmatprep.subr.mxu0 0.0
        %938 = vmatpush1.msra.mxu0 %v903
        %939 = vmatprep.subr.mxu0 0.0
        %940 = vmatpush2.msra.mxu0 0.0
        %941 = vmatprep.subr.mxu0 0.0
        %942 = vmatpush2.msra.mxu0 0.0
        %943 = vmatprep.subr.mxu0 0.0
        %944 = vmatpush2.msra.mxu0 0.0
        %945 = vmatprep.subr.mxu0 0.0
        %946 = vmatpush2.msra.mxu0 0.0
        %947 = vmatprep.subr.mxu0 0.0
        %948 = vmatpush2.msra.mxu0 0.0
        %949 = vmatprep.subr.mxu0 0.0
        %950 = vmatpush2.msra.mxu0 0.0
        %951 = vmatprep.subr.mxu0 0.0
        %952 = vmatpush2.msra.mxu0 0.0
        %953 = vmatprep.subr.mxu0 0.0
        %954 = vmatpush2.msra.mxu0 0.0
        %955 = vmatprep.subr.mxu0 0.0
        %956 = vmatpush2.msra.mxu0 0.0
        %957 = vmatprep.subr.mxu0 0.0
        %958 = vmatpush2.msra.mxu0 0.0
        %959 = vmatprep.subr.mxu0 0.0
        %960 = vmatpush2.msra.mxu0 0.0
        %961 = vmatprep.subr.mxu0 0.0
        %962 = vmatpush2.msra.mxu0 0.0
        %963 = vmatprep.subr.mxu0 0.0
        %964 = vmatpush2.msra.mxu0 0.0
        %965 = vmatprep.subr.mxu0 0.0
        %966 = vmatpush2.msra.mxu0 0.0
        %967 = vmatprep.subr.mxu0 0.0
        %968 = vmatpush2.msra.mxu0 0.0
        %969 = vmatprep.subr.mxu0 0.0
        %970 = vmatpush2.msra.mxu0 0.0
        %971 = vmatprep.mubr.f32.mxu0 0.0
        %972 = vmatmul.mubr.f32.gmra.mxu0 %v815
        %v973 = vpop.f32.mrf.mxu0
        %v974 = vadd.f32 0.0, %v973
        %v975 = vpop.f32.mrf.mxu0
        %976 = vmatprep.mubr.f32.mxu0 0.0
        %977 = vmatmul.mubr.f32.gmra.mxu0 %v818
        %v978 = vpop.f32.mrf.mxu0
        %v979 = vadd.f32 0.0, %v978
        %v980 = vpop.f32.mrf.mxu0
        %981 = vmatprep.mubr.f32.mxu0 0.0
        %982 = vmatmul.mubr.f32.gmra.mxu0 %v821
        %v983 = vpop.f32.mrf.mxu0
        %v984 = vadd.f32 0.0, %v983
        %v985 = vpop.f32.mrf.mxu0
        %986 = vdwg.mxu0
        %v987 = vld [vmem:[%s8] sm:$0xff]
        %v988 = vld [vmem:[%s8 + $0x8] sm:$0xff]
        %v989 = vld [vmem:[%s8 + $0x10] sm:$0xff]
        %v990 = vld [vmem:[%s8 + $0x18] sm:$0xff]
        %991 = vmatprep.subr.mxu0 0.0
        %992 = vmatpush1.msra.mxu0 0.0
        %993 = vmatprep.subr.mxu0 0.0
        %994 = vmatpush1.msra.mxu0 0.0
        %995 = vmatprep.subr.mxu0 0.0
        %996 = vmatpush1.msra.mxu0 0.0
        %997 = vmatprep.subr.mxu0 0.0
        %998 = vmatpush1.msra.mxu0 0.0
        %999 = vmatprep.subr.mxu0 0.0
        %1000 = vmatpush1.msra.mxu0 0.0
        %1001 = vmatprep.subr.mxu0 0.0
        %1002 = vmatpush1.msra.mxu0 0.0
        %1003 = vmatprep.subr.mxu0 0.0
        %1004 = vmatpush1.msra.mxu0 0.0
        %1005 = vmatprep.subr.mxu0 0.0
        %1006 = vmatpush1.msra.mxu0 0.0
        %1007 = vmatprep.subr.mxu0 0.0
        %1008 = vmatpush1.msra.mxu0 0.0
        %1009 = vmatprep.subr.mxu0 0.0
        %1010 = vmatpush1.msra.mxu0 0.0
        %1011 = vmatprep.subr.mxu0 0.0
        %1012 = vmatpush1.msra.mxu0 0.0
        %1013 = vmatprep.subr.mxu0 0.0
        %1014 = vmatpush1.msra.mxu0 0.0
        %1015 = vmatprep.subr.mxu0 0.0
        %1016 = vmatpush1.msra.mxu0 %v990
        %1017 = vmatprep.subr.mxu0 0.0
        %1018 = vmatpush1.msra.mxu0 %v989
        %1019 = vmatprep.subr.mxu0 0.0
        %1020 = vmatpush1.msra.mxu0 %v988
        %1021 = vmatprep.subr.mxu0 0.0
        %1022 = vmatpush1.msra.mxu0 %v987
        %1023 = vmatprep.subr.mxu0 0.0
        %1024 = vmatpush2.msra.mxu0 0.0
        %1025 = vmatprep.subr.mxu0 0.0
        %1026 = vmatpush2.msra.mxu0 0.0
        %1027 = vmatprep.subr.mxu0 0.0
        %1028 = vmatpush2.msra.mxu0 0.0
        %1029 = vmatprep.subr.mxu0 0.0
        %1030 = vmatpush2.msra.mxu0 0.0
        %1031 = vmatprep.subr.mxu0 0.0
        %1032 = vmatpush2.msra.mxu0 0.0
        %1033 = vmatprep.subr.mxu0 0.0
        %1034 = vmatpush2.msra.mxu0 0.0
        %1035 = vmatprep.subr.mxu0 0.0
        %1036 = vmatpush2.msra.mxu0 0.0
        %1037 = vmatprep.subr.mxu0 0.0
        %1038 = vmatpush2.msra.mxu0 0.0
        %1039 = vmatprep.subr.mxu0 0.0
        %1040 = vmatpush2.msra.mxu0 0.0
        %1041 = vmatprep.subr.mxu0 0.0
        %1042 = vmatpush2.msra.mxu0 0.0
        %1043 = vmatprep.subr.mxu0 0.0
        %1044 = vmatpush2.msra.mxu0 0.0
        %1045 = vmatprep.subr.mxu0 0.0
        %1046 = vmatpush2.msra.mxu0 0.0
        %1047 = vmatprep.subr.mxu0 0.0
        %1048 = vmatpush2.msra.mxu0 0.0
        %1049 = vmatprep.subr.mxu0 0.0
        %1050 = vmatpush2.msra.mxu0 0.0
        %1051 = vmatprep.subr.mxu0 0.0
        %1052 = vmatpush2.msra.mxu0 0.0
        %1053 = vmatprep.subr.mxu0 0.0
        %1054 = vmatpush2.msra.mxu0 0.0
        %1055 = vmatprep.mubr.f32.mxu0 0.0
        %1056 = vmatmul.mubr.f32.gmra.mxu0 %v815
        %v1057 = vpop.f32.mrf.mxu0
        %v1058 = vadd.f32 0.0, %v1057
        %v1059 = vpop.f32.mrf.mxu0
        %1060 = vmatprep.mubr.f32.mxu0 0.0
        %1061 = vmatmul.mubr.f32.gmra.mxu0 %v818
        %v1062 = vpop.f32.mrf.mxu0
        %v1063 = vadd.f32 0.0, %v1062
        %v1064 = vpop.f32.mrf.mxu0
        %1065 = vmatprep.mubr.f32.mxu0 0.0
        %1066 = vmatmul.mubr.f32.gmra.mxu0 %v821
        %v1067 = vpop.f32.mrf.mxu0
        %v1068 = vadd.f32 0.0, %v1067
        %v1069 = vpop.f32.mrf.mxu0
        %1070 = vdwg.mxu0
        %v1071 = vld [vmem:[%s9] sm:$0xff]
        %v1072 = vld [vmem:[%s9 + $0x8] sm:$0xff]
        %v1073 = vld [vmem:[%s9 + $0x10] sm:$0xff]
        %v1074 = vld [vmem:[%s9 + $0x18] sm:$0xff]
        %vm1075 = vcmask 64512
        %v1077 = vsel %vm1075, %v890, 0
        %v1080 = vsel %vm1075, %v895, 0
        %v1083 = vsel %vm1075, %v900, 0
        %v1086 = vsel %vm1075, %v974, 0
        %v1089 = vsel %vm1075, %v979, 0
        %v1092 = vsel %vm1075, %v984, 0
        %1094 = vmatprep.subr.mxu0 0.0
        %1095 = vmatpush1.xpose.msra.mxu0 0.0
        %1096 = vmatprep.subr.mxu0 0.0
        %1097 = vmatpush1.xpose.msra.mxu0 0.0
        %1098 = vmatprep.subr.mxu0 0.0
        %1099 = vmatpush1.xpose.msra.mxu0 0.0
        %1100 = vmatprep.subr.mxu0 0.0
        %1101 = vmatpush1.xpose.msra.mxu0 0.0
        %1102 = vmatprep.subr.mxu0 0.0
        %1103 = vmatpush1.xpose.msra.mxu0 0.0
        %1104 = vmatprep.subr.mxu0 0.0
        %1105 = vmatpush1.xpose.msra.mxu0 0.0
        %1106 = vmatprep.subr.mxu0 0.0
        %1107 = vmatpush1.xpose.msra.mxu0 0.0
        %1108 = vmatprep.subr.mxu0 0.0
        %1109 = vmatpush1.xpose.msra.mxu0 0.0
        %1110 = vmatprep.subr.mxu0 0.0
        %1111 = vmatpush1.xpose.msra.mxu0 0.0
        %1112 = vmatprep.subr.mxu0 0.0
        %1113 = vmatpush1.xpose.msra.mxu0 0.0
        %1114 = vmatprep.subr.mxu0 0.0
        %1115 = vmatpush1.xpose.msra.mxu0 0.0
        %1116 = vmatprep.subr.mxu0 0.0
        %1117 = vmatpush1.xpose.msra.mxu0 0.0
        %1118 = vmatprep.subr.mxu0 0.0
        %1119 = vmatpush1.xpose.msra.mxu0 0.0
        %1120 = vmatprep.subr.mxu0 0.0
        %1121 = vmatpush1.xpose.msra.mxu0 %v1092
        %1122 = vmatprep.subr.mxu0 0.0
        %1123 = vmatpush1.xpose.msra.mxu0 %v1089
        %1124 = vmatprep.subr.mxu0 0.0
        %1125 = vmatpush1.xpose.msra.mxu0 %v1086
        %1126 = vmatprep.subr.mxu0 0.0
        %1127 = vmatpush2.xpose.msra.mxu0 0.0
        %1128 = vmatprep.subr.mxu0 0.0
        %1129 = vmatpush2.xpose.msra.mxu0 0.0
        %1130 = vmatprep.subr.mxu0 0.0
        %1131 = vmatpush2.xpose.msra.mxu0 0.0
        %1132 = vmatprep.subr.mxu0 0.0
        %1133 = vmatpush2.xpose.msra.mxu0 0.0
        %1134 = vmatprep.subr.mxu0 0.0
        %1135 = vmatpush2.xpose.msra.mxu0 0.0
        %1136 = vmatprep.subr.mxu0 0.0
        %1137 = vmatpush2.xpose.msra.mxu0 0.0
        %1138 = vmatprep.subr.mxu0 0.0
        %1139 = vmatpush2.xpose.msra.mxu0 0.0
        %1140 = vmatprep.subr.mxu0 0.0
        %1141 = vmatpush2.xpose.msra.mxu0 0.0
        %1142 = vmatprep.subr.mxu0 0.0
        %1143 = vmatpush2.xpose.msra.mxu0 0.0
        %1144 = vmatprep.subr.mxu0 0.0
        %1145 = vmatpush2.xpose.msra.mxu0 0.0
        %1146 = vmatprep.subr.mxu0 0.0
        %1147 = vmatpush2.xpose.msra.mxu0 0.0
        %1148 = vmatprep.subr.mxu0 0.0
        %1149 = vmatpush2.xpose.msra.mxu0 0.0
        %1150 = vmatprep.subr.mxu0 0.0
        %1151 = vmatpush2.xpose.msra.mxu0 0.0
        %1152 = vmatprep.subr.mxu0 0.0
        %1153 = vmatpush2.xpose.msra.mxu0 0.0
        %1154 = vmatprep.subr.mxu0 0.0
        %1155 = vmatpush2.xpose.msra.mxu0 0.0
        %1156 = vmatprep.subr.mxu0 0.0
        %1157 = vmatpush2.xpose.msra.mxu0 0.0
        %1158 = vmatprep.mubr.f32.mxu0 0.0
        %1159 = vmatmul.mubr.f32.gmra.mxu0 %v1077
        %v1160 = vpop.f32.mrf.mxu0
        %v1161 = vadd.f32 0.0, %v1160
        %v1162 = vpop.f32.mrf.mxu0
        %1163 = vmatprep.mubr.f32.mxu0 0.0
        %1164 = vmatmul.mubr.f32.gmra.mxu0 %v1080
        %v1165 = vpop.f32.mrf.mxu0
        %v1166 = vadd.f32 0.0, %v1165
        %v1167 = vpop.f32.mrf.mxu0
        %1168 = vmatprep.mubr.f32.mxu0 0.0
        %1169 = vmatmul.mubr.f32.gmra.mxu0 %v1083
        %v1170 = vpop.f32.mrf.mxu0
        %v1171 = vadd.f32 0.0, %v1170
        %v1172 = vpop.f32.mrf.mxu0
        %1173 = vdwg.mxu0
        %v1174 = vmul.f32 %v1161, 0.17677669
        %v1175 = vmul.f32 %v1166, 0.17677669
        %v1176 = vmul.f32 %v1171, 0.17677669
        %vm1177 = vcmask 138240
        %v1178 = vsel %vm1177, %v1174, -inf
        %1179 = vmax.xlane.f32.xlu0 %v1178
        %v1180 = vpop.xlane.xlu0 %1179
        %v1181 = vsel %vm1177, %v1175, -inf
        %1182 = vmax.xlane.f32.xlu0 %v1181
        %v1183 = vpop.xlane.xlu0 %1182
        %vm1184 = vcmask 131072
        %v1185 = vsel %vm1184, %v1176, -inf
        %1186 = vmax.xlane.f32.xlu0 %v1185
        %v1187 = vpop.xlane.xlu0 %1186
        %v1188 = vsub.f32 %v1174, %v1180
        %v1189 = vsub.f32 %v1175, %v1183
        %v1190 = vsub.f32 %v1176, %v1187
        %v1191 = vmul.f32 %v1188, 1.442695
        %v1192 = vpow.pop %v1191
        %v1193 = vmul.f32 %v1189, 1.442695
        %v1194 = vpow.pop %v1193
        %v1195 = vmul.f32 %v1190, 1.442695
        %v1196 = vpow.pop %v1195
        %v1197 = vsel %vm1177, %v1192, 0.0
        %1198 = vadd.xlane.f32.xlu0 %v1197
        %v1199 = vpop.xlane.xlu0 %1198
        %v1200 = vsel %vm1177, %v1194, 0.0
        %1201 = vadd.xlane.f32.xlu0 %v1200
        %v1202 = vpop.xlane.xlu0 %1201
        %v1203 = vsel %vm1184, %v1196, 0.0
        %1204 = vadd.xlane.f32.xlu0 %v1203
        %v1205 = vpop.xlane.xlu0 %1204
        %v1206 = vrcp.pop %v1199
        %v1207 = vmul.f32 %v1192, %v1206
        %v1208 = vrcp.pop %v1202
        %v1209 = vmul.f32 %v1194, %v1208
        %v1210 = vrcp.pop %v1205
        %v1211 = vmul.f32 %v1196, %v1210
        %v1213 = vsel %vm1177, %v1207, 0
        %v1216 = vsel %vm1177, %v1209, 0
        %v1219 = vsel %vm1177, %v1211, 0
        %vm1221 = vcmask 1040384
        %v1223 = vsel %vm1221, %v1068, 0
        %1225 = vmatprep.subr.mxu0 0.0
        %1226 = vmatpush1.msra.mxu0 0.0
        %1227 = vmatprep.subr.mxu0 0.0
        %1228 = vmatpush1.msra.mxu0 0.0
        %1229 = vmatprep.subr.mxu0 0.0
        %1230 = vmatpush1.msra.mxu0 0.0
        %1231 = vmatprep.subr.mxu0 0.0
        %1232 = vmatpush1.msra.mxu0 0.0
        %1233 = vmatprep.subr.mxu0 0.0
        %1234 = vmatpush1.msra.mxu0 0.0
        %1235 = vmatprep.subr.mxu0 0.0
        %1236 = vmatpush1.msra.mxu0 0.0
        %1237 = vmatprep.subr.mxu0 0.0
        %1238 = vmatpush1.msra.mxu0 0.0
        %1239 = vmatprep.subr.mxu0 0.0
        %1240 = vmatpush1.msra.mxu0 0.0
        %1241 = vmatprep.subr.mxu0 0.0
        %1242 = vmatpush1.msra.mxu0 0.0
        %1243 = vmatprep.subr.mxu0 0.0
        %1244 = vmatpush1.msra.mxu0 0.0
        %1245 = vmatprep.subr.mxu0 0.0
        %1246 = vmatpush1.msra.mxu0 0.0
        %1247 = vmatprep.subr.mxu0 0.0
        %1248 = vmatpush1.msra.mxu0 0.0
        %1249 = vmatprep.subr.mxu0 0.0
        %1250 = vmatpush1.msra.mxu0 0.0
        %1251 = vmatprep.subr.mxu0 0.0
        %1252 = vmatpush1.msra.mxu0 %v1223
        %1253 = vmatprep.subr.mxu0 0.0
        %1254 = vmatpush1.msra.mxu0 %v1063
        %1255 = vmatprep.subr.mxu0 0.0
        %1256 = vmatpush1.msra.mxu0 %v1058
        %1257 = vmatprep.subr.mxu0 0.0
        %1258 = vmatpush2.msra.mxu0 0.0
        %1259 = vmatprep.subr.mxu0 0.0
        %1260 = vmatpush2.msra.mxu0 0.0
        %1261 = vmatprep.subr.mxu0 0.0
        %1262 = vmatpush2.msra.mxu0 0.0
        %1263 = vmatprep.subr.mxu0 0.0
        %1264 = vmatpush2.msra.mxu0 0.0
        %1265 = vmatprep.subr.mxu0 0.0
        %1266 = vmatpush2.msra.mxu0 0.0
        %1267 = vmatprep.subr.mxu0 0.0
        %1268 = vmatpush2.msra.mxu0 0.0
        %1269 = vmatprep.subr.mxu0 0.0
        %1270 = vmatpush2.msra.mxu0 0.0
        %1271 = vmatprep.subr.mxu0 0.0
        %1272 = vmatpush2.msra.mxu0 0.0
        %1273 = vmatprep.subr.mxu0 0.0
        %1274 = vmatpush2.msra.mxu0 0.0
        %1275 = vmatprep.subr.mxu0 0.0
        %1276 = vmatpush2.msra.mxu0 0.0
        %1277 = vmatprep.subr.mxu0 0.0
        %1278 = vmatpush2.msra.mxu0 0.0
        %1279 = vmatprep.subr.mxu0 0.0
        %1280 = vmatpush2.msra.mxu0 0.0
        %1281 = vmatprep.subr.mxu0 0.0
        %1282 = vmatpush2.msra.mxu0 0.0
        %1283 = vmatprep.subr.mxu0 0.0
        %1284 = vmatpush2.msra.mxu0 0.0
        %1285 = vmatprep.subr.mxu0 0.0
        %1286 = vmatpush2.msra.mxu0 0.0
        %1287 = vmatprep.subr.mxu0 0.0
        %1288 = vmatpush2.msra.mxu0 0.0
        %1289 = vmatprep.mubr.f32.mxu0 0.0
        %1290 = vmatmul.mubr.f32.gmra.mxu0 %v1213
        %v1291 = vpop.f32.mrf.mxu0
        %v1292 = vadd.f32 0.0, %v1291
        %v1293 = vpop.f32.mrf.mxu0
        %1294 = vmatprep.mubr.f32.mxu0 0.0
        %1295 = vmatmul.mubr.f32.gmra.mxu0 %v1216
        %v1296 = vpop.f32.mrf.mxu0
        %v1297 = vadd.f32 0.0, %v1296
        %v1298 = vpop.f32.mrf.mxu0
        %1299 = vmatprep.mubr.f32.mxu0 0.0
        %1300 = vmatmul.mubr.f32.gmra.mxu0 %v1219
        %v1301 = vpop.f32.mrf.mxu0
        %v1302 = vadd.f32 0.0, %v1301
        %v1303 = vpop.f32.mrf.mxu0
        %1304 = vdwg.mxu0
        %1305 = vrot.lane.b32.xlu0 %v890, 120
        %v1306 = vpop.permute.xlu0 %1305
        %1307 = vrot.lane.b32.xlu0 %v895, 120
        %v1308 = vpop.permute.xlu0 %1307
        %1309 = vrot.lane.b32.xlu0 %v900, 120
        %v1310 = vpop.permute.xlu0 %1309
        %1311 = vrot.lane.b32.xlu0 %v974, 120
        %v1312 = vpop.permute.xlu0 %1311
        %1313 = vrot.lane.b32.xlu0 %v979, 120
        %v1314 = vpop.permute.xlu0 %1313
        %1315 = vrot.lane.b32.xlu0 %v984, 120
        %v1316 = vpop.permute.xlu0 %1315
        %v1317 = vsel %vm1075, %v1306, 0
        %v1319 = vsel %vm1075, %v1308, 0
        %v1321 = vsel %vm1075, %v1310, 0
        %v1323 = vsel %vm1075, %v1312, 0
        %v1325 = vsel %vm1075, %v1314, 0
        %v1327 = vsel %vm1075, %v1316, 0
        %1329 = vmatprep.subr.mxu0 0.0
        %1330 = vmatpush1.xpose.msra.mxu0 0.0
        %1331 = vmatprep.subr.mxu0 0.0
        %1332 = vmatpush1.xpose.msra.mxu0 0.0
        %1333 = vmatprep.subr.mxu0 0.0
        %1334 = vmatpush1.xpose.msra.mxu0 0.0
        %1335 = vmatprep.subr.mxu0 0.0
        %1336 = vmatpush1.xpose.msra.mxu0 0.0
        %1337 = vmatprep.subr.mxu0 0.0
        %1338 = vmatpush1.xpose.msra.mxu0 0.0
        %1339 = vmatprep.subr.mxu0 0.0
        %1340 = vmatpush1.xpose.msra.mxu0 0.0
        %1341 = vmatprep.subr.mxu0 0.0
        %1342 = vmatpush1.xpose.msra.mxu0 0.0
        %1343 = vmatprep.subr.mxu0 0.0
        %1344 = vmatpush1.xpose.msra.mxu0 0.0
        %1345 = vmatprep.subr.mxu0 0.0
        %1346 = vmatpush1.xpose.msra.mxu0 0.0
        %1347 = vmatprep.subr.mxu0 0.0
        %1348 = vmatpush1.xpose.msra.mxu0 0.0
        %1349 = vmatprep.subr.mxu0 0.0
        %1350 = vmatpush1.xpose.msra.mxu0 0.0
        %1351 = vmatprep.subr.mxu0 0.0
        %1352 = vmatpush1.xpose.msra.mxu0 0.0
        %1353 = vmatprep.subr.mxu0 0.0
        %1354 = vmatpush1.xpose.msra.mxu0 0.0
        %1355 = vmatprep.subr.mxu0 0.0
        %1356 = vmatpush1.xpose.msra.mxu0 %v1327
        %1357 = vmatprep.subr.mxu0 0.0
        %1358 = vmatpush1.xpose.msra.mxu0 %v1325
        %1359 = vmatprep.subr.mxu0 0.0
        %1360 = vmatpush1.xpose.msra.mxu0 %v1323
        %1361 = vmatprep.subr.mxu0 0.0
        %1362 = vmatpush2.xpose.msra.mxu0 0.0
        %1363 = vmatprep.subr.mxu0 0.0
        %1364 = vmatpush2.xpose.msra.mxu0 0.0
        %1365 = vmatprep.subr.mxu0 0.0
        %1366 = vmatpush2.xpose.msra.mxu0 0.0
        %1367 = vmatprep.subr.mxu0 0.0
        %1368 = vmatpush2.xpose.msra.mxu0 0.0
        %1369 = vmatprep.subr.mxu0 0.0
        %1370 = vmatpush2.xpose.msra.mxu0 0.0
        %1371 = vmatprep.subr.mxu0 0.0
        %1372 = vmatpush2.xpose.msra.mxu0 0.0
        %1373 = vmatprep.subr.mxu0 0.0
        %1374 = vmatpush2.xpose.msra.mxu0 0.0
        %1375 = vmatprep.subr.mxu0 0.0
        %1376 = vmatpush2.xpose.msra.mxu0 0.0
        %1377 = vmatprep.subr.mxu0 0.0
        %1378 = vmatpush2.xpose.msra.mxu0 0.0
        %1379 = vmatprep.subr.mxu0 0.0
        %1380 = vmatpush2.xpose.msra.mxu0 0.0
        %1381 = vmatprep.subr.mxu0 0.0
        %1382 = vmatpush2.xpose.msra.mxu0 0.0
        %1383 = vmatprep.subr.mxu0 0.0
        %1384 = vmatpush2.xpose.msra.mxu0 0.0
        %1385 = vmatprep.subr.mxu0 0.0
        %1386 = vmatpush2.xpose.msra.mxu0 0.0
        %1387 = vmatprep.subr.mxu0 0.0
        %1388 = vmatpush2.xpose.msra.mxu0 0.0
        %1389 = vmatprep.subr.mxu0 0.0
        %1390 = vmatpush2.xpose.msra.mxu0 0.0
        %1391 = vmatprep.subr.mxu0 0.0
        %1392 = vmatpush2.xpose.msra.mxu0 0.0
        %1393 = vmatprep.mubr.f32.mxu0 0.0
        %1394 = vmatmul.mubr.f32.gmra.mxu0 %v1317
        %v1395 = vpop.f32.mrf.mxu0
        %v1396 = vadd.f32 0.0, %v1395
        %v1397 = vpop.f32.mrf.mxu0
        %1398 = vmatprep.mubr.f32.mxu0 0.0
        %1399 = vmatmul.mubr.f32.gmra.mxu0 %v1319
        %v1400 = vpop.f32.mrf.mxu0
        %v1401 = vadd.f32 0.0, %v1400
        %v1402 = vpop.f32.mrf.mxu0
        %1403 = vmatprep.mubr.f32.mxu0 0.0
        %1404 = vmatmul.mubr.f32.gmra.mxu0 %v1321
        %v1405 = vpop.f32.mrf.mxu0
        %v1406 = vadd.f32 0.0, %v1405
        %v1407 = vpop.f32.mrf.mxu0
        %1408 = vdwg.mxu0
        %v1409 = vmul.f32 %v1396, 0.17677669
        %v1410 = vmul.f32 %v1401, 0.17677669
        %v1411 = vmul.f32 %v1406, 0.17677669
        %v1412 = vsel %vm1177, %v1409, -inf
        %1413 = vmax.xlane.f32.xlu0 %v1412
        %v1414 = vpop.xlane.xlu0 %1413
        %v1415 = vsel %vm1177, %v1410, -inf
        %1416 = vmax.xlane.f32.xlu0 %v1415
        %v1417 = vpop.xlane.xlu0 %1416
        %v1418 = vsel %vm1184, %v1411, -inf
        %1419 = vmax.xlane.f32.xlu0 %v1418
        %v1420 = vpop.xlane.xlu0 %1419
        %v1421 = vsub.f32 %v1409, %v1414
        %v1422 = vsub.f32 %v1410, %v1417
        %v1423 = vsub.f32 %v1411, %v1420
        %v1424 = vmul.f32 %v1421, 1.442695
        %v1425 = vpow.pop %v1424
        %v1426 = vmul.f32 %v1422, 1.442695
        %v1427 = vpow.pop %v1426
        %v1428 = vmul.f32 %v1423, 1.442695
        %v1429 = vpow.pop %v1428
        %v1430 = vsel %vm1177, %v1425, 0.0
        %1431 = vadd.xlane.f32.xlu0 %v1430
        %v1432 = vpop.xlane.xlu0 %1431
        %v1433 = vsel %vm1177, %v1427, 0.0
        %1434 = vadd.xlane.f32.xlu0 %v1433
        %v1435 = vpop.xlane.xlu0 %1434
        %v1436 = vsel %vm1184, %v1429, 0.0
        %1437 = vadd.xlane.f32.xlu0 %v1436
        %v1438 = vpop.xlane.xlu0 %1437
        %v1439 = vrcp.pop %v1432
        %v1440 = vmul.f32 %v1425, %v1439
        %v1441 = vrcp.pop %v1435
        %v1442 = vmul.f32 %v1427, %v1441
        %v1443 = vrcp.pop %v1438
        %v1444 = vmul.f32 %v1429, %v1443
        %1447 = vrot.lane.b32.xlu0 %v1058, 120
        %v1448 = vpop.permute.xlu0 %1447
        %1449 = vrot.lane.b32.xlu0 %v1063, 120
        %v1450 = vpop.permute.xlu0 %1449
        %1451 = vrot.lane.b32.xlu0 %v1068, 120
        %v1452 = vpop.permute.xlu0 %1451
        %v1456 = vsel %vm1177, %v1440, 0
        %v1459 = vsel %vm1177, %v1442, 0
        %v1462 = vsel %vm1177, %v1444, 0
        %v1464 = vsel %vm1221, %v1452, 0
        %1466 = vmatprep.subr.mxu0 0.0
        %1467 = vmatpush1.msra.mxu0 0.0
        %1468 = vmatprep.subr.mxu0 0.0
        %1469 = vmatpush1.msra.mxu0 0.0
        %1470 = vmatprep.subr.mxu0 0.0
        %1471 = vmatpush1.msra.mxu0 0.0
        %1472 = vmatprep.subr.mxu0 0.0
        %1473 = vmatpush1.msra.mxu0 0.0
        %1474 = vmatprep.subr.mxu0 0.0
        %1475 = vmatpush1.msra.mxu0 0.0
        %1476 = vmatprep.subr.mxu0 0.0
        %1477 = vmatpush1.msra.mxu0 0.0
        %1478 = vmatprep.subr.mxu0 0.0
        %1479 = vmatpush1.msra.mxu0 0.0
        %1480 = vmatprep.subr.mxu0 0.0
        %1481 = vmatpush1.msra.mxu0 0.0
        %1482 = vmatprep.subr.mxu0 0.0
        %1483 = vmatpush1.msra.mxu0 0.0
        %1484 = vmatprep.subr.mxu0 0.0
        %1485 = vmatpush1.msra.mxu0 0.0
        %1486 = vmatprep.subr.mxu0 0.0
        %1487 = vmatpush1.msra.mxu0 0.0
        %1488 = vmatprep.subr.mxu0 0.0
        %1489 = vmatpush1.msra.mxu0 0.0
        %1490 = vmatprep.subr.mxu0 0.0
        %1491 = vmatpush1.msra.mxu0 0.0
        %1492 = vmatprep.subr.mxu0 0.0
        %1493 = vmatpush1.msra.mxu0 %v1464
        %1494 = vmatprep.subr.mxu0 0.0
        %1495 = vmatpush1.msra.mxu0 %v1450
        %1496 = vmatprep.subr.mxu0 0.0
        %1497 = vmatpush1.msra.mxu0 %v1448
        %1498 = vmatprep.subr.mxu0 0.0
        %1499 = vmatpush2.msra.mxu0 0.0
        %1500 = vmatprep.subr.mxu0 0.0
        %1501 = vmatpush2.msra.mxu0 0.0
        %1502 = vmatprep.subr.mxu0 0.0
        %1503 = vmatpush2.msra.mxu0 0.0
        %1504 = vmatprep.subr.mxu0 0.0
        %1505 = vmatpush2.msra.mxu0 0.0
        %1506 = vmatprep.subr.mxu0 0.0
        %1507 = vmatpush2.msra.mxu0 0.0
        %1508 = vmatprep.subr.mxu0 0.0
        %1509 = vmatpush2.msra.mxu0 0.0
        %1510 = vmatprep.subr.mxu0 0.0
        %1511 = vmatpush2.msra.mxu0 0.0
        %1512 = vmatprep.subr.mxu0 0.0
        %1513 = vmatpush2.msra.mxu0 0.0
        %1514 = vmatprep.subr.mxu0 0.0
        %1515 = vmatpush2.msra.mxu0 0.0
        %1516 = vmatprep.subr.mxu0 0.0
        %1517 = vmatpush2.msra.mxu0 0.0
        %1518 = vmatprep.subr.mxu0 0.0
        %1519 = vmatpush2.msra.mxu0 0.0
        %1520 = vmatprep.subr.mxu0 0.0
        %1521 = vmatpush2.msra.mxu0 0.0
        %1522 = vmatprep.subr.mxu0 0.0
        %1523 = vmatpush2.msra.mxu0 0.0
        %1524 = vmatprep.subr.mxu0 0.0
        %1525 = vmatpush2.msra.mxu0 0.0
        %1526 = vmatprep.subr.mxu0 0.0
        %1527 = vmatpush2.msra.mxu0 0.0
        %1528 = vmatprep.subr.mxu0 0.0
        %1529 = vmatpush2.msra.mxu0 0.0
        %1530 = vmatprep.mubr.f32.mxu0 0.0
        %1531 = vmatmul.mubr.f32.gmra.mxu0 %v1456
        %v1532 = vpop.f32.mrf.mxu0
        %v1533 = vadd.f32 0.0, %v1532
        %v1534 = vpop.f32.mrf.mxu0
        %1535 = vmatprep.mubr.f32.mxu0 0.0
        %1536 = vmatmul.mubr.f32.gmra.mxu0 %v1459
        %v1537 = vpop.f32.mrf.mxu0
        %v1538 = vadd.f32 0.0, %v1537
        %v1539 = vpop.f32.mrf.mxu0
        %1540 = vmatprep.mubr.f32.mxu0 0.0
        %1541 = vmatmul.mubr.f32.gmra.mxu0 %v1462
        %v1542 = vpop.f32.mrf.mxu0
        %v1543 = vadd.f32 0.0, %v1542
        %v1544 = vpop.f32.mrf.mxu0
        %1545 = vdwg.mxu0
        %v1547 = vsel %vm1075, %v1533, 0
        %v1550 = vsel %vm1075, %v1538, 0
        %v1553 = vsel %vm1075, %v1543, 0
        %1555 = vmatprep.subr.mxu0 0.0
        %1556 = vmatpush1.msra.mxu0 0.0
        %1557 = vmatprep.subr.mxu0 0.0
        %1558 = vmatpush1.msra.mxu0 0.0
        %1559 = vmatprep.subr.mxu0 0.0
        %1560 = vmatpush1.msra.mxu0 0.0
        %1561 = vmatprep.subr.mxu0 0.0
        %1562 = vmatpush1.msra.mxu0 0.0
        %1563 = vmatprep.subr.mxu0 0.0
        %1564 = vmatpush1.msra.mxu0 0.0
        %1565 = vmatprep.subr.mxu0 0.0
        %1566 = vmatpush1.msra.mxu0 0.0
        %1567 = vmatprep.subr.mxu0 0.0
        %1568 = vmatpush1.msra.mxu0 0.0
        %1569 = vmatprep.subr.mxu0 0.0
        %1570 = vmatpush1.msra.mxu0 0.0
        %1571 = vmatprep.subr.mxu0 0.0
        %1572 = vmatpush1.msra.mxu0 0.0
        %1573 = vmatprep.subr.mxu0 0.0
        %1574 = vmatpush1.msra.mxu0 0.0
        %1575 = vmatprep.subr.mxu0 0.0
        %1576 = vmatpush1.msra.mxu0 0.0
        %1577 = vmatprep.subr.mxu0 0.0
        %1578 = vmatpush1.msra.mxu0 0.0
        %1579 = vmatprep.subr.mxu0 0.0
        %1580 = vmatpush1.msra.mxu0 0.0
        %1581 = vmatprep.subr.mxu0 0.0
        %1582 = vmatpush1.msra.mxu0 0.0
        %1583 = vmatprep.subr.mxu0 0.0
        %1584 = vmatpush1.msra.mxu0 0.0
        %1585 = vmatprep.subr.mxu0 0.0
        %1586 = vmatpush1.msra.mxu0 %v1072
        %1587 = vmatprep.subr.mxu0 0.0
        %1588 = vmatpush2.msra.mxu0 0.0
        %1589 = vmatprep.subr.mxu0 0.0
        %1590 = vmatpush2.msra.mxu0 0.0
        %1591 = vmatprep.subr.mxu0 0.0
        %1592 = vmatpush2.msra.mxu0 0.0
        %1593 = vmatprep.subr.mxu0 0.0
        %1594 = vmatpush2.msra.mxu0 0.0
        %1595 = vmatprep.subr.mxu0 0.0
        %1596 = vmatpush2.msra.mxu0 0.0
        %1597 = vmatprep.subr.mxu0 0.0
        %1598 = vmatpush2.msra.mxu0 0.0
        %1599 = vmatprep.subr.mxu0 0.0
        %1600 = vmatpush2.msra.mxu0 0.0
        %1601 = vmatprep.subr.mxu0 0.0
        %1602 = vmatpush2.msra.mxu0 0.0
        %1603 = vmatprep.subr.mxu0 0.0
        %1604 = vmatpush2.msra.mxu0 0.0
        %1605 = vmatprep.subr.mxu0 0.0
        %1606 = vmatpush2.msra.mxu0 0.0
        %1607 = vmatprep.subr.mxu0 0.0
        %1608 = vmatpush2.msra.mxu0 0.0
        %1609 = vmatprep.subr.mxu0 0.0
        %1610 = vmatpush2.msra.mxu0 0.0
        %1611 = vmatprep.subr.mxu0 0.0
        %1612 = vmatpush2.msra.mxu0 0.0
        %1613 = vmatprep.subr.mxu0 0.0
        %1614 = vmatpush2.msra.mxu0 0.0
        %1615 = vmatprep.subr.mxu0 0.0
        %1616 = vmatpush2.msra.mxu0 0.0
        %1617 = vmatprep.subr.mxu0 0.0
        %1618 = vmatpush2.msra.mxu0 0.0
        %1619 = vmatprep.mubr.f32.mxu0 0.0
        %1620 = vmatmul.mubr.f32.gmra.mxu0 %v1547
        %v1621 = vpop.f32.mrf.mxu0
        %v1622 = vadd.f32 0.0, %v1621
        %v1623 = vpop.f32.mrf.mxu0
        %1624 = vmatprep.mubr.f32.mxu0 0.0
        %1625 = vmatmul.mubr.f32.gmra.mxu0 %v1550
        %v1626 = vpop.f32.mrf.mxu0
        %v1627 = vadd.f32 0.0, %v1626
        %v1628 = vpop.f32.mrf.mxu0
        %1629 = vmatprep.mubr.f32.mxu0 0.0
        %1630 = vmatmul.mubr.f32.gmra.mxu0 %v1553
        %v1631 = vpop.f32.mrf.mxu0
        %v1632 = vadd.f32 0.0, %v1631
        %v1633 = vpop.f32.mrf.mxu0
        %1634 = vdwg.mxu0
        %v1636 = vsel %vm1075, %v1292, 0
        %v1639 = vsel %vm1075, %v1297, 0
        %v1642 = vsel %vm1075, %v1302, 0
        %1644 = vmatprep.subr.mxu0 0.0
        %1645 = vmatpush1.msra.mxu0 0.0
        %1646 = vmatprep.subr.mxu0 0.0
        %1647 = vmatpush1.msra.mxu0 0.0
        %1648 = vmatprep.subr.mxu0 0.0
        %1649 = vmatpush1.msra.mxu0 0.0
        %1650 = vmatprep.subr.mxu0 0.0
        %1651 = vmatpush1.msra.mxu0 0.0
        %1652 = vmatprep.subr.mxu0 0.0
        %1653 = vmatpush1.msra.mxu0 0.0
        %1654 = vmatprep.subr.mxu0 0.0
        %1655 = vmatpush1.msra.mxu0 0.0
        %1656 = vmatprep.subr.mxu0 0.0
        %1657 = vmatpush1.msra.mxu0 0.0
        %1658 = vmatprep.subr.mxu0 0.0
        %1659 = vmatpush1.msra.mxu0 0.0
        %1660 = vmatprep.subr.mxu0 0.0
        %1661 = vmatpush1.msra.mxu0 0.0
        %1662 = vmatprep.subr.mxu0 0.0
        %1663 = vmatpush1.msra.mxu0 0.0
        %1664 = vmatprep.subr.mxu0 0.0
        %1665 = vmatpush1.msra.mxu0 0.0
        %1666 = vmatprep.subr.mxu0 0.0
        %1667 = vmatpush1.msra.mxu0 0.0
        %1668 = vmatprep.subr.mxu0 0.0
        %1669 = vmatpush1.msra.mxu0 0.0
        %1670 = vmatprep.subr.mxu0 0.0
        %1671 = vmatpush1.msra.mxu0 0.0
        %1672 = vmatprep.subr.mxu0 0.0
        %1673 = vmatpush1.msra.mxu0 0.0
        %1674 = vmatprep.subr.mxu0 0.0
        %1675 = vmatpush1.msra.mxu0 %v1071
        %1676 = vmatprep.subr.mxu0 0.0
        %1677 = vmatpush2.msra.mxu0 0.0
        %1678 = vmatprep.subr.mxu0 0.0
        %1679 = vmatpush2.msra.mxu0 0.0
        %1680 = vmatprep.subr.mxu0 0.0
        %1681 = vmatpush2.msra.mxu0 0.0
        %1682 = vmatprep.subr.mxu0 0.0
        %1683 = vmatpush2.msra.mxu0 0.0
        %1684 = vmatprep.subr.mxu0 0.0
        %1685 = vmatpush2.msra.mxu0 0.0
        %1686 = vmatprep.subr.mxu0 0.0
        %1687 = vmatpush2.msra.mxu0 0.0
        %1688 = vmatprep.subr.mxu0 0.0
        %1689 = vmatpush2.msra.mxu0 0.0
        %1690 = vmatprep.subr.mxu0 0.0
        %1691 = vmatpush2.msra.mxu0 0.0
        %1692 = vmatprep.subr.mxu0 0.0
        %1693 = vmatpush2.msra.mxu0 0.0
        %1694 = vmatprep.subr.mxu0 0.0
        %1695 = vmatpush2.msra.mxu0 0.0
        %1696 = vmatprep.subr.mxu0 0.0
        %1697 = vmatpush2.msra.mxu0 0.0
        %1698 = vmatprep.subr.mxu0 0.0
        %1699 = vmatpush2.msra.mxu0 0.0
        %1700 = vmatprep.subr.mxu0 0.0
        %1701 = vmatpush2.msra.mxu0 0.0
        %1702 = vmatprep.subr.mxu0 0.0
        %1703 = vmatpush2.msra.mxu0 0.0
        %1704 = vmatprep.subr.mxu0 0.0
        %1705 = vmatpush2.msra.mxu0 0.0
        %1706 = vmatprep.subr.mxu0 0.0
        %1707 = vmatpush2.msra.mxu0 0.0
        %1708 = vmatprep.mubr.f32.mxu0 0.0
        %1709 = vmatmul.mubr.f32.gmra.mxu0 %v1636
        %v1710 = vpop.f32.mrf.mxu0
        %v1711 = vadd.f32 %v1622, %v1710
        %v1712 = vpop.f32.mrf.mxu0
        %1713 = vmatprep.mubr.f32.mxu0 0.0
        %1714 = vmatmul.mubr.f32.gmra.mxu0 %v1639
        %v1715 = vpop.f32.mrf.mxu0
        %v1716 = vadd.f32 %v1627, %v1715
        %v1717 = vpop.f32.mrf.mxu0
        %1718 = vmatprep.mubr.f32.mxu0 0.0
        %1719 = vmatmul.mubr.f32.gmra.mxu0 %v1642
        %v1720 = vpop.f32.mrf.mxu0
        %v1721 = vadd.f32 %v1632, %v1720
        %v1722 = vpop.f32.mrf.mxu0
        %1723 = vdwg.mxu0
        %1724 = vrot.lane.b32.xlu0 %v890, 112
        %v1725 = vpop.permute.xlu0 %1724
        %1726 = vrot.lane.b32.xlu0 %v895, 112
        %v1727 = vpop.permute.xlu0 %1726
        %1728 = vrot.lane.b32.xlu0 %v900, 112
        %v1729 = vpop.permute.xlu0 %1728
        %1730 = vrot.lane.b32.xlu0 %v974, 112
        %v1731 = vpop.permute.xlu0 %1730
        %1732 = vrot.lane.b32.xlu0 %v979, 112
        %v1733 = vpop.permute.xlu0 %1732
        %1734 = vrot.lane.b32.xlu0 %v984, 112
        %v1735 = vpop.permute.xlu0 %1734
        %v1736 = vsel %vm1075, %v1725, 0
        %v1738 = vsel %vm1075, %v1727, 0
        %v1740 = vsel %vm1075, %v1729, 0
        %v1742 = vsel %vm1075, %v1731, 0
        %v1744 = vsel %vm1075, %v1733, 0
        %v1746 = vsel %vm1075, %v1735, 0
        %1748 = vmatprep.subr.mxu0 0.0
        %1749 = vmatpush1.xpose.msra.mxu0 0.0
        %1750 = vmatprep.subr.mxu0 0.0
        %1751 = vmatpush1.xpose.msra.mxu0 0.0
        %1752 = vmatprep.subr.mxu0 0.0
        %1753 = vmatpush1.xpose.msra.mxu0 0.0
        %1754 = vmatprep.subr.mxu0 0.0
        %1755 = vmatpush1.xpose.msra.mxu0 0.0
        %1756 = vmatprep.subr.mxu0 0.0
        %1757 = vmatpush1.xpose.msra.mxu0 0.0
        %1758 = vmatprep.subr.mxu0 0.0
        %1759 = vmatpush1.xpose.msra.mxu0 0.0
        %1760 = vmatprep.subr.mxu0 0.0
        %1761 = vmatpush1.xpose.msra.mxu0 0.0
        %1762 = vmatprep.subr.mxu0 0.0
        %1763 = vmatpush1.xpose.msra.mxu0 0.0
        %1764 = vmatprep.subr.mxu0 0.0
        %1765 = vmatpush1.xpose.msra.mxu0 0.0
        %1766 = vmatprep.subr.mxu0 0.0
        %1767 = vmatpush1.xpose.msra.mxu0 0.0
        %1768 = vmatprep.subr.mxu0 0.0
        %1769 = vmatpush1.xpose.msra.mxu0 0.0
        %1770 = vmatprep.subr.mxu0 0.0
        %1771 = vmatpush1.xpose.msra.mxu0 0.0
        %1772 = vmatprep.subr.mxu0 0.0
        %1773 = vmatpush1.xpose.msra.mxu0 0.0
        %1774 = vmatprep.subr.mxu0 0.0
        %1775 = vmatpush1.xpose.msra.mxu0 %v1746
        %1776 = vmatprep.subr.mxu0 0.0
        %1777 = vmatpush1.xpose.msra.mxu0 %v1744
        %1778 = vmatprep.subr.mxu0 0.0
        %1779 = vmatpush1.xpose.msra.mxu0 %v1742
        %1780 = vmatprep.subr.mxu0 0.0
        %1781 = vmatpush2.xpose.msra.mxu0 0.0
        %1782 = vmatprep.subr.mxu0 0.0
        %1783 = vmatpush2.xpose.msra.mxu0 0.0
        %1784 = vmatprep.subr.mxu0 0.0
        %1785 = vmatpush2.xpose.msra.mxu0 0.0
        %1786 = vmatprep.subr.mxu0 0.0
        %1787 = vmatpush2.xpose.msra.mxu0 0.0
        %1788 = vmatprep.subr.mxu0 0.0
        %1789 = vmatpush2.xpose.msra.mxu0 0.0
        %1790 = vmatprep.subr.mxu0 0.0
        %1791 = vmatpush2.xpose.msra.mxu0 0.0
        %1792 = vmatprep.subr.mxu0 0.0
        %1793 = vmatpush2.xpose.msra.mxu0 0.0
        %1794 = vmatprep.subr.mxu0 0.0
        %1795 = vmatpush2.xpose.msra.mxu0 0.0
        %1796 = vmatprep.subr.mxu0 0.0
        %1797 = vmatpush2.xpose.msra.mxu0 0.0
        %1798 = vmatprep.subr.mxu0 0.0
        %1799 = vmatpush2.xpose.msra.mxu0 0.0
        %1800 = vmatprep.subr.mxu0 0.0
        %1801 = vmatpush2.xpose.msra.mxu0 0.0
        %1802 = vmatprep.subr.mxu0 0.0
        %1803 = vmatpush2.xpose.msra.mxu0 0.0
        %1804 = vmatprep.subr.mxu0 0.0
        %1805 = vmatpush2.xpose.msra.mxu0 0.0
        %1806 = vmatprep.subr.mxu0 0.0
        %1807 = vmatpush2.xpose.msra.mxu0 0.0
        %1808 = vmatprep.subr.mxu0 0.0
        %1809 = vmatpush2.xpose.msra.mxu0 0.0
        %1810 = vmatprep.subr.mxu0 0.0
        %1811 = vmatpush2.xpose.msra.mxu0 0.0
        %1812 = vmatprep.mubr.f32.mxu0 0.0
        %1813 = vmatmul.mubr.f32.gmra.mxu0 %v1736
        %v1814 = vpop.f32.mrf.mxu0
        %v1815 = vadd.f32 0.0, %v1814
        %v1816 = vpop.f32.mrf.mxu0
        %1817 = vmatprep.mubr.f32.mxu0 0.0
        %1818 = vmatmul.mubr.f32.gmra.mxu0 %v1738
        %v1819 = vpop.f32.mrf.mxu0
        %v1820 = vadd.f32 0.0, %v1819
        %v1821 = vpop.f32.mrf.mxu0
        %1822 = vmatprep.mubr.f32.mxu0 0.0
        %1823 = vmatmul.mubr.f32.gmra.mxu0 %v1740
        %v1824 = vpop.f32.mrf.mxu0
        %v1825 = vadd.f32 0.0, %v1824
        %v1826 = vpop.f32.mrf.mxu0
        %1827 = vdwg.mxu0
        %v1828 = vmul.f32 %v1815, 0.17677669
        %v1829 = vmul.f32 %v1820, 0.17677669
        %v1830 = vmul.f32 %v1825, 0.17677669
        %v1831 = vsel %vm1177, %v1828, -inf
        %1832 = vmax.xlane.f32.xlu0 %v1831
        %v1833 = vpop.xlane.xlu0 %1832
        %v1834 = vsel %vm1177, %v1829, -inf
        %1835 = vmax.xlane.f32.xlu0 %v1834
        %v1836 = vpop.xlane.xlu0 %1835
        %v1837 = vsel %vm1184, %v1830, -inf
        %1838 = vmax.xlane.f32.xlu0 %v1837
        %v1839 = vpop.xlane.xlu0 %1838
        %v1840 = vsub.f32 %v1828, %v1833
        %v1841 = vsub.f32 %v1829, %v1836
        %v1842 = vsub.f32 %v1830, %v1839
        %v1843 = vmul.f32 %v1840, 1.442695
        %v1844 = vpow.pop %v1843
        %v1845 = vmul.f32 %v1841, 1.442695
        %v1846 = vpow.pop %v1845
        %v1847 = vmul.f32 %v1842, 1.442695
        %v1848 = vpow.pop %v1847
        %v1849 = vsel %vm1177, %v1844, 0.0
        %1850 = vadd.xlane.f32.xlu0 %v1849
        %v1851 = vpop.xlane.xlu0 %1850
        %v1852 = vsel %vm1177, %v1846, 0.0
        %1853 = vadd.xlane.f32.xlu0 %v1852
        %v1854 = vpop.xlane.xlu0 %1853
        %v1855 = vsel %vm1184, %v1848, 0.0
        %1856 = vadd.xlane.f32.xlu0 %v1855
        %v1857 = vpop.xlane.xlu0 %1856
        %v1858 = vrcp.pop %v1851
        %v1859 = vmul.f32 %v1844, %v1858
        %v1860 = vrcp.pop %v1854
        %v1861 = vmul.f32 %v1846, %v1860
        %v1862 = vrcp.pop %v1857
        %v1863 = vmul.f32 %v1848, %v1862
        %1864 = vrot.lane.b32.xlu0 %v1058, 112
        %v1865 = vpop.permute.xlu0 %1864
        %1866 = vrot.lane.b32.xlu0 %v1063, 112
        %v1867 = vpop.permute.xlu0 %1866
        %1868 = vrot.lane.b32.xlu0 %v1068, 112
        %v1869 = vpop.permute.xlu0 %1868
        %v1873 = vsel %vm1177, %v1859, 0
        %v1876 = vsel %vm1177, %v1861, 0
        %v1879 = vsel %vm1177, %v1863, 0
        %v1881 = vsel %vm1221, %v1869, 0
        %1883 = vmatprep.subr.mxu0 0.0
        %1884 = vmatpush1.msra.mxu0 0.0
        %1885 = vmatprep.subr.mxu0 0.0
        %1886 = vmatpush1.msra.mxu0 0.0
        %1887 = vmatprep.subr.mxu0 0.0
        %1888 = vmatpush1.msra.mxu0 0.0
        %1889 = vmatprep.subr.mxu0 0.0
        %1890 = vmatpush1.msra.mxu0 0.0
        %1891 = vmatprep.subr.mxu0 0.0
        %1892 = vmatpush1.msra.mxu0 0.0
        %1893 = vmatprep.subr.mxu0 0.0
        %1894 = vmatpush1.msra.mxu0 0.0
        %1895 = vmatprep.subr.mxu0 0.0
        %1896 = vmatpush1.msra.mxu0 0.0
        %1897 = vmatprep.subr.mxu0 0.0
        %1898 = vmatpush1.msra.mxu0 0.0
        %1899 = vmatprep.subr.mxu0 0.0
        %1900 = vmatpush1.msra.mxu0 0.0
        %1901 = vmatprep.subr.mxu0 0.0
        %1902 = vmatpush1.msra.mxu0 0.0
        %1903 = vmatprep.subr.mxu0 0.0
        %1904 = vmatpush1.msra.mxu0 0.0
        %1905 = vmatprep.subr.mxu0 0.0
        %1906 = vmatpush1.msra.mxu0 0.0
        %1907 = vmatprep.subr.mxu0 0.0
        %1908 = vmatpush1.msra.mxu0 0.0
        %1909 = vmatprep.subr.mxu0 0.0
        %1910 = vmatpush1.msra.mxu0 %v1881
        %1911 = vmatprep.subr.mxu0 0.0
        %1912 = vmatpush1.msra.mxu0 %v1867
        %1913 = vmatprep.subr.mxu0 0.0
        %1914 = vmatpush1.msra.mxu0 %v1865
        %1915 = vmatprep.subr.mxu0 0.0
        %1916 = vmatpush2.msra.mxu0 0.0
        %1917 = vmatprep.subr.mxu0 0.0
        %1918 = vmatpush2.msra.mxu0 0.0
        %1919 = vmatprep.subr.mxu0 0.0
        %1920 = vmatpush2.msra.mxu0 0.0
        %1921 = vmatprep.subr.mxu0 0.0
        %1922 = vmatpush2.msra.mxu0 0.0
        %1923 = vmatprep.subr.mxu0 0.0
        %1924 = vmatpush2.msra.mxu0 0.0
        %1925 = vmatprep.subr.mxu0 0.0
        %1926 = vmatpush2.msra.mxu0 0.0
        %1927 = vmatprep.subr.mxu0 0.0
        %1928 = vmatpush2.msra.mxu0 0.0
        %1929 = vmatprep.subr.mxu0 0.0
        %1930 = vmatpush2.msra.mxu0 0.0
        %1931 = vmatprep.subr.mxu0 0.0
        %1932 = vmatpush2.msra.mxu0 0.0
        %1933 = vmatprep.subr.mxu0 0.0
        %1934 = vmatpush2.msra.mxu0 0.0
        %1935 = vmatprep.subr.mxu0 0.0
        %1936 = vmatpush2.msra.mxu0 0.0
        %1937 = vmatprep.subr.mxu0 0.0
        %1938 = vmatpush2.msra.mxu0 0.0
        %1939 = vmatprep.subr.mxu0 0.0
        %1940 = vmatpush2.msra.mxu0 0.0
        %1941 = vmatprep.subr.mxu0 0.0
        %1942 = vmatpush2.msra.mxu0 0.0
        %1943 = vmatprep.subr.mxu0 0.0
        %1944 = vmatpush2.msra.mxu0 0.0
        %1945 = vmatprep.subr.mxu0 0.0
        %1946 = vmatpush2.msra.mxu0 0.0
        %1947 = vmatprep.mubr.f32.mxu0 0.0
        %1948 = vmatmul.mubr.f32.gmra.mxu0 %v1873
        %v1949 = vpop.f32.mrf.mxu0
        %v1950 = vadd.f32 0.0, %v1949
        %v1951 = vpop.f32.mrf.mxu0
        %1952 = vmatprep.mubr.f32.mxu0 0.0
        %1953 = vmatmul.mubr.f32.gmra.mxu0 %v1876
        %v1954 = vpop.f32.mrf.mxu0
        %v1955 = vadd.f32 0.0, %v1954
        %v1956 = vpop.f32.mrf.mxu0
        %1957 = vmatprep.mubr.f32.mxu0 0.0
        %1958 = vmatmul.mubr.f32.gmra.mxu0 %v1879
        %v1959 = vpop.f32.mrf.mxu0
        %v1960 = vadd.f32 0.0, %v1959
        %v1961 = vpop.f32.mrf.mxu0
        %1962 = vdwg.mxu0
        %v1964 = vsel %vm1075, %v1950, 0
        %v1967 = vsel %vm1075, %v1955, 0
        %v1970 = vsel %vm1075, %v1960, 0
        %1972 = vmatprep.subr.mxu0 0.0
        %1973 = vmatpush1.msra.mxu0 0.0
        %1974 = vmatprep.subr.mxu0 0.0
        %1975 = vmatpush1.msra.mxu0 0.0
        %1976 = vmatprep.subr.mxu0 0.0
        %1977 = vmatpush1.msra.mxu0 0.0
        %1978 = vmatprep.subr.mxu0 0.0
        %1979 = vmatpush1.msra.mxu0 0.0
        %1980 = vmatprep.subr.mxu0 0.0
        %1981 = vmatpush1.msra.mxu0 0.0
        %1982 = vmatprep.subr.mxu0 0.0
        %1983 = vmatpush1.msra.mxu0 0.0
        %1984 = vmatprep.subr.mxu0 0.0
        %1985 = vmatpush1.msra.mxu0 0.0
        %1986 = vmatprep.subr.mxu0 0.0
        %1987 = vmatpush1.msra.mxu0 0.0
        %1988 = vmatprep.subr.mxu0 0.0
        %1989 = vmatpush1.msra.mxu0 0.0
        %1990 = vmatprep.subr.mxu0 0.0
        %1991 = vmatpush1.msra.mxu0 0.0
        %1992 = vmatprep.subr.mxu0 0.0
        %1993 = vmatpush1.msra.mxu0 0.0
        %1994 = vmatprep.subr.mxu0 0.0
        %1995 = vmatpush1.msra.mxu0 0.0
        %1996 = vmatprep.subr.mxu0 0.0
        %1997 = vmatpush1.msra.mxu0 0.0
        %1998 = vmatprep.subr.mxu0 0.0
        %1999 = vmatpush1.msra.mxu0 0.0
        %2000 = vmatprep.subr.mxu0 0.0
        %2001 = vmatpush1.msra.mxu0 0.0
        %2002 = vmatprep.subr.mxu0 0.0
        %2003 = vmatpush1.msra.mxu0 %v1073
        %2004 = vmatprep.subr.mxu0 0.0
        %2005 = vmatpush2.msra.mxu0 0.0
        %2006 = vmatprep.subr.mxu0 0.0
        %2007 = vmatpush2.msra.mxu0 0.0
        %2008 = vmatprep.subr.mxu0 0.0
        %2009 = vmatpush2.msra.mxu0 0.0
        %2010 = vmatprep.subr.mxu0 0.0
        %2011 = vmatpush2.msra.mxu0 0.0
        %2012 = vmatprep.subr.mxu0 0.0
        %2013 = vmatpush2.msra.mxu0 0.0
        %2014 = vmatprep.subr.mxu0 0.0
        %2015 = vmatpush2.msra.mxu0 0.0
        %2016 = vmatprep.subr.mxu0 0.0
        %2017 = vmatpush2.msra.mxu0 0.0
        %2018 = vmatprep.subr.mxu0 0.0
        %2019 = vmatpush2.msra.mxu0 0.0
        %2020 = vmatprep.subr.mxu0 0.0
        %2021 = vmatpush2.msra.mxu0 0.0
        %2022 = vmatprep.subr.mxu0 0.0
        %2023 = vmatpush2.msra.mxu0 0.0
        %2024 = vmatprep.subr.mxu0 0.0
        %2025 = vmatpush2.msra.mxu0 0.0
        %2026 = vmatprep.subr.mxu0 0.0
        %2027 = vmatpush2.msra.mxu0 0.0
        %2028 = vmatprep.subr.mxu0 0.0
        %2029 = vmatpush2.msra.mxu0 0.0
        %2030 = vmatprep.subr.mxu0 0.0
        %2031 = vmatpush2.msra.mxu0 0.0
        %2032 = vmatprep.subr.mxu0 0.0
        %2033 = vmatpush2.msra.mxu0 0.0
        %2034 = vmatprep.subr.mxu0 0.0
        %2035 = vmatpush2.msra.mxu0 0.0
        %2036 = vmatprep.mubr.f32.mxu0 0.0
        %2037 = vmatmul.mubr.f32.gmra.mxu0 %v1964
        %v2038 = vpop.f32.mrf.mxu0
        %v2039 = vadd.f32 0.0, %v2038
        %v2040 = vpop.f32.mrf.mxu0
        %2041 = vmatprep.mubr.f32.mxu0 0.0
        %2042 = vmatmul.mubr.f32.gmra.mxu0 %v1967
        %v2043 = vpop.f32.mrf.mxu0
        %v2044 = vadd.f32 0.0, %v2043
        %v2045 = vpop.f32.mrf.mxu0
        %2046 = vmatprep.mubr.f32.mxu0 0.0
        %2047 = vmatmul.mubr.f32.gmra.mxu0 %v1970
        %v2048 = vpop.f32.mrf.mxu0
        %v2049 = vadd.f32 0.0, %v2048
        %v2050 = vpop.f32.mrf.mxu0
        %2051 = vdwg.mxu0
        %v2052 = vadd.f32 %v1711, %v2039
        %v2053 = vadd.f32 %v1716, %v2044
        %v2054 = vadd.f32 %v1721, %v2049
        %2055 = vrot.lane.b32.xlu0 %v890, 104
        %v2056 = vpop.permute.xlu0 %2055
        %2057 = vrot.lane.b32.xlu0 %v895, 104
        %v2058 = vpop.permute.xlu0 %2057
        %2059 = vrot.lane.b32.xlu0 %v900, 104
        %v2060 = vpop.permute.xlu0 %2059
        %2061 = vrot.lane.b32.xlu0 %v974, 104
        %v2062 = vpop.permute.xlu0 %2061
        %2063 = vrot.lane.b32.xlu0 %v979, 104
        %v2064 = vpop.permute.xlu0 %2063
        %2065 = vrot.lane.b32.xlu0 %v984, 104
        %v2066 = vpop.permute.xlu0 %2065
        %v2067 = vsel %vm1075, %v2056, 0
        %v2069 = vsel %vm1075, %v2058, 0
        %v2071 = vsel %vm1075, %v2060, 0
        %v2073 = vsel %vm1075, %v2062, 0
        %v2075 = vsel %vm1075, %v2064, 0
        %v2077 = vsel %vm1075, %v2066, 0
        %2079 = vmatprep.subr.mxu0 0.0
        %2080 = vmatpush1.xpose.msra.mxu0 0.0
        %2081 = vmatprep.subr.mxu0 0.0
        %2082 = vmatpush1.xpose.msra.mxu0 0.0
        %2083 = vmatprep.subr.mxu0 0.0
        %2084 = vmatpush1.xpose.msra.mxu0 0.0
        %2085 = vmatprep.subr.mxu0 0.0
        %2086 = vmatpush1.xpose.msra.mxu0 0.0
        %2087 = vmatprep.subr.mxu0 0.0
        %2088 = vmatpush1.xpose.msra.mxu0 0.0
        %2089 = vmatprep.subr.mxu0 0.0
        %2090 = vmatpush1.xpose.msra.mxu0 0.0
        %2091 = vmatprep.subr.mxu0 0.0
        %2092 = vmatpush1.xpose.msra.mxu0 0.0
        %2093 = vmatprep.subr.mxu0 0.0
        %2094 = vmatpush1.xpose.msra.mxu0 0.0
        %2095 = vmatprep.subr.mxu0 0.0
        %2096 = vmatpush1.xpose.msra.mxu0 0.0
        %2097 = vmatprep.subr.mxu0 0.0
        %2098 = vmatpush1.xpose.msra.mxu0 0.0
        %2099 = vmatprep.subr.mxu0 0.0
        %2100 = vmatpush1.xpose.msra.mxu0 0.0
        %2101 = vmatprep.subr.mxu0 0.0
        %2102 = vmatpush1.xpose.msra.mxu0 0.0
        %2103 = vmatprep.subr.mxu0 0.0
        %2104 = vmatpush1.xpose.msra.mxu0 0.0
        %2105 = vmatprep.subr.mxu0 0.0
        %2106 = vmatpush1.xpose.msra.mxu0 %v2077
        %2107 = vmatprep.subr.mxu0 0.0
        %2108 = vmatpush1.xpose.msra.mxu0 %v2075
        %2109 = vmatprep.subr.mxu0 0.0
        %2110 = vmatpush1.xpose.msra.mxu0 %v2073
        %2111 = vmatprep.subr.mxu0 0.0
        %2112 = vmatpush2.xpose.msra.mxu0 0.0
        %2113 = vmatprep.subr.mxu0 0.0
        %2114 = vmatpush2.xpose.msra.mxu0 0.0
        %2115 = vmatprep.subr.mxu0 0.0
        %2116 = vmatpush2.xpose.msra.mxu0 0.0
        %2117 = vmatprep.subr.mxu0 0.0
        %2118 = vmatpush2.xpose.msra.mxu0 0.0
        %2119 = vmatprep.subr.mxu0 0.0
        %2120 = vmatpush2.xpose.msra.mxu0 0.0
        %2121 = vmatprep.subr.mxu0 0.0
        %2122 = vmatpush2.xpose.msra.mxu0 0.0
        %2123 = vmatprep.subr.mxu0 0.0
        %2124 = vmatpush2.xpose.msra.mxu0 0.0
        %2125 = vmatprep.subr.mxu0 0.0
        %2126 = vmatpush2.xpose.msra.mxu0 0.0
        %2127 = vmatprep.subr.mxu0 0.0
        %2128 = vmatpush2.xpose.msra.mxu0 0.0
        %2129 = vmatprep.subr.mxu0 0.0
        %2130 = vmatpush2.xpose.msra.mxu0 0.0
        %2131 = vmatprep.subr.mxu0 0.0
        %2132 = vmatpush2.xpose.msra.mxu0 0.0
        %2133 = vmatprep.subr.mxu0 0.0
        %2134 = vmatpush2.xpose.msra.mxu0 0.0
        %2135 = vmatprep.subr.mxu0 0.0
        %2136 = vmatpush2.xpose.msra.mxu0 0.0
        %2137 = vmatprep.subr.mxu0 0.0
        %2138 = vmatpush2.xpose.msra.mxu0 0.0
        %2139 = vmatprep.subr.mxu0 0.0
        %2140 = vmatpush2.xpose.msra.mxu0 0.0
        %2141 = vmatprep.subr.mxu0 0.0
        %2142 = vmatpush2.xpose.msra.mxu0 0.0
        %2143 = vmatprep.mubr.f32.mxu0 0.0
        %2144 = vmatmul.mubr.f32.gmra.mxu0 %v2067
        %v2145 = vpop.f32.mrf.mxu0
        %v2146 = vadd.f32 0.0, %v2145
        %v2147 = vpop.f32.mrf.mxu0
        %2148 = vmatprep.mubr.f32.mxu0 0.0
        %2149 = vmatmul.mubr.f32.gmra.mxu0 %v2069
        %v2150 = vpop.f32.mrf.mxu0
        %v2151 = vadd.f32 0.0, %v2150
        %v2152 = vpop.f32.mrf.mxu0
        %2153 = vmatprep.mubr.f32.mxu0 0.0
        %2154 = vmatmul.mubr.f32.gmra.mxu0 %v2071
        %v2155 = vpop.f32.mrf.mxu0
        %v2156 = vadd.f32 0.0, %v2155
        %v2157 = vpop.f32.mrf.mxu0
        %2158 = vdwg.mxu0
        %v2159 = vmul.f32 %v2146, 0.17677669
        %v2160 = vmul.f32 %v2151, 0.17677669
        %v2161 = vmul.f32 %v2156, 0.17677669
        %v2162 = vsel %vm1177, %v2159, -inf
        %2163 = vmax.xlane.f32.xlu0 %v2162
        %v2164 = vpop.xlane.xlu0 %2163
        %v2165 = vsel %vm1177, %v2160, -inf
        %2166 = vmax.xlane.f32.xlu0 %v2165
        %v2167 = vpop.xlane.xlu0 %2166
        %v2168 = vsel %vm1184, %v2161, -inf
        %2169 = vmax.xlane.f32.xlu0 %v2168
        %v2170 = vpop.xlane.xlu0 %2169
        %v2171 = vsub.f32 %v2159, %v2164
        %v2172 = vsub.f32 %v2160, %v2167
        %v2173 = vsub.f32 %v2161, %v2170
        %v2174 = vmul.f32 %v2171, 1.442695
        %v2175 = vpow.pop %v2174
        %v2176 = vmul.f32 %v2172, 1.442695
        %v2177 = vpow.pop %v2176
        %v2178 = vmul.f32 %v2173, 1.442695
        %v2179 = vpow.pop %v2178
        %v2180 = vsel %vm1177, %v2175, 0.0
        %2181 = vadd.xlane.f32.xlu0 %v2180
        %v2182 = vpop.xlane.xlu0 %2181
        %v2183 = vsel %vm1177, %v2177, 0.0
        %2184 = vadd.xlane.f32.xlu0 %v2183
        %v2185 = vpop.xlane.xlu0 %2184
        %v2186 = vsel %vm1184, %v2179, 0.0
        %2187 = vadd.xlane.f32.xlu0 %v2186
        %v2188 = vpop.xlane.xlu0 %2187
        %v2189 = vrcp.pop %v2182
        %v2190 = vmul.f32 %v2175, %v2189
        %v2191 = vrcp.pop %v2185
        %v2192 = vmul.f32 %v2177, %v2191
        %v2193 = vrcp.pop %v2188
        %v2194 = vmul.f32 %v2179, %v2193
        %2195 = vrot.lane.b32.xlu0 %v1058, 104
        %v2196 = vpop.permute.xlu0 %2195
        %2197 = vrot.lane.b32.xlu0 %v1063, 104
        %v2198 = vpop.permute.xlu0 %2197
        %2199 = vrot.lane.b32.xlu0 %v1068, 104
        %v2200 = vpop.permute.xlu0 %2199
        %v2204 = vsel %vm1177, %v2190, 0
        %v2207 = vsel %vm1177, %v2192, 0
        %v2210 = vsel %vm1177, %v2194, 0
        %v2212 = vsel %vm1221, %v2200, 0
        %2214 = vmatprep.subr.mxu0 0.0
        %2215 = vmatpush1.msra.mxu0 0.0
        %2216 = vmatprep.subr.mxu0 0.0
        %2217 = vmatpush1.msra.mxu0 0.0
        %2218 = vmatprep.subr.mxu0 0.0
        %2219 = vmatpush1.msra.mxu0 0.0
        %2220 = vmatprep.subr.mxu0 0.0
        %2221 = vmatpush1.msra.mxu0 0.0
        %2222 = vmatprep.subr.mxu0 0.0
        %2223 = vmatpush1.msra.mxu0 0.0
        %2224 = vmatprep.subr.mxu0 0.0
        %2225 = vmatpush1.msra.mxu0 0.0
        %2226 = vmatprep.subr.mxu0 0.0
        %2227 = vmatpush1.msra.mxu0 0.0
        %2228 = vmatprep.subr.mxu0 0.0
        %2229 = vmatpush1.msra.mxu0 0.0
        %2230 = vmatprep.subr.mxu0 0.0
        %2231 = vmatpush1.msra.mxu0 0.0
        %2232 = vmatprep.subr.mxu0 0.0
        %2233 = vmatpush1.msra.mxu0 0.0
        %2234 = vmatprep.subr.mxu0 0.0
        %2235 = vmatpush1.msra.mxu0 0.0
        %2236 = vmatprep.subr.mxu0 0.0
        %2237 = vmatpush1.msra.mxu0 0.0
        %2238 = vmatprep.subr.mxu0 0.0
        %2239 = vmatpush1.msra.mxu0 0.0
        %2240 = vmatprep.subr.mxu0 0.0
        %2241 = vmatpush1.msra.mxu0 %v2212
        %2242 = vmatprep.subr.mxu0 0.0
        %2243 = vmatpush1.msra.mxu0 %v2198
        %2244 = vmatprep.subr.mxu0 0.0
        %2245 = vmatpush1.msra.mxu0 %v2196
        %2246 = vmatprep.subr.mxu0 0.0
        %2247 = vmatpush2.msra.mxu0 0.0
        %2248 = vmatprep.subr.mxu0 0.0
        %2249 = vmatpush2.msra.mxu0 0.0
        %2250 = vmatprep.subr.mxu0 0.0
        %2251 = vmatpush2.msra.mxu0 0.0
        %2252 = vmatprep.subr.mxu0 0.0
        %2253 = vmatpush2.msra.mxu0 0.0
        %2254 = vmatprep.subr.mxu0 0.0
        %2255 = vmatpush2.msra.mxu0 0.0
        %2256 = vmatprep.subr.mxu0 0.0
        %2257 = vmatpush2.msra.mxu0 0.0
        %2258 = vmatprep.subr.mxu0 0.0
        %2259 = vmatpush2.msra.mxu0 0.0
        %2260 = vmatprep.subr.mxu0 0.0
        %2261 = vmatpush2.msra.mxu0 0.0
        %2262 = vmatprep.subr.mxu0 0.0
        %2263 = vmatpush2.msra.mxu0 0.0
        %2264 = vmatprep.subr.mxu0 0.0
        %2265 = vmatpush2.msra.mxu0 0.0
        %2266 = vmatprep.subr.mxu0 0.0
        %2267 = vmatpush2.msra.mxu0 0.0
        %2268 = vmatprep.subr.mxu0 0.0
        %2269 = vmatpush2.msra.mxu0 0.0
        %2270 = vmatprep.subr.mxu0 0.0
        %2271 = vmatpush2.msra.mxu0 0.0
        %2272 = vmatprep.subr.mxu0 0.0
        %2273 = vmatpush2.msra.mxu0 0.0
        %2274 = vmatprep.subr.mxu0 0.0
        %2275 = vmatpush2.msra.mxu0 0.0
        %2276 = vmatprep.subr.mxu0 0.0
        %2277 = vmatpush2.msra.mxu0 0.0
        %2278 = vmatprep.mubr.f32.mxu0 0.0
        %2279 = vmatmul.mubr.f32.gmra.mxu0 %v2204
        %v2280 = vpop.f32.mrf.mxu0
        %v2281 = vadd.f32 0.0, %v2280
        %v2282 = vpop.f32.mrf.mxu0
        %2283 = vmatprep.mubr.f32.mxu0 0.0
        %2284 = vmatmul.mubr.f32.gmra.mxu0 %v2207
        %v2285 = vpop.f32.mrf.mxu0
        %v2286 = vadd.f32 0.0, %v2285
        %v2287 = vpop.f32.mrf.mxu0
        %2288 = vmatprep.mubr.f32.mxu0 0.0
        %2289 = vmatmul.mubr.f32.gmra.mxu0 %v2210
        %v2290 = vpop.f32.mrf.mxu0
        %v2291 = vadd.f32 0.0, %v2290
        %v2292 = vpop.f32.mrf.mxu0
        %2293 = vdwg.mxu0
        %v2295 = vsel %vm1075, %v2281, 0
        %v2298 = vsel %vm1075, %v2286, 0
        %v2301 = vsel %vm1075, %v2291, 0
        %2303 = vmatprep.subr.mxu0 0.0
        %2304 = vmatpush1.msra.mxu0 0.0
        %2305 = vmatprep.subr.mxu0 0.0
        %2306 = vmatpush1.msra.mxu0 0.0
        %2307 = vmatprep.subr.mxu0 0.0
        %2308 = vmatpush1.msra.mxu0 0.0
        %2309 = vmatprep.subr.mxu0 0.0
        %2310 = vmatpush1.msra.mxu0 0.0
        %2311 = vmatprep.subr.mxu0 0.0
        %2312 = vmatpush1.msra.mxu0 0.0
        %2313 = vmatprep.subr.mxu0 0.0
        %2314 = vmatpush1.msra.mxu0 0.0
        %2315 = vmatprep.subr.mxu0 0.0
        %2316 = vmatpush1.msra.mxu0 0.0
        %2317 = vmatprep.subr.mxu0 0.0
        %2318 = vmatpush1.msra.mxu0 0.0
        %2319 = vmatprep.subr.mxu0 0.0
        %2320 = vmatpush1.msra.mxu0 0.0
        %2321 = vmatprep.subr.mxu0 0.0
        %2322 = vmatpush1.msra.mxu0 0.0
        %2323 = vmatprep.subr.mxu0 0.0
        %2324 = vmatpush1.msra.mxu0 0.0
        %2325 = vmatprep.subr.mxu0 0.0
        %2326 = vmatpush1.msra.mxu0 0.0
        %2327 = vmatprep.subr.mxu0 0.0
        %2328 = vmatpush1.msra.mxu0 0.0
        %2329 = vmatprep.subr.mxu0 0.0
        %2330 = vmatpush1.msra.mxu0 0.0
        %2331 = vmatprep.subr.mxu0 0.0
        %2332 = vmatpush1.msra.mxu0 0.0
        %2333 = vmatprep.subr.mxu0 0.0
        %2334 = vmatpush1.msra.mxu0 %v1074
        %2335 = vmatprep.subr.mxu0 0.0
        %2336 = vmatpush2.msra.mxu0 0.0
        %2337 = vmatprep.subr.mxu0 0.0
        %2338 = vmatpush2.msra.mxu0 0.0
        %2339 = vmatprep.subr.mxu0 0.0
        %2340 = vmatpush2.msra.mxu0 0.0
        %2341 = vmatprep.subr.mxu0 0.0
        %2342 = vmatpush2.msra.mxu0 0.0
        %2343 = vmatprep.subr.mxu0 0.0
        %2344 = vmatpush2.msra.mxu0 0.0
        %2345 = vmatprep.subr.mxu0 0.0
        %2346 = vmatpush2.msra.mxu0 0.0
        %2347 = vmatprep.subr.mxu0 0.0
        %2348 = vmatpush2.msra.mxu0 0.0
        %2349 = vmatprep.subr.mxu0 0.0
        %2350 = vmatpush2.msra.mxu0 0.0
        %2351 = vmatprep.subr.mxu0 0.0
        %2352 = vmatpush2.msra.mxu0 0.0
        %2353 = vmatprep.subr.mxu0 0.0
        %2354 = vmatpush2.msra.mxu0 0.0
        %2355 = vmatprep.subr.mxu0 0.0
        %2356 = vmatpush2.msra.mxu0 0.0
        %2357 = vmatprep.subr.mxu0 0.0
        %2358 = vmatpush2.msra.mxu0 0.0
        %2359 = vmatprep.subr.mxu0 0.0
        %2360 = vmatpush2.msra.mxu0 0.0
        %2361 = vmatprep.subr.mxu0 0.0
        %2362 = vmatpush2.msra.mxu0 0.0
        %2363 = vmatprep.subr.mxu0 0.0
        %2364 = vmatpush2.msra.mxu0 0.0
        %2365 = vmatprep.subr.mxu0 0.0
        %2366 = vmatpush2.msra.mxu0 0.0
        %2367 = vmatprep.mubr.f32.mxu0 0.0
        %2368 = vmatmul.mubr.f32.gmra.mxu0 %v2295
        %v2369 = vpop.f32.mrf.mxu0
        %v2370 = vadd.f32 0.0, %v2369
        %v2371 = vpop.f32.mrf.mxu0
        %2372 = vmatprep.mubr.f32.mxu0 0.0
        %2373 = vmatmul.mubr.f32.gmra.mxu0 %v2298
        %v2374 = vpop.f32.mrf.mxu0
        %v2375 = vadd.f32 0.0, %v2374
        %v2376 = vpop.f32.mrf.mxu0
        %2377 = vmatprep.mubr.f32.mxu0 0.0
        %2378 = vmatmul.mubr.f32.gmra.mxu0 %v2301
        %v2379 = vpop.f32.mrf.mxu0
        %v2380 = vadd.f32 0.0, %v2379
        %v2381 = vpop.f32.mrf.mxu0
        %2382 = vdwg.mxu0
        %v2383 = vadd.f32 %v2052, %v2370
        %v2384 = vadd.f32 %v2053, %v2375
        %v2385 = vadd.f32 %v2054, %v2380
        %v2386 = vadd.f32 %v745, %v2383
        %v2387 = vadd.f32 %v746, %v2384
        %v2388 = vadd.f32 %v747, %v2385
        %v2389 = vld [vmem:[%s10] sm:$0x1]
        %v2391 = vlaneseq
        %v2392 = vshrl.u32 %v2391, 7
        %v2393 = vsub.s32 0, %v2392
        %v2394 = vrot.slane %v2389, %v2393
        %v2396 = vadd.f32 %v2386, %v2394
        %v2397 = vadd.f32 %v2387, %v2394
        %v2398 = vadd.f32 %v2388, %v2394
        %v2399 = vld [vmem:[%s11] sm:$0x1]
        %v2400 = vld [vmem:[%s12] sm:$0x1]
        %v2401 = vsel %vm750, %v2396, 0.0
        %2402 = vadd.xlane.f32.xlu0 %v2401
        %v2403 = vpop.xlane.xlu0 %2402
        %v2404 = vsel %vm750, %v2397, 0.0
        %2405 = vadd.xlane.f32.xlu0 %v2404
        %v2406 = vpop.xlane.xlu0 %2405
        %v2407 = vsel %vm757, %v2398, 0.0
        %2408 = vadd.xlane.f32.xlu0 %v2407
        %v2409 = vpop.xlane.xlu0 %2408
        %v2410 = vmul.f32 %v2403, %v761
        %v2411 = vmul.f32 %v2406, %v761
        %v2412 = vmul.f32 %v2409, %v761
        %v2413 = vsub.f32 %v2396, %v2410
        %v2414 = vsub.f32 %v2397, %v2411
        %v2415 = vsub.f32 %v2398, %v2412
        %v2416 = vmul.f32 %v2413, %v2413
        %v2417 = vmul.f32 %v2414, %v2414
        %v2418 = vmul.f32 %v2415, %v2415
        %v2419 = vsel %vm750, %v2416, 0.0
        %2420 = vadd.xlane.f32.xlu0 %v2419
        %v2421 = vpop.xlane.xlu0 %2420
        %v2422 = vsel %vm750, %v2417, 0.0
        %2423 = vadd.xlane.f32.xlu0 %v2422
        %v2424 = vpop.xlane.xlu0 %2423
        %v2425 = vsel %vm757, %v2418, 0.0
        %2426 = vadd.xlane.f32.xlu0 %v2425
        %v2427 = vpop.xlane.xlu0 %2426
        %v2428 = vmul.f32 %v2421, %v761
        %v2429 = vmul.f32 %v2424, %v761
        %v2430 = vmul.f32 %v2427, %v761
        %v2431 = vadd.f32 %v2428, 1e-05
        %v2432 = vadd.f32 %v2429, 1e-05
        %v2433 = vadd.f32 %v2430, 1e-05
        %v2434 = vrsqrt.pop %v2431
        %v2435 = vrsqrt.pop %v2432
        %v2436 = vrsqrt.pop %v2433
        %v2437 = vmul.f32 %v2413, %v2434
        %v2438 = vmul.f32 %v2414, %v2435
        %v2439 = vmul.f32 %v2415, %v2436
        %v2441 = vlaneseq
        %v2442 = vshrl.u32 %v2441, 7
        %v2443 = vsub.s32 0, %v2442
        %v2444 = vrot.slane %v2399, %v2443
        %v2446 = vmul.f32 %v2437, %v2444
        %v2447 = vmul.f32 %v2438, %v2444
        %v2448 = vmul.f32 %v2439, %v2444
        %v2450 = vlaneseq
        %v2451 = vshrl.u32 %v2450, 7
        %v2452 = vsub.s32 0, %v2451
        %v2453 = vrot.slane %v2400, %v2452
        %v2455 = vadd.f32 %v2446, %v2453
        %v2456 = vadd.f32 %v2447, %v2453
        %v2457 = vadd.f32 %v2448, %v2453
        %v2458 = vld [vmem:[%s13] sm:$0xff]
        %v2459 = vld [vmem:[%s13 + $0x8] sm:$0xff]
        %v2460 = vld [vmem:[%s13 + $0x10] sm:$0xff]
        %v2461 = vld [vmem:[%s13 + $0x18] sm:$0xff]
        %v2462 = vld [vmem:[%s14] sm:$0x1]
        %v2464 = vlaneseq
        %v2465 = vshrl.u32 %v2464, 7
        %v2466 = vsub.s32 0, %v2465
        %v2467 = vrot.slane %v2462, %v2466
        %v2470 = vsel %vm750, %v2455, 0
        %v2473 = vsel %vm750, %v2456, 0
        %v2476 = vsel %vm750, %v2457, 0
        %2478 = vmatprep.subr.mxu0 0.0
        %2479 = vmatpush1.msra.mxu0 0.0
        %2480 = vmatprep.subr.mxu0 0.0
        %2481 = vmatpush1.msra.mxu0 0.0
        %2482 = vmatprep.subr.mxu0 0.0
        %2483 = vmatpush1.msra.mxu0 0.0
        %2484 = vmatprep.subr.mxu0 0.0
        %2485 = vmatpush1.msra.mxu0 0.0
        %2486 = vmatprep.subr.mxu0 0.0
        %2487 = vmatpush1.msra.mxu0 0.0
        %2488 = vmatprep.subr.mxu0 0.0
        %2489 = vmatpush1.msra.mxu0 0.0
        %2490 = vmatprep.subr.mxu0 0.0
        %2491 = vmatpush1.msra.mxu0 0.0
        %2492 = vmatprep.subr.mxu0 0.0
        %2493 = vmatpush1.msra.mxu0 0.0
        %2494 = vmatprep.subr.mxu0 0.0
        %2495 = vmatpush1.msra.mxu0 0.0
        %2496 = vmatprep.subr.mxu0 0.0
        %2497 = vmatpush1.msra.mxu0 0.0
        %2498 = vmatprep.subr.mxu0 0.0
        %2499 = vmatpush1.msra.mxu0 0.0
        %2500 = vmatprep.subr.mxu0 0.0
        %2501 = vmatpush1.msra.mxu0 0.0
        %2502 = vmatprep.subr.mxu0 0.0
        %2503 = vmatpush1.msra.mxu0 %v2461
        %2504 = vmatprep.subr.mxu0 0.0
        %2505 = vmatpush1.msra.mxu0 %v2460
        %2506 = vmatprep.subr.mxu0 0.0
        %2507 = vmatpush1.msra.mxu0 %v2459
        %2508 = vmatprep.subr.mxu0 0.0
        %2509 = vmatpush1.msra.mxu0 %v2458
        %2510 = vmatprep.subr.mxu0 0.0
        %2511 = vmatpush2.msra.mxu0 0.0
        %2512 = vmatprep.subr.mxu0 0.0
        %2513 = vmatpush2.msra.mxu0 0.0
        %2514 = vmatprep.subr.mxu0 0.0
        %2515 = vmatpush2.msra.mxu0 0.0
        %2516 = vmatprep.subr.mxu0 0.0
        %2517 = vmatpush2.msra.mxu0 0.0
        %2518 = vmatprep.subr.mxu0 0.0
        %2519 = vmatpush2.msra.mxu0 0.0
        %2520 = vmatprep.subr.mxu0 0.0
        %2521 = vmatpush2.msra.mxu0 0.0
        %2522 = vmatprep.subr.mxu0 0.0
        %2523 = vmatpush2.msra.mxu0 0.0
        %2524 = vmatprep.subr.mxu0 0.0
        %2525 = vmatpush2.msra.mxu0 0.0
        %2526 = vmatprep.subr.mxu0 0.0
        %2527 = vmatpush2.msra.mxu0 0.0
        %2528 = vmatprep.subr.mxu0 0.0
        %2529 = vmatpush2.msra.mxu0 0.0
        %2530 = vmatprep.subr.mxu0 0.0
        %2531 = vmatpush2.msra.mxu0 0.0
        %2532 = vmatprep.subr.mxu0 0.0
        %2533 = vmatpush2.msra.mxu0 0.0
        %2534 = vmatprep.subr.mxu0 0.0
        %2535 = vmatpush2.msra.mxu0 0.0
        %2536 = vmatprep.subr.mxu0 0.0
        %2537 = vmatpush2.msra.mxu0 0.0
        %2538 = vmatprep.subr.mxu0 0.0
        %2539 = vmatpush2.msra.mxu0 0.0
        %2540 = vmatprep.subr.mxu0 0.0
        %2541 = vmatpush2.msra.mxu0 0.0
        %2542 = vmatprep.mubr.f32.mxu0 0.0
        %2543 = vmatmul.mubr.f32.gmra.mxu0 %v2470
        %v2544 = vpop.f32.mrf.mxu0
        %v2545 = vadd.f32 %v2467, %v2544
        %v2546 = vpop.f32.mrf.mxu0
        %2547 = vmatprep.mubr.f32.mxu0 0.0
        %2548 = vmatmul.mubr.f32.gmra.mxu0 %v2473
        %v2549 = vpop.f32.mrf.mxu0
        %v2550 = vadd.f32 %v2467, %v2549
        %v2551 = vpop.f32.mrf.mxu0
        %2552 = vmatprep.mubr.f32.mxu0 0.0
        %2553 = vmatmul.mubr.f32.gmra.mxu0 %v2476
        %v2554 = vpop.f32.mrf.mxu0
        %v2555 = vadd.f32 %v2467, %v2554
        %v2556 = vpop.f32.mrf.mxu0
        %2557 = vdwg.mxu0
        %v2558 = vmul.f32 %v2545, 0.5
        %v2559 = vmul.f32 %v2550, 0.5
        %v2560 = vmul.f32 %v2555, 0.5
        %v2561 = vmul.f32 %v2545, 0.70710677
        %v2562 = vmul.f32 %v2550, 0.70710677
        %v2563 = vmul.f32 %v2555, 0.70710677
        %v2564 = vand.u32 2147483647, %v2561
        %v2565 = vand.u32 2147483647, %v2562
        %v2566 = vand.u32 2147483647, %v2563
        %v2567 = vmul.f32 %v2564, 0.3275911
        %v2568 = vmul.f32 %v2565, 0.3275911
        %v2569 = vmul.f32 %v2566, 0.3275911
        %v2570 = vadd.f32 %v2567, 1.0
        %v2571 = vadd.f32 %v2568, 1.0
        %v2572 = vadd.f32 %v2569, 1.0
        %v2573 = vrcp.pop %v2570
        %v2574 = vmul.f32 1.0, %v2573
        %v2575 = vrcp.pop %v2571
        %v2576 = vmul.f32 1.0, %v2575
        %v2577 = vrcp.pop %v2572
        %v2578 = vmul.f32 1.0, %v2577
        %v2579 = vmul.f32 %v2574, 1.0614054
        %v2580 = vmul.f32 %v2576, 1.0614054
        %v2581 = vmul.f32 %v2578, 1.0614054
        %v2582 = vadd.f32 %v2579, -1.4531521
        %v2583 = vadd.f32 %v2580, -1.4531521
        %v2584 = vadd.f32 %v2581, -1.4531521
        %v2585 = vmul.f32 %v2582, %v2574
        %v2586 = vmul.f32 %v2583, %v2576
        %v2587 = vmul.f32 %v2584, %v2578
        %v2588 = vadd.f32 %v2585, 1.4214138
        %v2589 = vadd.f32 %v2586, 1.4214138
        %v2590 = vadd.f32 %v2587, 1.4214138
        %v2591 = vmul.f32 %v2588, %v2574
        %v2592 = vmul.f32 %v2589, %v2576
        %v2593 = vmul.f32 %v2590, %v2578
        %v2594 = vadd.f32 %v2591, -0.28449672
        %v2595 = vadd.f32 %v2592, -0.28449672
        %v2596 = vadd.f32 %v2593, -0.28449672
        %v2597 = vmul.f32 %v2594, %v2574
        %v2598 = vmul.f32 %v2595, %v2576
        %v2599 = vmul.f32 %v2596, %v2578
        %v2600 = vadd.f32 %v2597, 0.2548296
        %v2601 = vadd.f32 %v2598, 0.2548296
        %v2602 = vadd.f32 %v2599, 0.2548296
        %v2603 = vmul.f32 %v2600, %v2574
        %v2604 = vmul.f32 %v2601, %v2576
        %v2605 = vmul.f32 %v2602, %v2578
        %v2606 = vsub.f32 0.0, %v2564
        %v2607 = vsub.f32 0.0, %v2565
        %v2608 = vsub.f32 0.0, %v2566
        %v2609 = vmul.f32 %v2606, %v2564
        %v2610 = vmul.f32 %v2607, %v2565
        %v2611 = vmul.f32 %v2608, %v2566
        %v2612 = vmul.f32 %v2609, 1.442695
        %v2613 = vpow.pop %v2612
        %v2614 = vmul.f32 %v2610, 1.442695
        %v2615 = vpow.pop %v2614
        %v2616 = vmul.f32 %v2611, 1.442695
        %v2617 = vpow.pop %v2616
        %v2618 = vmul.f32 %v2603, %v2613
        %v2619 = vmul.f32 %v2604, %v2615
        %v2620 = vmul.f32 %v2605, %v2617
        %v2621 = vsub.f32 1.0, %v2618
        %v2622 = vsub.f32 1.0, %v2619
        %v2623 = vsub.f32 1.0, %v2620
        %vm2624 = vcmp.lt.f32.partialorder %v2561, 0.0
        %vm2625 = vcmp.lt.f32.partialorder %v2562, 0.0
        %vm2626 = vcmp.lt.f32.partialorder %v2563, 0.0
        %v2627 = vsub.f32 0.0, %v2621
        %v2628 = vsub.f32 0.0, %v2622
        %v2629 = vsub.f32 0.0, %v2623
        %v2630 = vsel %vm2624, %v2627, %v2621
        %v2631 = vsel %vm2625, %v2628, %v2622
        %v2632 = vsel %vm2626, %v2629, %v2623
        %v2633 = vadd.f32 %v2630, 1.0
        %v2634 = vadd.f32 %v2631, 1.0
        %v2635 = vadd.f32 %v2632, 1.0
        %v2636 = vmul.f32 %v2558, %v2633
        %v2637 = vmul.f32 %v2559, %v2634
        %v2638 = vmul.f32 %v2560, %v2635
        %v2639 = vld [vmem:[%s15] sm:$0xff]
        %v2640 = vld [vmem:[%s15 + $0x8] sm:$0xff]
        %v2641 = vld [vmem:[%s15 + $0x10] sm:$0xff]
        %v2642 = vld [vmem:[%s15 + $0x18] sm:$0xff]
        %v2643 = vld [vmem:[%s15 + $0x20] sm:$0xff]
        %v2644 = vld [vmem:[%s15 + $0x28] sm:$0xff]
        %v2645 = vld [vmem:[%s15 + $0x30] sm:$0xff]
        %v2646 = vld [vmem:[%s15 + $0x38] sm:$0xff]
        %v2647 = vld [vmem:[%s15 + $0x40] sm:$0xff]
        %v2648 = vld [vmem:[%s15 + $0x48] sm:$0xff]
        %v2649 = vld [vmem:[%s15 + $0x50] sm:$0xff]
        %v2650 = vld [vmem:[%s15 + $0x58] sm:$0xff]
        %v2651 = vld [vmem:[%s15 + $0x60] sm:$0xff]
        %v2652 = vld [vmem:[%s15 + $0x68] sm:$0xff]
        %v2653 = vld [vmem:[%s15 + $0x70] sm:$0xff]
        %v2654 = vld [vmem:[%s15 + $0x78] sm:$0xff]
        %v2655 = vld [vmem:[#allocation5] sm:$0x1]
        %v2657 = vlaneseq
        %v2658 = vshrl.u32 %v2657, 7
        %v2659 = vsub.s32 0, %v2658
        %v2660 = vrot.slane %v2655, %v2659
        %2662 = vmatprep.subr.mxu0 0.0
        %2663 = vmatpush1.msra.mxu0 %v2654
        %2664 = vmatprep.subr.mxu0 0.0
        %2665 = vmatpush1.msra.mxu0 %v2653
        %2666 = vmatprep.subr.mxu0 0.0
        %2667 = vmatpush1.msra.mxu0 %v2652
        %2668 = vmatprep.subr.mxu0 0.0
        %2669 = vmatpush1.msra.mxu0 %v2651
        %2670 = vmatprep.subr.mxu0 0.0
        %2671 = vmatpush1.msra.mxu0 %v2650
        %2672 = vmatprep.subr.mxu0 0.0
        %2673 = vmatpush1.msra.mxu0 %v2649
        %2674 = vmatprep.subr.mxu0 0.0
        %2675 = vmatpush1.msra.mxu0 %v2648
        %2676 = vmatprep.subr.mxu0 0.0
        %2677 = vmatpush1.msra.mxu0 %v2647
        %2678 = vmatprep.subr.mxu0 0.0
        %2679 = vmatpush1.msra.mxu0 %v2646
        %2680 = vmatprep.subr.mxu0 0.0
        %2681 = vmatpush1.msra.mxu0 %v2645
        %2682 = vmatprep.subr.mxu0 0.0
        %2683 = vmatpush1.msra.mxu0 %v2644
        %2684 = vmatprep.subr.mxu0 0.0
        %2685 = vmatpush1.msra.mxu0 %v2643
        %2686 = vmatprep.subr.mxu0 0.0
        %2687 = vmatpush1.msra.mxu0 %v2642
        %2688 = vmatprep.subr.mxu0 0.0
        %2689 = vmatpush1.msra.mxu0 %v2641
        %2690 = vmatprep.subr.mxu0 0.0
        %2691 = vmatpush1.msra.mxu0 %v2640
        %2692 = vmatprep.subr.mxu0 0.0
        %2693 = vmatpush1.msra.mxu0 %v2639
        %2694 = vmatprep.subr.mxu0 0.0
        %2695 = vmatpush2.msra.mxu0 0.0
        %2696 = vmatprep.subr.mxu0 0.0
        %2697 = vmatpush2.msra.mxu0 0.0
        %2698 = vmatprep.subr.mxu0 0.0
        %2699 = vmatpush2.msra.mxu0 0.0
        %2700 = vmatprep.subr.mxu0 0.0
        %2701 = vmatpush2.msra.mxu0 0.0
        %2702 = vmatprep.subr.mxu0 0.0
        %2703 = vmatpush2.msra.mxu0 0.0
        %2704 = vmatprep.subr.mxu0 0.0
        %2705 = vmatpush2.msra.mxu0 0.0
        %2706 = vmatprep.subr.mxu0 0.0
        %2707 = vmatpush2.msra.mxu0 0.0
        %2708 = vmatprep.subr.mxu0 0.0
        %2709 = vmatpush2.msra.mxu0 0.0
        %2710 = vmatprep.subr.mxu0 0.0
        %2711 = vmatpush2.msra.mxu0 0.0
        %2712 = vmatprep.subr.mxu0 0.0
        %2713 = vmatpush2.msra.mxu0 0.0
        %2714 = vmatprep.subr.mxu0 0.0
        %2715 = vmatpush2.msra.mxu0 0.0
        %2716 = vmatprep.subr.mxu0 0.0
        %2717 = vmatpush2.msra.mxu0 0.0
        %2718 = vmatprep.subr.mxu0 0.0
        %2719 = vmatpush2.msra.mxu0 0.0
        %2720 = vmatprep.subr.mxu0 0.0
        %2721 = vmatpush2.msra.mxu0 0.0
        %2722 = vmatprep.subr.mxu0 0.0
        %2723 = vmatpush2.msra.mxu0 0.0
        %2724 = vmatprep.subr.mxu0 0.0
        %2725 = vmatpush2.msra.mxu0 0.0
        %2726 = vmatprep.mubr.f32.mxu0 0.0
        %2727 = vmatmul.mubr.f32.gmra.mxu0 %v2636
        %v2728 = vpop.f32.mrf.mxu0
        %v2729 = vadd.f32 %v2660, %v2728
        %v2730 = vpop.f32.mrf.mxu0
        %2731 = vmatprep.mubr.f32.mxu0 0.0
        %2732 = vmatmul.mubr.f32.gmra.mxu0 %v2637
        %v2733 = vpop.f32.mrf.mxu0
        %v2734 = vadd.f32 %v2660, %v2733
        %v2735 = vpop.f32.mrf.mxu0
        %2736 = vmatprep.mubr.f32.mxu0 0.0
        %2737 = vmatmul.mubr.f32.gmra.mxu0 %v2638
        %v2738 = vpop.f32.mrf.mxu0
        %v2739 = vadd.f32 %v2660, %v2738
        %v2740 = vpop.f32.mrf.mxu0
        %2741 = vdwg.mxu0
        %v2742 = vadd.f32 %v2396, %v2729
        %v2743 = vadd.f32 %v2397, %v2734
        %v2744 = vadd.f32 %v2398, %v2739
        %s2745 = scalar_lea.vmem %s4, 1
        %v2746 = vld [vmem:[%s2745] sm:$0x1]
        %s2747 = scalar_lea.vmem %s5, 1
        %v2748 = vld [vmem:[%s2747] sm:$0x1]
        %v2749 = vsel %vm750, %v2742, 0.0
        %2750 = vadd.xlane.f32.xlu0 %v2749
        %v2751 = vpop.xlane.xlu0 %2750
        %v2752 = vsel %vm750, %v2743, 0.0
        %2753 = vadd.xlane.f32.xlu0 %v2752
        %v2754 = vpop.xlane.xlu0 %2753
        %v2755 = vsel %vm757, %v2744, 0.0
        %2756 = vadd.xlane.f32.xlu0 %v2755
        %v2757 = vpop.xlane.xlu0 %2756
        %v2758 = vmul.f32 %v2751, %v761
        %v2759 = vmul.f32 %v2754, %v761
        %v2760 = vmul.f32 %v2757, %v761
        %v2761 = vsub.f32 %v2742, %v2758
        %v2762 = vsub.f32 %v2743, %v2759
        %v2763 = vsub.f32 %v2744, %v2760
        %v2764 = vmul.f32 %v2761, %v2761
        %v2765 = vmul.f32 %v2762, %v2762
        %v2766 = vmul.f32 %v2763, %v2763
        %v2767 = vsel %vm750, %v2764, 0.0
        %2768 = vadd.xlane.f32.xlu0 %v2767
        %v2769 = vpop.xlane.xlu0 %2768
        %v2770 = vsel %vm750, %v2765, 0.0
        %2771 = vadd.xlane.f32.xlu0 %v2770
        %v2772 = vpop.xlane.xlu0 %2771
        %v2773 = vsel %vm757, %v2766, 0.0
        %2774 = vadd.xlane.f32.xlu0 %v2773
        %v2775 = vpop.xlane.xlu0 %2774
        %v2776 = vmul.f32 %v2769, %v761
        %v2777 = vmul.f32 %v2772, %v761
        %v2778 = vmul.f32 %v2775, %v761
        %v2779 = vadd.f32 %v2776, 1e-05
        %v2780 = vadd.f32 %v2777, 1e-05
        %v2781 = vadd.f32 %v2778, 1e-05
        %v2782 = vrsqrt.pop %v2779
        %v2783 = vrsqrt.pop %v2780
        %v2784 = vrsqrt.pop %v2781
        %v2785 = vmul.f32 %v2761, %v2782
        %v2786 = vmul.f32 %v2762, %v2783
        %v2787 = vmul.f32 %v2763, %v2784
        %v2789 = vlaneseq
        %v2790 = vshrl.u32 %v2789, 7
        %v2791 = vsub.s32 0, %v2790
        %v2792 = vrot.slane %v2746, %v2791
        %v2794 = vmul.f32 %v2785, %v2792
        %v2795 = vmul.f32 %v2786, %v2792
        %v2796 = vmul.f32 %v2787, %v2792
        %v2798 = vlaneseq
        %v2799 = vshrl.u32 %v2798, 7
        %v2800 = vsub.s32 0, %v2799
        %v2801 = vrot.slane %v2748, %v2800
        %v2803 = vadd.f32 %v2794, %v2801
        %v2804 = vadd.f32 %v2795, %v2801
        %v2805 = vadd.f32 %v2796, %v2801
        %s2806 = scalar_lea.vmem %s6, 32
        %v2807 = vld [vmem:[%s2806] sm:$0xff]
        %v2808 = vld [vmem:[%s2806 + $0x8] sm:$0xff]
        %v2809 = vld [vmem:[%s2806 + $0x10] sm:$0xff]
        %v2810 = vld [vmem:[%s2806 + $0x18] sm:$0xff]
        %v2812 = vsel %vm750, %v2803, 0
        %v2815 = vsel %vm750, %v2804, 0
        %v2818 = vsel %vm750, %v2805, 0
        %2820 = vmatprep.subr.mxu0 0.0
        %2821 = vmatpush1.msra.mxu0 0.0
        %2822 = vmatprep.subr.mxu0 0.0
        %2823 = vmatpush1.msra.mxu0 0.0
        %2824 = vmatprep.subr.mxu0 0.0
        %2825 = vmatpush1.msra.mxu0 0.0
        %2826 = vmatprep.subr.mxu0 0.0
        %2827 = vmatpush1.msra.mxu0 0.0
        %2828 = vmatprep.subr.mxu0 0.0
        %2829 = vmatpush1.msra.mxu0 0.0
        %2830 = vmatprep.subr.mxu0 0.0
        %2831 = vmatpush1.msra.mxu0 0.0
        %2832 = vmatprep.subr.mxu0 0.0
        %2833 = vmatpush1.msra.mxu0 0.0
        %2834 = vmatprep.subr.mxu0 0.0
        %2835 = vmatpush1.msra.mxu0 0.0
        %2836 = vmatprep.subr.mxu0 0.0
        %2837 = vmatpush1.msra.mxu0 0.0
        %2838 = vmatprep.subr.mxu0 0.0
        %2839 = vmatpush1.msra.mxu0 0.0
        %2840 = vmatprep.subr.mxu0 0.0
        %2841 = vmatpush1.msra.mxu0 0.0
        %2842 = vmatprep.subr.mxu0 0.0
        %2843 = vmatpush1.msra.mxu0 0.0
        %2844 = vmatprep.subr.mxu0 0.0
        %2845 = vmatpush1.msra.mxu0 %v2810
        %2846 = vmatprep.subr.mxu0 0.0
        %2847 = vmatpush1.msra.mxu0 %v2809
        %2848 = vmatprep.subr.mxu0 0.0
        %2849 = vmatpush1.msra.mxu0 %v2808
        %2850 = vmatprep.subr.mxu0 0.0
        %2851 = vmatpush1.msra.mxu0 %v2807
        %2852 = vmatprep.subr.mxu0 0.0
        %2853 = vmatpush2.msra.mxu0 0.0
        %2854 = vmatprep.subr.mxu0 0.0
        %2855 = vmatpush2.msra.mxu0 0.0
        %2856 = vmatprep.subr.mxu0 0.0
        %2857 = vmatpush2.msra.mxu0 0.0
        %2858 = vmatprep.subr.mxu0 0.0
        %2859 = vmatpush2.msra.mxu0 0.0
        %2860 = vmatprep.subr.mxu0 0.0
        %2861 = vmatpush2.msra.mxu0 0.0
        %2862 = vmatprep.subr.mxu0 0.0
        %2863 = vmatpush2.msra.mxu0 0.0
        %2864 = vmatprep.subr.mxu0 0.0
        %2865 = vmatpush2.msra.mxu0 0.0
        %2866 = vmatprep.subr.mxu0 0.0
        %2867 = vmatpush2.msra.mxu0 0.0
        %2868 = vmatprep.subr.mxu0 0.0
        %2869 = vmatpush2.msra.mxu0 0.0
        %2870 = vmatprep.subr.mxu0 0.0
        %2871 = vmatpush2.msra.mxu0 0.0
        %2872 = vmatprep.subr.mxu0 0.0
        %2873 = vmatpush2.msra.mxu0 0.0
        %2874 = vmatprep.subr.mxu0 0.0
        %2875 = vmatpush2.msra.mxu0 0.0
        %2876 = vmatprep.subr.mxu0 0.0
        %2877 = vmatpush2.msra.mxu0 0.0
        %2878 = vmatprep.subr.mxu0 0.0
        %2879 = vmatpush2.msra.mxu0 0.0
        %2880 = vmatprep.subr.mxu0 0.0
        %2881 = vmatpush2.msra.mxu0 0.0
        %2882 = vmatprep.subr.mxu0 0.0
        %2883 = vmatpush2.msra.mxu0 0.0
        %2884 = vmatprep.mubr.f32.mxu0 0.0
        %2885 = vmatmul.mubr.f32.gmra.mxu0 %v2812
        %v2886 = vpop.f32.mrf.mxu0
        %v2887 = vadd.f32 0.0, %v2886
        %v2888 = vpop.f32.mrf.mxu0
        %2889 = vmatprep.mubr.f32.mxu0 0.0
        %2890 = vmatmul.mubr.f32.gmra.mxu0 %v2815
        %v2891 = vpop.f32.mrf.mxu0
        %v2892 = vadd.f32 0.0, %v2891
        %v2893 = vpop.f32.mrf.mxu0
        %2894 = vmatprep.mubr.f32.mxu0 0.0
        %2895 = vmatmul.mubr.f32.gmra.mxu0 %v2818
        %v2896 = vpop.f32.mrf.mxu0
        %v2897 = vadd.f32 0.0, %v2896
        %v2898 = vpop.f32.mrf.mxu0
        %2899 = vdwg.mxu0
        %s2900 = scalar_lea.vmem %s7, 32
        %v2901 = vld [vmem:[%s2900] sm:$0xff]
        %v2902 = vld [vmem:[%s2900 + $0x8] sm:$0xff]
        %v2903 = vld [vmem:[%s2900 + $0x10] sm:$0xff]
        %v2904 = vld [vmem:[%s2900 + $0x18] sm:$0xff]
        %2905 = vmatprep.subr.mxu0 0.0
        %2906 = vmatpush1.msra.mxu0 0.0
        %2907 = vmatprep.subr.mxu0 0.0
        %2908 = vmatpush1.msra.mxu0 0.0
        %2909 = vmatprep.subr.mxu0 0.0
        %2910 = vmatpush1.msra.mxu0 0.0
        %2911 = vmatprep.subr.mxu0 0.0
        %2912 = vmatpush1.msra.mxu0 0.0
        %2913 = vmatprep.subr.mxu0 0.0
        %2914 = vmatpush1.msra.mxu0 0.0
        %2915 = vmatprep.subr.mxu0 0.0
        %2916 = vmatpush1.msra.mxu0 0.0
        %2917 = vmatprep.subr.mxu0 0.0
        %2918 = vmatpush1.msra.mxu0 0.0
        %2919 = vmatprep.subr.mxu0 0.0
        %2920 = vmatpush1.msra.mxu0 0.0
        %2921 = vmatprep.subr.mxu0 0.0
        %2922 = vmatpush1.msra.mxu0 0.0
        %2923 = vmatprep.subr.mxu0 0.0
        %2924 = vmatpush1.msra.mxu0 0.0
        %2925 = vmatprep.subr.mxu0 0.0
        %2926 = vmatpush1.msra.mxu0 0.0
        %2927 = vmatprep.subr.mxu0 0.0
        %2928 = vmatpush1.msra.mxu0 0.0
        %2929 = vmatprep.subr.mxu0 0.0
        %2930 = vmatpush1.msra.mxu0 %v2904
        %2931 = vmatprep.subr.mxu0 0.0
        %2932 = vmatpush1.msra.mxu0 %v2903
        %2933 = vmatprep.subr.mxu0 0.0
        %2934 = vmatpush1.msra.mxu0 %v2902
        %2935 = vmatprep.subr.mxu0 0.0
        %2936 = vmatpush1.msra.mxu0 %v2901
        %2937 = vmatprep.subr.mxu0 0.0
        %2938 = vmatpush2.msra.mxu0 0.0
        %2939 = vmatprep.subr.mxu0 0.0
        %2940 = vmatpush2.msra.mxu0 0.0
        %2941 = vmatprep.subr.mxu0 0.0
        %2942 = vmatpush2.msra.mxu0 0.0
        %2943 = vmatprep.subr.mxu0 0.0
        %2944 = vmatpush2.msra.mxu0 0.0
        %2945 = vmatprep.subr.mxu0 0.0
        %2946 = vmatpush2.msra.mxu0 0.0
        %2947 = vmatprep.subr.mxu0 0.0
        %2948 = vmatpush2.msra.mxu0 0.0
        %2949 = vmatprep.subr.mxu0 0.0
        %2950 = vmatpush2.msra.mxu0 0.0
        %2951 = vmatprep.subr.mxu0 0.0
        %2952 = vmatpush2.msra.mxu0 0.0
        %2953 = vmatprep.subr.mxu0 0.0
        %2954 = vmatpush2.msra.mxu0 0.0
        %2955 = vmatprep.subr.mxu0 0.0
        %2956 = vmatpush2.msra.mxu0 0.0
        %2957 = vmatprep.subr.mxu0 0.0
        %2958 = vmatpush2.msra.mxu0 0.0
        %2959 = vmatprep.subr.mxu0 0.0
        %2960 = vmatpush2.msra.mxu0 0.0
        %2961 = vmatprep.subr.mxu0 0.0
        %2962 = vmatpush2.msra.mxu0 0.0
        %2963 = vmatprep.subr.mxu0 0.0
        %2964 = vmatpush2.msra.mxu0 0.0
        %2965 = vmatprep.subr.mxu0 0.0
        %2966 = vmatpush2.msra.mxu0 0.0
        %2967 = vmatprep.subr.mxu0 0.0
        %2968 = vmatpush2.msra.mxu0 0.0
        %2969 = vmatprep.mubr.f32.mxu0 0.0
        %2970 = vmatmul.mubr.f32.gmra.mxu0 %v2812
        %v2971 = vpop.f32.mrf.mxu0
        %v2972 = vadd.f32 0.0, %v2971
        %v2973 = vpop.f32.mrf.mxu0
        %2974 = vmatprep.mubr.f32.mxu0 0.0
        %2975 = vmatmul.mubr.f32.gmra.mxu0 %v2815
        %v2976 = vpop.f32.mrf.mxu0
        %v2977 = vadd.f32 0.0, %v2976
        %v2978 = vpop.f32.mrf.mxu0
        %2979 = vmatprep.mubr.f32.mxu0 0.0
        %2980 = vmatmul.mubr.f32.gmra.mxu0 %v2818
        %v2981 = vpop.f32.mrf.mxu0
        %v2982 = vadd.f32 0.0, %v2981
        %v2983 = vpop.f32.mrf.mxu0
        %2984 = vdwg.mxu0
        %s2985 = scalar_lea.vmem %s8, 32
        %v2986 = vld [vmem:[%s2985] sm:$0xff]
        %v2987 = vld [vmem:[%s2985 + $0x8] sm:$0xff]
        %v2988 = vld [vmem:[%s2985 + $0x10] sm:$0xff]
        %v2989 = vld [vmem:[%s2985 + $0x18] sm:$0xff]
        %2990 = vmatprep.subr.mxu0 0.0
        %2991 = vmatpush1.msra.mxu0 0.0
        %2992 = vmatprep.subr.mxu0 0.0
        %2993 = vmatpush1.msra.mxu0 0.0
        %2994 = vmatprep.subr.mxu0 0.0
        %2995 = vmatpush1.msra.mxu0 0.0
        %2996 = vmatprep.subr.mxu0 0.0
        %2997 = vmatpush1.msra.mxu0 0.0
        %2998 = vmatprep.subr.mxu0 0.0
        %2999 = vmatpush1.msra.mxu0 0.0
        %3000 = vmatprep.subr.mxu0 0.0
        %3001 = vmatpush1.msra.mxu0 0.0
        %3002 = vmatprep.subr.mxu0 0.0
        %3003 = vmatpush1.msra.mxu0 0.0
        %3004 = vmatprep.subr.mxu0 0.0
        %3005 = vmatpush1.msra.mxu0 0.0
        %3006 = vmatprep.subr.mxu0 0.0
        %3007 = vmatpush1.msra.mxu0 0.0
        %3008 = vmatprep.subr.mxu0 0.0
        %3009 = vmatpush1.msra.mxu0 0.0
        %3010 = vmatprep.subr.mxu0 0.0
        %3011 = vmatpush1.msra.mxu0 0.0
        %3012 = vmatprep.subr.mxu0 0.0
        %3013 = vmatpush1.msra.mxu0 0.0
        %3014 = vmatprep.subr.mxu0 0.0
        %3015 = vmatpush1.msra.mxu0 %v2989
        %3016 = vmatprep.subr.mxu0 0.0
        %3017 = vmatpush1.msra.mxu0 %v2988
        %3018 = vmatprep.subr.mxu0 0.0
        %3019 = vmatpush1.msra.mxu0 %v2987
        %3020 = vmatprep.subr.mxu0 0.0
        %3021 = vmatpush1.msra.mxu0 %v2986
        %3022 = vmatprep.subr.mxu0 0.0
        %3023 = vmatpush2.msra.mxu0 0.0
        %3024 = vmatprep.subr.mxu0 0.0
        %3025 = vmatpush2.msra.mxu0 0.0
        %3026 = vmatprep.subr.mxu0 0.0
        %3027 = vmatpush2.msra.mxu0 0.0
        %3028 = vmatprep.subr.mxu0 0.0
        %3029 = vmatpush2.msra.mxu0 0.0
        %3030 = vmatprep.subr.mxu0 0.0
        %3031 = vmatpush2.msra.mxu0 0.0
        %3032 = vmatprep.subr.mxu0 0.0
        %3033 = vmatpush2.msra.mxu0 0.0
        %3034 = vmatprep.subr.mxu0 0.0
        %3035 = vmatpush2.msra.mxu0 0.0
        %3036 = vmatprep.subr.mxu0 0.0
        %3037 = vmatpush2.msra.mxu0 0.0
        %3038 = vmatprep.subr.mxu0 0.0
        %3039 = vmatpush2.msra.mxu0 0.0
        %3040 = vmatprep.subr.mxu0 0.0
        %3041 = vmatpush2.msra.mxu0 0.0
        %3042 = vmatprep.subr.mxu0 0.0
        %3043 = vmatpush2.msra.mxu0 0.0
        %3044 = vmatprep.subr.mxu0 0.0
        %3045 = vmatpush2.msra.mxu0 0.0
        %3046 = vmatprep.subr.mxu0 0.0
        %3047 = vmatpush2.msra.mxu0 0.0
        %3048 = vmatprep.subr.mxu0 0.0
        %3049 = vmatpush2.msra.mxu0 0.0
        %3050 = vmatprep.subr.mxu0 0.0
        %3051 = vmatpush2.msra.mxu0 0.0
        %3052 = vmatprep.subr.mxu0 0.0
        %3053 = vmatpush2.msra.mxu0 0.0
        %3054 = vmatprep.mubr.f32.mxu0 0.0
        %3055 = vmatmul.mubr.f32.gmra.mxu0 %v2812
        %v3056 = vpop.f32.mrf.mxu0
        %v3057 = vadd.f32 0.0, %v3056
        %v3058 = vpop.f32.mrf.mxu0
        %3059 = vmatprep.mubr.f32.mxu0 0.0
        %3060 = vmatmul.mubr.f32.gmra.mxu0 %v2815
        %v3061 = vpop.f32.mrf.mxu0
        %v3062 = vadd.f32 0.0, %v3061
        %v3063 = vpop.f32.mrf.mxu0
        %3064 = vmatprep.mubr.f32.mxu0 0.0
        %3065 = vmatmul.mubr.f32.gmra.mxu0 %v2818
        %v3066 = vpop.f32.mrf.mxu0
        %v3067 = vadd.f32 0.0, %v3066
        %v3068 = vpop.f32.mrf.mxu0
        %3069 = vdwg.mxu0
        %s3070 = scalar_lea.vmem %s9, 32
        %v3071 = vld [vmem:[%s3070] sm:$0xff]
        %v3072 = vld [vmem:[%s3070 + $0x8] sm:$0xff]
        %v3073 = vld [vmem:[%s3070 + $0x10] sm:$0xff]
        %v3074 = vld [vmem:[%s3070 + $0x18] sm:$0xff]
        %v3076 = vsel %vm1075, %v2887, 0
        %v3079 = vsel %vm1075, %v2892, 0
        %v3082 = vsel %vm1075, %v2897, 0
        %v3085 = vsel %vm1075, %v2972, 0
        %v3088 = vsel %vm1075, %v2977, 0
        %v3091 = vsel %vm1075, %v2982, 0
        %3093 = vmatprep.subr.mxu0 0.0
        %3094 = vmatpush1.xpose.msra.mxu0 0.0
        %3095 = vmatprep.subr.mxu0 0.0
        %3096 = vmatpush1.xpose.msra.mxu0 0.0
        %3097 = vmatprep.subr.mxu0 0.0
        %3098 = vmatpush1.xpose.msra.mxu0 0.0
        %3099 = vmatprep.subr.mxu0 0.0
        %3100 = vmatpush1.xpose.msra.mxu0 0.0
        %3101 = vmatprep.subr.mxu0 0.0
        %3102 = vmatpush1.xpose.msra.mxu0 0.0
        %3103 = vmatprep.subr.mxu0 0.0
        %3104 = vmatpush1.xpose.msra.mxu0 0.0
        %3105 = vmatprep.subr.mxu0 0.0
        %3106 = vmatpush1.xpose.msra.mxu0 0.0
        %3107 = vmatprep.subr.mxu0 0.0
        %3108 = vmatpush1.xpose.msra.mxu0 0.0
        %3109 = vmatprep.subr.mxu0 0.0
        %3110 = vmatpush1.xpose.msra.mxu0 0.0
        %3111 = vmatprep.subr.mxu0 0.0
        %3112 = vmatpush1.xpose.msra.mxu0 0.0
        %3113 = vmatprep.subr.mxu0 0.0
        %3114 = vmatpush1.xpose.msra.mxu0 0.0
        %3115 = vmatprep.subr.mxu0 0.0
        %3116 = vmatpush1.xpose.msra.mxu0 0.0
        %3117 = vmatprep.subr.mxu0 0.0
        %3118 = vmatpush1.xpose.msra.mxu0 0.0
        %3119 = vmatprep.subr.mxu0 0.0
        %3120 = vmatpush1.xpose.msra.mxu0 %v3091
        %3121 = vmatprep.subr.mxu0 0.0
        %3122 = vmatpush1.xpose.msra.mxu0 %v3088
        %3123 = vmatprep.subr.mxu0 0.0
        %3124 = vmatpush1.xpose.msra.mxu0 %v3085
        %3125 = vmatprep.subr.mxu0 0.0
        %3126 = vmatpush2.xpose.msra.mxu0 0.0
        %3127 = vmatprep.subr.mxu0 0.0
        %3128 = vmatpush2.xpose.msra.mxu0 0.0
        %3129 = vmatprep.subr.mxu0 0.0
        %3130 = vmatpush2.xpose.msra.mxu0 0.0
        %3131 = vmatprep.subr.mxu0 0.0
        %3132 = vmatpush2.xpose.msra.mxu0 0.0
        %3133 = vmatprep.subr.mxu0 0.0
        %3134 = vmatpush2.xpose.msra.mxu0 0.0
        %3135 = vmatprep.subr.mxu0 0.0
        %3136 = vmatpush2.xpose.msra.mxu0 0.0
        %3137 = vmatprep.subr.mxu0 0.0
        %3138 = vmatpush2.xpose.msra.mxu0 0.0
        %3139 = vmatprep.subr.mxu0 0.0
        %3140 = vmatpush2.xpose.msra.mxu0 0.0
        %3141 = vmatprep.subr.mxu0 0.0
        %3142 = vmatpush2.xpose.msra.mxu0 0.0
        %3143 = vmatprep.subr.mxu0 0.0
        %3144 = vmatpush2.xpose.msra.mxu0 0.0
        %3145 = vmatprep.subr.mxu0 0.0
        %3146 = vmatpush2.xpose.msra.mxu0 0.0
        %3147 = vmatprep.subr.mxu0 0.0
        %3148 = vmatpush2.xpose.msra.mxu0 0.0
        %3149 = vmatprep.subr.mxu0 0.0
        %3150 = vmatpush2.xpose.msra.mxu0 0.0
        %3151 = vmatprep.subr.mxu0 0.0
        %3152 = vmatpush2.xpose.msra.mxu0 0.0
        %3153 = vmatprep.subr.mxu0 0.0
        %3154 = vmatpush2.xpose.msra.mxu0 0.0
        %3155 = vmatprep.subr.mxu0 0.0
        %3156 = vmatpush2.xpose.msra.mxu0 0.0
        %3157 = vmatprep.mubr.f32.mxu0 0.0
        %3158 = vmatmul.mubr.f32.gmra.mxu0 %v3076
        %v3159 = vpop.f32.mrf.mxu0
        %v3160 = vadd.f32 0.0, %v3159
        %v3161 = vpop.f32.mrf.mxu0
        %3162 = vmatprep.mubr.f32.mxu0 0.0
        %3163 = vmatmul.mubr.f32.gmra.mxu0 %v3079
        %v3164 = vpop.f32.mrf.mxu0
        %v3165 = vadd.f32 0.0, %v3164
        %v3166 = vpop.f32.mrf.mxu0
        %3167 = vmatprep.mubr.f32.mxu0 0.0
        %3168 = vmatmul.mubr.f32.gmra.mxu0 %v3082
        %v3169 = vpop.f32.mrf.mxu0
        %v3170 = vadd.f32 0.0, %v3169
        %v3171 = vpop.f32.mrf.mxu0
        %3172 = vdwg.mxu0
        %v3173 = vmul.f32 %v3160, 0.17677669
        %v3174 = vmul.f32 %v3165, 0.17677669
        %v3175 = vmul.f32 %v3170, 0.17677669
        %v3176 = vsel %vm1177, %v3173, -inf
        %3177 = vmax.xlane.f32.xlu0 %v3176
        %v3178 = vpop.xlane.xlu0 %3177
        %v3179 = vsel %vm1177, %v3174, -inf
        %3180 = vmax.xlane.f32.xlu0 %v3179
        %v3181 = vpop.xlane.xlu0 %3180
        %v3182 = vsel %vm1184, %v3175, -inf
        %3183 = vmax.xlane.f32.xlu0 %v3182
        %v3184 = vpop.xlane.xlu0 %3183
        %v3185 = vsub.f32 %v3173, %v3178
        %v3186 = vsub.f32 %v3174, %v3181
        %v3187 = vsub.f32 %v3175, %v3184
        %v3188 = vmul.f32 %v3185, 1.442695
        %v3189 = vpow.pop %v3188
        %v3190 = vmul.f32 %v3186, 1.442695
        %v3191 = vpow.pop %v3190
        %v3192 = vmul.f32 %v3187, 1.442695
        %v3193 = vpow.pop %v3192
        %v3194 = vsel %vm1177, %v3189, 0.0
        %3195 = vadd.xlane.f32.xlu0 %v3194
        %v3196 = vpop.xlane.xlu0 %3195
        %v3197 = vsel %vm1177, %v3191, 0.0
        %3198 = vadd.xlane.f32.xlu0 %v3197
        %v3199 = vpop.xlane.xlu0 %3198
        %v3200 = vsel %vm1184, %v3193, 0.0
        %3201 = vadd.xlane.f32.xlu0 %v3200
        %v3202 = vpop.xlane.xlu0 %3201
        %v3203 = vrcp.pop %v3196
        %v3204 = vmul.f32 %v3189, %v3203
        %v3205 = vrcp.pop %v3199
        %v3206 = vmul.f32 %v3191, %v3205
        %v3207 = vrcp.pop %v3202
        %v3208 = vmul.f32 %v3193, %v3207
        %v3210 = vsel %vm1177, %v3204, 0
        %v3213 = vsel %vm1177, %v3206, 0
        %v3216 = vsel %vm1177, %v3208, 0
        %v3219 = vsel %vm1221, %v3067, 0
        %3221 = vmatprep.subr.mxu0 0.0
        %3222 = vmatpush1.msra.mxu0 0.0
        %3223 = vmatprep.subr.mxu0 0.0
        %3224 = vmatpush1.msra.mxu0 0.0
        %3225 = vmatprep.subr.mxu0 0.0
        %3226 = vmatpush1.msra.mxu0 0.0
        %3227 = vmatprep.subr.mxu0 0.0
        %3228 = vmatpush1.msra.mxu0 0.0
        %3229 = vmatprep.subr.mxu0 0.0
        %3230 = vmatpush1.msra.mxu0 0.0
        %3231 = vmatprep.subr.mxu0 0.0
        %3232 = vmatpush1.msra.mxu0 0.0
        %3233 = vmatprep.subr.mxu0 0.0
        %3234 = vmatpush1.msra.mxu0 0.0
        %3235 = vmatprep.subr.mxu0 0.0
        %3236 = vmatpush1.msra.mxu0 0.0
        %3237 = vmatprep.subr.mxu0 0.0
        %3238 = vmatpush1.msra.mxu0 0.0
        %3239 = vmatprep.subr.mxu0 0.0
        %3240 = vmatpush1.msra.mxu0 0.0
        %3241 = vmatprep.subr.mxu0 0.0
        %3242 = vmatpush1.msra.mxu0 0.0
        %3243 = vmatprep.subr.mxu0 0.0
        %3244 = vmatpush1.msra.mxu0 0.0
        %3245 = vmatprep.subr.mxu0 0.0
        %3246 = vmatpush1.msra.mxu0 0.0
        %3247 = vmatprep.subr.mxu0 0.0
        %3248 = vmatpush1.msra.mxu0 %v3219
        %3249 = vmatprep.subr.mxu0 0.0
        %3250 = vmatpush1.msra.mxu0 %v3062
        %3251 = vmatprep.subr.mxu0 0.0
        %3252 = vmatpush1.msra.mxu0 %v3057
        %3253 = vmatprep.subr.mxu0 0.0
        %3254 = vmatpush2.msra.mxu0 0.0
        %3255 = vmatprep.subr.mxu0 0.0
        %3256 = vmatpush2.msra.mxu0 0.0
        %3257 = vmatprep.subr.mxu0 0.0
        %3258 = vmatpush2.msra.mxu0 0.0
        %3259 = vmatprep.subr.mxu0 0.0
        %3260 = vmatpush2.msra.mxu0 0.0
        %3261 = vmatprep.subr.mxu0 0.0
        %3262 = vmatpush2.msra.mxu0 0.0
        %3263 = vmatprep.subr.mxu0 0.0
        %3264 = vmatpush2.msra.mxu0 0.0
        %3265 = vmatprep.subr.mxu0 0.0
        %3266 = vmatpush2.msra.mxu0 0.0
        %3267 = vmatprep.subr.mxu0 0.0
        %3268 = vmatpush2.msra.mxu0 0.0
        %3269 = vmatprep.subr.mxu0 0.0
        %3270 = vmatpush2.msra.mxu0 0.0
        %3271 = vmatprep.subr.mxu0 0.0
        %3272 = vmatpush2.msra.mxu0 0.0
        %3273 = vmatprep.subr.mxu0 0.0
        %3274 = vmatpush2.msra.mxu0 0.0
        %3275 = vmatprep.subr.mxu0 0.0
        %3276 = vmatpush2.msra.mxu0 0.0
        %3277 = vmatprep.subr.mxu0 0.0
        %3278 = vmatpush2.msra.mxu0 0.0
        %3279 = vmatprep.subr.mxu0 0.0
        %3280 = vmatpush2.msra.mxu0 0.0
        %3281 = vmatprep.subr.mxu0 0.0
        %3282 = vmatpush2.msra.mxu0 0.0
        %3283 = vmatprep.subr.mxu0 0.0
        %3284 = vmatpush2.msra.mxu0 0.0
        %3285 = vmatprep.mubr.f32.mxu0 0.0
        %3286 = vmatmul.mubr.f32.gmra.mxu0 %v3210
        %v3287 = vpop.f32.mrf.mxu0
        %v3288 = vadd.f32 0.0, %v3287
        %v3289 = vpop.f32.mrf.mxu0
        %3290 = vmatprep.mubr.f32.mxu0 0.0
        %3291 = vmatmul.mubr.f32.gmra.mxu0 %v3213
        %v3292 = vpop.f32.mrf.mxu0
        %v3293 = vadd.f32 0.0, %v3292
        %v3294 = vpop.f32.mrf.mxu0
        %3295 = vmatprep.mubr.f32.mxu0 0.0
        %3296 = vmatmul.mubr.f32.gmra.mxu0 %v3216
        %v3297 = vpop.f32.mrf.mxu0
        %v3298 = vadd.f32 0.0, %v3297
        %v3299 = vpop.f32.mrf.mxu0
        %3300 = vdwg.mxu0
        %3301 = vrot.lane.b32.xlu0 %v2887, 120
        %v3302 = vpop.permute.xlu0 %3301
        %3303 = vrot.lane.b32.xlu0 %v2892, 120
        %v3304 = vpop.permute.xlu0 %3303
        %3305 = vrot.lane.b32.xlu0 %v2897, 120
        %v3306 = vpop.permute.xlu0 %3305
        %3307 = vrot.lane.b32.xlu0 %v2972, 120
        %v3308 = vpop.permute.xlu0 %3307
        %3309 = vrot.lane.b32.xlu0 %v2977, 120
        %v3310 = vpop.permute.xlu0 %3309
        %3311 = vrot.lane.b32.xlu0 %v2982, 120
        %v3312 = vpop.permute.xlu0 %3311
        %v3313 = vsel %vm1075, %v3302, 0
        %v3315 = vsel %vm1075, %v3304, 0
        %v3317 = vsel %vm1075, %v3306, 0
        %v3319 = vsel %vm1075, %v3308, 0
        %v3321 = vsel %vm1075, %v3310, 0
        %v3323 = vsel %vm1075, %v3312, 0
        %3325 = vmatprep.subr.mxu0 0.0
        %3326 = vmatpush1.xpose.msra.mxu0 0.0
        %3327 = vmatprep.subr.mxu0 0.0
        %3328 = vmatpush1.xpose.msra.mxu0 0.0
        %3329 = vmatprep.subr.mxu0 0.0
        %3330 = vmatpush1.xpose.msra.mxu0 0.0
        %3331 = vmatprep.subr.mxu0 0.0
        %3332 = vmatpush1.xpose.msra.mxu0 0.0
        %3333 = vmatprep.subr.mxu0 0.0
        %3334 = vmatpush1.xpose.msra.mxu0 0.0
        %3335 = vmatprep.subr.mxu0 0.0
        %3336 = vmatpush1.xpose.msra.mxu0 0.0
        %3337 = vmatprep.subr.mxu0 0.0
        %3338 = vmatpush1.xpose.msra.mxu0 0.0
        %3339 = vmatprep.subr.mxu0 0.0
        %3340 = vmatpush1.xpose.msra.mxu0 0.0
        %3341 = vmatprep.subr.mxu0 0.0
        %3342 = vmatpush1.xpose.msra.mxu0 0.0
        %3343 = vmatprep.subr.mxu0 0.0
        %3344 = vmatpush1.xpose.msra.mxu0 0.0
        %3345 = vmatprep.subr.mxu0 0.0
        %3346 = vmatpush1.xpose.msra.mxu0 0.0
        %3347 = vmatprep.subr.mxu0 0.0
        %3348 = vmatpush1.xpose.msra.mxu0 0.0
        %3349 = vmatprep.subr.mxu0 0.0
        %3350 = vmatpush1.xpose.msra.mxu0 0.0
        %3351 = vmatprep.subr.mxu0 0.0
        %3352 = vmatpush1.xpose.msra.mxu0 %v3323
        %3353 = vmatprep.subr.mxu0 0.0
        %3354 = vmatpush1.xpose.msra.mxu0 %v3321
        %3355 = vmatprep.subr.mxu0 0.0
        %3356 = vmatpush1.xpose.msra.mxu0 %v3319
        %3357 = vmatprep.subr.mxu0 0.0
        %3358 = vmatpush2.xpose.msra.mxu0 0.0
        %3359 = vmatprep.subr.mxu0 0.0
        %3360 = vmatpush2.xpose.msra.mxu0 0.0
        %3361 = vmatprep.subr.mxu0 0.0
        %3362 = vmatpush2.xpose.msra.mxu0 0.0
        %3363 = vmatprep.subr.mxu0 0.0
        %3364 = vmatpush2.xpose.msra.mxu0 0.0
        %3365 = vmatprep.subr.mxu0 0.0
        %3366 = vmatpush2.xpose.msra.mxu0 0.0
        %3367 = vmatprep.subr.mxu0 0.0
        %3368 = vmatpush2.xpose.msra.mxu0 0.0
        %3369 = vmatprep.subr.mxu0 0.0
        %3370 = vmatpush2.xpose.msra.mxu0 0.0
        %3371 = vmatprep.subr.mxu0 0.0
        %3372 = vmatpush2.xpose.msra.mxu0 0.0
        %3373 = vmatprep.subr.mxu0 0.0
        %3374 = vmatpush2.xpose.msra.mxu0 0.0
        %3375 = vmatprep.subr.mxu0 0.0
        %3376 = vmatpush2.xpose.msra.mxu0 0.0
        %3377 = vmatprep.subr.mxu0 0.0
        %3378 = vmatpush2.xpose.msra.mxu0 0.0
        %3379 = vmatprep.subr.mxu0 0.0
        %3380 = vmatpush2.xpose.msra.mxu0 0.0
        %3381 = vmatprep.subr.mxu0 0.0
        %3382 = vmatpush2.xpose.msra.mxu0 0.0
        %3383 = vmatprep.subr.mxu0 0.0
        %3384 = vmatpush2.xpose.msra.mxu0 0.0
        %3385 = vmatprep.subr.mxu0 0.0
        %3386 = vmatpush2.xpose.msra.mxu0 0.0
        %3387 = vmatprep.subr.mxu0 0.0
        %3388 = vmatpush2.xpose.msra.mxu0 0.0
        %3389 = vmatprep.mubr.f32.mxu0 0.0
        %3390 = vmatmul.mubr.f32.gmra.mxu0 %v3313
        %v3391 = vpop.f32.mrf.mxu0
        %v3392 = vadd.f32 0.0, %v3391
        %v3393 = vpop.f32.mrf.mxu0
        %3394 = vmatprep.mubr.f32.mxu0 0.0
        %3395 = vmatmul.mubr.f32.gmra.mxu0 %v3315
        %v3396 = vpop.f32.mrf.mxu0
        %v3397 = vadd.f32 0.0, %v3396
        %v3398 = vpop.f32.mrf.mxu0
        %3399 = vmatprep.mubr.f32.mxu0 0.0
        %3400 = vmatmul.mubr.f32.gmra.mxu0 %v3317
        %v3401 = vpop.f32.mrf.mxu0
        %v3402 = vadd.f32 0.0, %v3401
        %v3403 = vpop.f32.mrf.mxu0
        %3404 = vdwg.mxu0
        %v3405 = vmul.f32 %v3392, 0.17677669
        %v3406 = vmul.f32 %v3397, 0.17677669
        %v3407 = vmul.f32 %v3402, 0.17677669
        %v3408 = vsel %vm1177, %v3405, -inf
        %3409 = vmax.xlane.f32.xlu0 %v3408
        %v3410 = vpop.xlane.xlu0 %3409
        %v3411 = vsel %vm1177, %v3406, -inf
        %3412 = vmax.xlane.f32.xlu0 %v3411
        %v3413 = vpop.xlane.xlu0 %3412
        %v3414 = vsel %vm1184, %v3407, -inf
        %3415 = vmax.xlane.f32.xlu0 %v3414
        %v3416 = vpop.xlane.xlu0 %3415
        %v3417 = vsub.f32 %v3405, %v3410
        %v3418 = vsub.f32 %v3406, %v3413
        %v3419 = vsub.f32 %v3407, %v3416
        %v3420 = vmul.f32 %v3417, 1.442695
        %v3421 = vpow.pop %v3420
        %v3422 = vmul.f32 %v3418, 1.442695
        %v3423 = vpow.pop %v3422
        %v3424 = vmul.f32 %v3419, 1.442695
        %v3425 = vpow.pop %v3424
        %v3426 = vsel %vm1177, %v3421, 0.0
        %3427 = vadd.xlane.f32.xlu0 %v3426
        %v3428 = vpop.xlane.xlu0 %3427
        %v3429 = vsel %vm1177, %v3423, 0.0
        %3430 = vadd.xlane.f32.xlu0 %v3429
        %v3431 = vpop.xlane.xlu0 %3430
        %v3432 = vsel %vm1184, %v3425, 0.0
        %3433 = vadd.xlane.f32.xlu0 %v3432
        %v3434 = vpop.xlane.xlu0 %3433
        %v3435 = vrcp.pop %v3428
        %v3436 = vmul.f32 %v3421, %v3435
        %v3437 = vrcp.pop %v3431
        %v3438 = vmul.f32 %v3423, %v3437
        %v3439 = vrcp.pop %v3434
        %v3440 = vmul.f32 %v3425, %v3439
        %3443 = vrot.lane.b32.xlu0 %v3057, 120
        %v3444 = vpop.permute.xlu0 %3443
        %3445 = vrot.lane.b32.xlu0 %v3062, 120
        %v3446 = vpop.permute.xlu0 %3445
        %3447 = vrot.lane.b32.xlu0 %v3067, 120
        %v3448 = vpop.permute.xlu0 %3447
        %v3452 = vsel %vm1177, %v3436, 0
        %v3455 = vsel %vm1177, %v3438, 0
        %v3458 = vsel %vm1177, %v3440, 0
        %v3460 = vsel %vm1221, %v3448, 0
        %3462 = vmatprep.subr.mxu0 0.0
        %3463 = vmatpush1.msra.mxu0 0.0
        %3464 = vmatprep.subr.mxu0 0.0
        %3465 = vmatpush1.msra.mxu0 0.0
        %3466 = vmatprep.subr.mxu0 0.0
        %3467 = vmatpush1.msra.mxu0 0.0
        %3468 = vmatprep.subr.mxu0 0.0
        %3469 = vmatpush1.msra.mxu0 0.0
        %3470 = vmatprep.subr.mxu0 0.0
        %3471 = vmatpush1.msra.mxu0 0.0
        %3472 = vmatprep.subr.mxu0 0.0
        %3473 = vmatpush1.msra.mxu0 0.0
        %3474 = vmatprep.subr.mxu0 0.0
        %3475 = vmatpush1.msra.mxu0 0.0
        %3476 = vmatprep.subr.mxu0 0.0
        %3477 = vmatpush1.msra.mxu0 0.0
        %3478 = vmatprep.subr.mxu0 0.0
        %3479 = vmatpush1.msra.mxu0 0.0
        %3480 = vmatprep.subr.mxu0 0.0
        %3481 = vmatpush1.msra.mxu0 0.0
        %3482 = vmatprep.subr.mxu0 0.0
        %3483 = vmatpush1.msra.mxu0 0.0
        %3484 = vmatprep.subr.mxu0 0.0
        %3485 = vmatpush1.msra.mxu0 0.0
        %3486 = vmatprep.subr.mxu0 0.0
        %3487 = vmatpush1.msra.mxu0 0.0
        %3488 = vmatprep.subr.mxu0 0.0
        %3489 = vmatpush1.msra.mxu0 %v3460
        %3490 = vmatprep.subr.mxu0 0.0
        %3491 = vmatpush1.msra.mxu0 %v3446
        %3492 = vmatprep.subr.mxu0 0.0
        %3493 = vmatpush1.msra.mxu0 %v3444
        %3494 = vmatprep.subr.mxu0 0.0
        %3495 = vmatpush2.msra.mxu0 0.0
        %3496 = vmatprep.subr.mxu0 0.0
        %3497 = vmatpush2.msra.mxu0 0.0
        %3498 = vmatprep.subr.mxu0 0.0
        %3499 = vmatpush2.msra.mxu0 0.0
        %3500 = vmatprep.subr.mxu0 0.0
        %3501 = vmatpush2.msra.mxu0 0.0
        %3502 = vmatprep.subr.mxu0 0.0
        %3503 = vmatpush2.msra.mxu0 0.0
        %3504 = vmatprep.subr.mxu0 0.0
        %3505 = vmatpush2.msra.mxu0 0.0
        %3506 = vmatprep.subr.mxu0 0.0
        %3507 = vmatpush2.msra.mxu0 0.0
        %3508 = vmatprep.subr.mxu0 0.0
        %3509 = vmatpush2.msra.mxu0 0.0
        %3510 = vmatprep.subr.mxu0 0.0
        %3511 = vmatpush2.msra.mxu0 0.0
        %3512 = vmatprep.subr.mxu0 0.0
        %3513 = vmatpush2.msra.mxu0 0.0
        %3514 = vmatprep.subr.mxu0 0.0
        %3515 = vmatpush2.msra.mxu0 0.0
        %3516 = vmatprep.subr.mxu0 0.0
        %3517 = vmatpush2.msra.mxu0 0.0
        %3518 = vmatprep.subr.mxu0 0.0
        %3519 = vmatpush2.msra.mxu0 0.0
        %3520 = vmatprep.subr.mxu0 0.0
        %3521 = vmatpush2.msra.mxu0 0.0
        %3522 = vmatprep.subr.mxu0 0.0
        %3523 = vmatpush2.msra.mxu0 0.0
        %3524 = vmatprep.subr.mxu0 0.0
        %3525 = vmatpush2.msra.mxu0 0.0
        %3526 = vmatprep.mubr.f32.mxu0 0.0
        %3527 = vmatmul.mubr.f32.gmra.mxu0 %v3452
        %v3528 = vpop.f32.mrf.mxu0
        %v3529 = vadd.f32 0.0, %v3528
        %v3530 = vpop.f32.mrf.mxu0
        %3531 = vmatprep.mubr.f32.mxu0 0.0
        %3532 = vmatmul.mubr.f32.gmra.mxu0 %v3455
        %v3533 = vpop.f32.mrf.mxu0
        %v3534 = vadd.f32 0.0, %v3533
        %v3535 = vpop.f32.mrf.mxu0
        %3536 = vmatprep.mubr.f32.mxu0 0.0
        %3537 = vmatmul.mubr.f32.gmra.mxu0 %v3458
        %v3538 = vpop.f32.mrf.mxu0
        %v3539 = vadd.f32 0.0, %v3538
        %v3540 = vpop.f32.mrf.mxu0
        %3541 = vdwg.mxu0
        %v3543 = vsel %vm1075, %v3529, 0
        %v3546 = vsel %vm1075, %v3534, 0
        %v3549 = vsel %vm1075, %v3539, 0
        %3551 = vmatprep.subr.mxu0 0.0
        %3552 = vmatpush1.msra.mxu0 0.0
        %3553 = vmatprep.subr.mxu0 0.0
        %3554 = vmatpush1.msra.mxu0 0.0
        %3555 = vmatprep.subr.mxu0 0.0
        %3556 = vmatpush1.msra.mxu0 0.0
        %3557 = vmatprep.subr.mxu0 0.0
        %3558 = vmatpush1.msra.mxu0 0.0
        %3559 = vmatprep.subr.mxu0 0.0
        %3560 = vmatpush1.msra.mxu0 0.0
        %3561 = vmatprep.subr.mxu0 0.0
        %3562 = vmatpush1.msra.mxu0 0.0
        %3563 = vmatprep.subr.mxu0 0.0
        %3564 = vmatpush1.msra.mxu0 0.0
        %3565 = vmatprep.subr.mxu0 0.0
        %3566 = vmatpush1.msra.mxu0 0.0
        %3567 = vmatprep.subr.mxu0 0.0
        %3568 = vmatpush1.msra.mxu0 0.0
        %3569 = vmatprep.subr.mxu0 0.0
        %3570 = vmatpush1.msra.mxu0 0.0
        %3571 = vmatprep.subr.mxu0 0.0
        %3572 = vmatpush1.msra.mxu0 0.0
        %3573 = vmatprep.subr.mxu0 0.0
        %3574 = vmatpush1.msra.mxu0 0.0
        %3575 = vmatprep.subr.mxu0 0.0
        %3576 = vmatpush1.msra.mxu0 0.0
        %3577 = vmatprep.subr.mxu0 0.0
        %3578 = vmatpush1.msra.mxu0 0.0
        %3579 = vmatprep.subr.mxu0 0.0
        %3580 = vmatpush1.msra.mxu0 0.0
        %3581 = vmatprep.subr.mxu0 0.0
        %3582 = vmatpush1.msra.mxu0 %v3072
        %3583 = vmatprep.subr.mxu0 0.0
        %3584 = vmatpush2.msra.mxu0 0.0
        %3585 = vmatprep.subr.mxu0 0.0
        %3586 = vmatpush2.msra.mxu0 0.0
        %3587 = vmatprep.subr.mxu0 0.0
        %3588 = vmatpush2.msra.mxu0 0.0
        %3589 = vmatprep.subr.mxu0 0.0
        %3590 = vmatpush2.msra.mxu0 0.0
        %3591 = vmatprep.subr.mxu0 0.0
        %3592 = vmatpush2.msra.mxu0 0.0
        %3593 = vmatprep.subr.mxu0 0.0
        %3594 = vmatpush2.msra.mxu0 0.0
        %3595 = vmatprep.subr.mxu0 0.0
        %3596 = vmatpush2.msra.mxu0 0.0
        %3597 = vmatprep.subr.mxu0 0.0
        %3598 = vmatpush2.msra.mxu0 0.0
        %3599 = vmatprep.subr.mxu0 0.0
        %3600 = vmatpush2.msra.mxu0 0.0
        %3601 = vmatprep.subr.mxu0 0.0
        %3602 = vmatpush2.msra.mxu0 0.0
        %3603 = vmatprep.subr.mxu0 0.0
        %3604 = vmatpush2.msra.mxu0 0.0
        %3605 = vmatprep.subr.mxu0 0.0
        %3606 = vmatpush2.msra.mxu0 0.0
        %3607 = vmatprep.subr.mxu0 0.0
        %3608 = vmatpush2.msra.mxu0 0.0
        %3609 = vmatprep.subr.mxu0 0.0
        %3610 = vmatpush2.msra.mxu0 0.0
        %3611 = vmatprep.subr.mxu0 0.0
        %3612 = vmatpush2.msra.mxu0 0.0
        %3613 = vmatprep.subr.mxu0 0.0
        %3614 = vmatpush2.msra.mxu0 0.0
        %3615 = vmatprep.mubr.f32.mxu0 0.0
        %3616 = vmatmul.mubr.f32.gmra.mxu0 %v3543
        %v3617 = vpop.f32.mrf.mxu0
        %v3618 = vadd.f32 0.0, %v3617
        %v3619 = vpop.f32.mrf.mxu0
        %3620 = vmatprep.mubr.f32.mxu0 0.0
        %3621 = vmatmul.mubr.f32.gmra.mxu0 %v3546
        %v3622 = vpop.f32.mrf.mxu0
        %v3623 = vadd.f32 0.0, %v3622
        %v3624 = vpop.f32.mrf.mxu0
        %3625 = vmatprep.mubr.f32.mxu0 0.0
        %3626 = vmatmul.mubr.f32.gmra.mxu0 %v3549
        %v3627 = vpop.f32.mrf.mxu0
        %v3628 = vadd.f32 0.0, %v3627
        %v3629 = vpop.f32.mrf.mxu0
        %3630 = vdwg.mxu0
        %v3632 = vsel %vm1075, %v3288, 0
        %v3635 = vsel %vm1075, %v3293, 0
        %v3638 = vsel %vm1075, %v3298, 0
        %3640 = vmatprep.subr.mxu0 0.0
        %3641 = vmatpush1.msra.mxu0 0.0
        %3642 = vmatprep.subr.mxu0 0.0
        %3643 = vmatpush1.msra.mxu0 0.0
        %3644 = vmatprep.subr.mxu0 0.0
        %3645 = vmatpush1.msra.mxu0 0.0
        %3646 = vmatprep.subr.mxu0 0.0
        %3647 = vmatpush1.msra.mxu0 0.0
        %3648 = vmatprep.subr.mxu0 0.0
        %3649 = vmatpush1.msra.mxu0 0.0
        %3650 = vmatprep.subr.mxu0 0.0
        %3651 = vmatpush1.msra.mxu0 0.0
        %3652 = vmatprep.subr.mxu0 0.0
        %3653 = vmatpush1.msra.mxu0 0.0
        %3654 = vmatprep.subr.mxu0 0.0
        %3655 = vmatpush1.msra.mxu0 0.0
        %3656 = vmatprep.subr.mxu0 0.0
        %3657 = vmatpush1.msra.mxu0 0.0
        %3658 = vmatprep.subr.mxu0 0.0
        %3659 = vmatpush1.msra.mxu0 0.0
        %3660 = vmatprep.subr.mxu0 0.0
        %3661 = vmatpush1.msra.mxu0 0.0
        %3662 = vmatprep.subr.mxu0 0.0
        %3663 = vmatpush1.msra.mxu0 0.0
        %3664 = vmatprep.subr.mxu0 0.0
        %3665 = vmatpush1.msra.mxu0 0.0
        %3666 = vmatprep.subr.mxu0 0.0
        %3667 = vmatpush1.msra.mxu0 0.0
        %3668 = vmatprep.subr.mxu0 0.0
        %3669 = vmatpush1.msra.mxu0 0.0
        %3670 = vmatprep.subr.mxu0 0.0
        %3671 = vmatpush1.msra.mxu0 %v3071
        %3672 = vmatprep.subr.mxu0 0.0
        %3673 = vmatpush2.msra.mxu0 0.0
        %3674 = vmatprep.subr.mxu0 0.0
        %3675 = vmatpush2.msra.mxu0 0.0
        %3676 = vmatprep.subr.mxu0 0.0
        %3677 = vmatpush2.msra.mxu0 0.0
        %3678 = vmatprep.subr.mxu0 0.0
        %3679 = vmatpush2.msra.mxu0 0.0
        %3680 = vmatprep.subr.mxu0 0.0
        %3681 = vmatpush2.msra.mxu0 0.0
        %3682 = vmatprep.subr.mxu0 0.0
        %3683 = vmatpush2.msra.mxu0 0.0
        %3684 = vmatprep.subr.mxu0 0.0
        %3685 = vmatpush2.msra.mxu0 0.0
        %3686 = vmatprep.subr.mxu0 0.0
        %3687 = vmatpush2.msra.mxu0 0.0
        %3688 = vmatprep.subr.mxu0 0.0
        %3689 = vmatpush2.msra.mxu0 0.0
        %3690 = vmatprep.subr.mxu0 0.0
        %3691 = vmatpush2.msra.mxu0 0.0
        %3692 = vmatprep.subr.mxu0 0.0
        %3693 = vmatpush2.msra.mxu0 0.0
        %3694 = vmatprep.subr.mxu0 0.0
        %3695 = vmatpush2.msra.mxu0 0.0
        %3696 = vmatprep.subr.mxu0 0.0
        %3697 = vmatpush2.msra.mxu0 0.0
        %3698 = vmatprep.subr.mxu0 0.0
        %3699 = vmatpush2.msra.mxu0 0.0
        %3700 = vmatprep.subr.mxu0 0.0
        %3701 = vmatpush2.msra.mxu0 0.0
        %3702 = vmatprep.subr.mxu0 0.0
        %3703 = vmatpush2.msra.mxu0 0.0
        %3704 = vmatprep.mubr.f32.mxu0 0.0
        %3705 = vmatmul.mubr.f32.gmra.mxu0 %v3632
        %v3706 = vpop.f32.mrf.mxu0
        %v3707 = vadd.f32 %v3618, %v3706
        %v3708 = vpop.f32.mrf.mxu0
        %3709 = vmatprep.mubr.f32.mxu0 0.0
        %3710 = vmatmul.mubr.f32.gmra.mxu0 %v3635
        %v3711 = vpop.f32.mrf.mxu0
        %v3712 = vadd.f32 %v3623, %v3711
        %v3713 = vpop.f32.mrf.mxu0
        %3714 = vmatprep.mubr.f32.mxu0 0.0
        %3715 = vmatmul.mubr.f32.gmra.mxu0 %v3638
        %v3716 = vpop.f32.mrf.mxu0
        %v3717 = vadd.f32 %v3628, %v3716
        %v3718 = vpop.f32.mrf.mxu0
        %3719 = vdwg.mxu0
        %3720 = vrot.lane.b32.xlu0 %v2887, 112
        %v3721 = vpop.permute.xlu0 %3720
        %3722 = vrot.lane.b32.xlu0 %v2892, 112
        %v3723 = vpop.permute.xlu0 %3722
        %3724 = vrot.lane.b32.xlu0 %v2897, 112
        %v3725 = vpop.permute.xlu0 %3724
        %3726 = vrot.lane.b32.xlu0 %v2972, 112
        %v3727 = vpop.permute.xlu0 %3726
        %3728 = vrot.lane.b32.xlu0 %v2977, 112
        %v3729 = vpop.permute.xlu0 %3728
        %3730 = vrot.lane.b32.xlu0 %v2982, 112
        %v3731 = vpop.permute.xlu0 %3730
        %v3732 = vsel %vm1075, %v3721, 0
        %v3734 = vsel %vm1075, %v3723, 0
        %v3736 = vsel %vm1075, %v3725, 0
        %v3738 = vsel %vm1075, %v3727, 0
        %v3740 = vsel %vm1075, %v3729, 0
        %v3742 = vsel %vm1075, %v3731, 0
        %3744 = vmatprep.subr.mxu0 0.0
        %3745 = vmatpush1.xpose.msra.mxu0 0.0
        %3746 = vmatprep.subr.mxu0 0.0
        %3747 = vmatpush1.xpose.msra.mxu0 0.0
        %3748 = vmatprep.subr.mxu0 0.0
        %3749 = vmatpush1.xpose.msra.mxu0 0.0
        %3750 = vmatprep.subr.mxu0 0.0
        %3751 = vmatpush1.xpose.msra.mxu0 0.0
        %3752 = vmatprep.subr.mxu0 0.0
        %3753 = vmatpush1.xpose.msra.mxu0 0.0
        %3754 = vmatprep.subr.mxu0 0.0
        %3755 = vmatpush1.xpose.msra.mxu0 0.0
        %3756 = vmatprep.subr.mxu0 0.0
        %3757 = vmatpush1.xpose.msra.mxu0 0.0
        %3758 = vmatprep.subr.mxu0 0.0
        %3759 = vmatpush1.xpose.msra.mxu0 0.0
        %3760 = vmatprep.subr.mxu0 0.0
        %3761 = vmatpush1.xpose.msra.mxu0 0.0
        %3762 = vmatprep.subr.mxu0 0.0
        %3763 = vmatpush1.xpose.msra.mxu0 0.0
        %3764 = vmatprep.subr.mxu0 0.0
        %3765 = vmatpush1.xpose.msra.mxu0 0.0
        %3766 = vmatprep.subr.mxu0 0.0
        %3767 = vmatpush1.xpose.msra.mxu0 0.0
        %3768 = vmatprep.subr.mxu0 0.0
        %3769 = vmatpush1.xpose.msra.mxu0 0.0
        %3770 = vmatprep.subr.mxu0 0.0
        %3771 = vmatpush1.xpose.msra.mxu0 %v3742
        %3772 = vmatprep.subr.mxu0 0.0
        %3773 = vmatpush1.xpose.msra.mxu0 %v3740
        %3774 = vmatprep.subr.mxu0 0.0
        %3775 = vmatpush1.xpose.msra.mxu0 %v3738
        %3776 = vmatprep.subr.mxu0 0.0
        %3777 = vmatpush2.xpose.msra.mxu0 0.0
        %3778 = vmatprep.subr.mxu0 0.0
        %3779 = vmatpush2.xpose.msra.mxu0 0.0
        %3780 = vmatprep.subr.mxu0 0.0
        %3781 = vmatpush2.xpose.msra.mxu0 0.0
        %3782 = vmatprep.subr.mxu0 0.0
        %3783 = vmatpush2.xpose.msra.mxu0 0.0
        %3784 = vmatprep.subr.mxu0 0.0
        %3785 = vmatpush2.xpose.msra.mxu0 0.0
        %3786 = vmatprep.subr.mxu0 0.0
        %3787 = vmatpush2.xpose.msra.mxu0 0.0
        %3788 = vmatprep.subr.mxu0 0.0
        %3789 = vmatpush2.xpose.msra.mxu0 0.0
        %3790 = vmatprep.subr.mxu0 0.0
        %3791 = vmatpush2.xpose.msra.mxu0 0.0
        %3792 = vmatprep.subr.mxu0 0.0
        %3793 = vmatpush2.xpose.msra.mxu0 0.0
        %3794 = vmatprep.subr.mxu0 0.0
        %3795 = vmatpush2.xpose.msra.mxu0 0.0
        %3796 = vmatprep.subr.mxu0 0.0
        %3797 = vmatpush2.xpose.msra.mxu0 0.0
        %3798 = vmatprep.subr.mxu0 0.0
        %3799 = vmatpush2.xpose.msra.mxu0 0.0
        %3800 = vmatprep.subr.mxu0 0.0
        %3801 = vmatpush2.xpose.msra.mxu0 0.0
        %3802 = vmatprep.subr.mxu0 0.0
        %3803 = vmatpush2.xpose.msra.mxu0 0.0
        %3804 = vmatprep.subr.mxu0 0.0
        %3805 = vmatpush2.xpose.msra.mxu0 0.0
        %3806 = vmatprep.subr.mxu0 0.0
        %3807 = vmatpush2.xpose.msra.mxu0 0.0
        %3808 = vmatprep.mubr.f32.mxu0 0.0
        %3809 = vmatmul.mubr.f32.gmra.mxu0 %v3732
        %v3810 = vpop.f32.mrf.mxu0
        %v3811 = vadd.f32 0.0, %v3810
        %v3812 = vpop.f32.mrf.mxu0
        %3813 = vmatprep.mubr.f32.mxu0 0.0
        %3814 = vmatmul.mubr.f32.gmra.mxu0 %v3734
        %v3815 = vpop.f32.mrf.mxu0
        %v3816 = vadd.f32 0.0, %v3815
        %v3817 = vpop.f32.mrf.mxu0
        %3818 = vmatprep.mubr.f32.mxu0 0.0
        %3819 = vmatmul.mubr.f32.gmra.mxu0 %v3736
        %v3820 = vpop.f32.mrf.mxu0
        %v3821 = vadd.f32 0.0, %v3820
        %v3822 = vpop.f32.mrf.mxu0
        %3823 = vdwg.mxu0
        %v3824 = vmul.f32 %v3811, 0.17677669
        %v3825 = vmul.f32 %v3816, 0.17677669
        %v3826 = vmul.f32 %v3821, 0.17677669
        %v3827 = vsel %vm1177, %v3824, -inf
        %3828 = vmax.xlane.f32.xlu0 %v3827
        %v3829 = vpop.xlane.xlu0 %3828
        %v3830 = vsel %vm1177, %v3825, -inf
        %3831 = vmax.xlane.f32.xlu0 %v3830
        %v3832 = vpop.xlane.xlu0 %3831
        %v3833 = vsel %vm1184, %v3826, -inf
        %3834 = vmax.xlane.f32.xlu0 %v3833
        %v3835 = vpop.xlane.xlu0 %3834
        %v3836 = vsub.f32 %v3824, %v3829
        %v3837 = vsub.f32 %v3825, %v3832
        %v3838 = vsub.f32 %v3826, %v3835
        %v3839 = vmul.f32 %v3836, 1.442695
        %v3840 = vpow.pop %v3839
        %v3841 = vmul.f32 %v3837, 1.442695
        %v3842 = vpow.pop %v3841
        %v3843 = vmul.f32 %v3838, 1.442695
        %v3844 = vpow.pop %v3843
        %v3845 = vsel %vm1177, %v3840, 0.0
        %3846 = vadd.xlane.f32.xlu0 %v3845
        %v3847 = vpop.xlane.xlu0 %3846
        %v3848 = vsel %vm1177, %v3842, 0.0
        %3849 = vadd.xlane.f32.xlu0 %v3848
        %v3850 = vpop.xlane.xlu0 %3849
        %v3851 = vsel %vm1184, %v3844, 0.0
        %3852 = vadd.xlane.f32.xlu0 %v3851
        %v3853 = vpop.xlane.xlu0 %3852
        %v3854 = vrcp.pop %v3847
        %v3855 = vmul.f32 %v3840, %v3854
        %v3856 = vrcp.pop %v3850
        %v3857 = vmul.f32 %v3842, %v3856
        %v3858 = vrcp.pop %v3853
        %v3859 = vmul.f32 %v3844, %v3858
        %3860 = vrot.lane.b32.xlu0 %v3057, 112
        %v3861 = vpop.permute.xlu0 %3860
        %3862 = vrot.lane.b32.xlu0 %v3062, 112
        %v3863 = vpop.permute.xlu0 %3862
        %3864 = vrot.lane.b32.xlu0 %v3067, 112
        %v3865 = vpop.permute.xlu0 %3864
        %v3869 = vsel %vm1177, %v3855, 0
        %v3872 = vsel %vm1177, %v3857, 0
        %v3875 = vsel %vm1177, %v3859, 0
        %v3877 = vsel %vm1221, %v3865, 0
        %3879 = vmatprep.subr.mxu0 0.0
        %3880 = vmatpush1.msra.mxu0 0.0
        %3881 = vmatprep.subr.mxu0 0.0
        %3882 = vmatpush1.msra.mxu0 0.0
        %3883 = vmatprep.subr.mxu0 0.0
        %3884 = vmatpush1.msra.mxu0 0.0
        %3885 = vmatprep.subr.mxu0 0.0
        %3886 = vmatpush1.msra.mxu0 0.0
        %3887 = vmatprep.subr.mxu0 0.0
        %3888 = vmatpush1.msra.mxu0 0.0
        %3889 = vmatprep.subr.mxu0 0.0
        %3890 = vmatpush1.msra.mxu0 0.0
        %3891 = vmatprep.subr.mxu0 0.0
        %3892 = vmatpush1.msra.mxu0 0.0
        %3893 = vmatprep.subr.mxu0 0.0
        %3894 = vmatpush1.msra.mxu0 0.0
        %3895 = vmatprep.subr.mxu0 0.0
        %3896 = vmatpush1.msra.mxu0 0.0
        %3897 = vmatprep.subr.mxu0 0.0
        %3898 = vmatpush1.msra.mxu0 0.0
        %3899 = vmatprep.subr.mxu0 0.0
        %3900 = vmatpush1.msra.mxu0 0.0
        %3901 = vmatprep.subr.mxu0 0.0
        %3902 = vmatpush1.msra.mxu0 0.0
        %3903 = vmatprep.subr.mxu0 0.0
        %3904 = vmatpush1.msra.mxu0 0.0
        %3905 = vmatprep.subr.mxu0 0.0
        %3906 = vmatpush1.msra.mxu0 %v3877
        %3907 = vmatprep.subr.mxu0 0.0
        %3908 = vmatpush1.msra.mxu0 %v3863
        %3909 = vmatprep.subr.mxu0 0.0
        %3910 = vmatpush1.msra.mxu0 %v3861
        %3911 = vmatprep.subr.mxu0 0.0
        %3912 = vmatpush2.msra.mxu0 0.0
        %3913 = vmatprep.subr.mxu0 0.0
        %3914 = vmatpush2.msra.mxu0 0.0
        %3915 = vmatprep.subr.mxu0 0.0
        %3916 = vmatpush2.msra.mxu0 0.0
        %3917 = vmatprep.subr.mxu0 0.0
        %3918 = vmatpush2.msra.mxu0 0.0
        %3919 = vmatprep.subr.mxu0 0.0
        %3920 = vmatpush2.msra.mxu0 0.0
        %3921 = vmatprep.subr.mxu0 0.0
        %3922 = vmatpush2.msra.mxu0 0.0
        %3923 = vmatprep.subr.mxu0 0.0
        %3924 = vmatpush2.msra.mxu0 0.0
        %3925 = vmatprep.subr.mxu0 0.0
        %3926 = vmatpush2.msra.mxu0 0.0
        %3927 = vmatprep.subr.mxu0 0.0
        %3928 = vmatpush2.msra.mxu0 0.0
        %3929 = vmatprep.subr.mxu0 0.0
        %3930 = vmatpush2.msra.mxu0 0.0
        %3931 = vmatprep.subr.mxu0 0.0
        %3932 = vmatpush2.msra.mxu0 0.0
        %3933 = vmatprep.subr.mxu0 0.0
        %3934 = vmatpush2.msra.mxu0 0.0
        %3935 = vmatprep.subr.mxu0 0.0
        %3936 = vmatpush2.msra.mxu0 0.0
        %3937 = vmatprep.subr.mxu0 0.0
        %3938 = vmatpush2.msra.mxu0 0.0
        %3939 = vmatprep.subr.mxu0 0.0
        %3940 = vmatpush2.msra.mxu0 0.0
        %3941 = vmatprep.subr.mxu0 0.0
        %3942 = vmatpush2.msra.mxu0 0.0
        %3943 = vmatprep.mubr.f32.mxu0 0.0
        %3944 = vmatmul.mubr.f32.gmra.mxu0 %v3869
        %v3945 = vpop.f32.mrf.mxu0
        %v3946 = vadd.f32 0.0, %v3945
        %v3947 = vpop.f32.mrf.mxu0
        %3948 = vmatprep.mubr.f32.mxu0 0.0
        %3949 = vmatmul.mubr.f32.gmra.mxu0 %v3872
        %v3950 = vpop.f32.mrf.mxu0
        %v3951 = vadd.f32 0.0, %v3950
        %v3952 = vpop.f32.mrf.mxu0
        %3953 = vmatprep.mubr.f32.mxu0 0.0
        %3954 = vmatmul.mubr.f32.gmra.mxu0 %v3875
        %v3955 = vpop.f32.mrf.mxu0
        %v3956 = vadd.f32 0.0, %v3955
        %v3957 = vpop.f32.mrf.mxu0
        %3958 = vdwg.mxu0
        %v3960 = vsel %vm1075, %v3946, 0
        %v3963 = vsel %vm1075, %v3951, 0
        %v3966 = vsel %vm1075, %v3956, 0
        %3968 = vmatprep.subr.mxu0 0.0
        %3969 = vmatpush1.msra.mxu0 0.0
        %3970 = vmatprep.subr.mxu0 0.0
        %3971 = vmatpush1.msra.mxu0 0.0
        %3972 = vmatprep.subr.mxu0 0.0
        %3973 = vmatpush1.msra.mxu0 0.0
        %3974 = vmatprep.subr.mxu0 0.0
        %3975 = vmatpush1.msra.mxu0 0.0
        %3976 = vmatprep.subr.mxu0 0.0
        %3977 = vmatpush1.msra.mxu0 0.0
        %3978 = vmatprep.subr.mxu0 0.0
        %3979 = vmatpush1.msra.mxu0 0.0
        %3980 = vmatprep.subr.mxu0 0.0
        %3981 = vmatpush1.msra.mxu0 0.0
        %3982 = vmatprep.subr.mxu0 0.0
        %3983 = vmatpush1.msra.mxu0 0.0
        %3984 = vmatprep.subr.mxu0 0.0
        %3985 = vmatpush1.msra.mxu0 0.0
        %3986 = vmatprep.subr.mxu0 0.0
        %3987 = vmatpush1.msra.mxu0 0.0
        %3988 = vmatprep.subr.mxu0 0.0
        %3989 = vmatpush1.msra.mxu0 0.0
        %3990 = vmatprep.subr.mxu0 0.0
        %3991 = vmatpush1.msra.mxu0 0.0
        %3992 = vmatprep.subr.mxu0 0.0
        %3993 = vmatpush1.msra.mxu0 0.0
        %3994 = vmatprep.subr.mxu0 0.0
        %3995 = vmatpush1.msra.mxu0 0.0
        %3996 = vmatprep.subr.mxu0 0.0
        %3997 = vmatpush1.msra.mxu0 0.0
        %3998 = vmatprep.subr.mxu0 0.0
        %3999 = vmatpush1.msra.mxu0 %v3073
        %4000 = vmatprep.subr.mxu0 0.0
        %4001 = vmatpush2.msra.mxu0 0.0
        %4002 = vmatprep.subr.mxu0 0.0
        %4003 = vmatpush2.msra.mxu0 0.0
        %4004 = vmatprep.subr.mxu0 0.0
        %4005 = vmatpush2.msra.mxu0 0.0
        %4006 = vmatprep.subr.mxu0 0.0
        %4007 = vmatpush2.msra.mxu0 0.0
        %4008 = vmatprep.subr.mxu0 0.0
        %4009 = vmatpush2.msra.mxu0 0.0
        %4010 = vmatprep.subr.mxu0 0.0
        %4011 = vmatpush2.msra.mxu0 0.0
        %4012 = vmatprep.subr.mxu0 0.0
        %4013 = vmatpush2.msra.mxu0 0.0
        %4014 = vmatprep.subr.mxu0 0.0
        %4015 = vmatpush2.msra.mxu0 0.0
        %4016 = vmatprep.subr.mxu0 0.0
        %4017 = vmatpush2.msra.mxu0 0.0
        %4018 = vmatprep.subr.mxu0 0.0
        %4019 = vmatpush2.msra.mxu0 0.0
        %4020 = vmatprep.subr.mxu0 0.0
        %4021 = vmatpush2.msra.mxu0 0.0
        %4022 = vmatprep.subr.mxu0 0.0
        %4023 = vmatpush2.msra.mxu0 0.0
        %4024 = vmatprep.subr.mxu0 0.0
        %4025 = vmatpush2.msra.mxu0 0.0
        %4026 = vmatprep.subr.mxu0 0.0
        %4027 = vmatpush2.msra.mxu0 0.0
        %4028 = vmatprep.subr.mxu0 0.0
        %4029 = vmatpush2.msra.mxu0 0.0
        %4030 = vmatprep.subr.mxu0 0.0
        %4031 = vmatpush2.msra.mxu0 0.0
        %4032 = vmatprep.mubr.f32.mxu0 0.0
        %4033 = vmatmul.mubr.f32.gmra.mxu0 %v3960
        %v4034 = vpop.f32.mrf.mxu0
        %v4035 = vadd.f32 0.0, %v4034
        %v4036 = vpop.f32.mrf.mxu0
        %4037 = vmatprep.mubr.f32.mxu0 0.0
        %4038 = vmatmul.mubr.f32.gmra.mxu0 %v3963
        %v4039 = vpop.f32.mrf.mxu0
        %v4040 = vadd.f32 0.0, %v4039
        %v4041 = vpop.f32.mrf.mxu0
        %4042 = vmatprep.mubr.f32.mxu0 0.0
        %4043 = vmatmul.mubr.f32.gmra.mxu0 %v3966
        %v4044 = vpop.f32.mrf.mxu0
        %v4045 = vadd.f32 0.0, %v4044
        %v4046 = vpop.f32.mrf.mxu0
        %4047 = vdwg.mxu0
        %v4048 = vadd.f32 %v3707, %v4035
        %v4049 = vadd.f32 %v3712, %v4040
        %v4050 = vadd.f32 %v3717, %v4045
        %4051 = vrot.lane.b32.xlu0 %v2887, 104
        %v4052 = vpop.permute.xlu0 %4051
        %4053 = vrot.lane.b32.xlu0 %v2892, 104
        %v4054 = vpop.permute.xlu0 %4053
        %4055 = vrot.lane.b32.xlu0 %v2897, 104
        %v4056 = vpop.permute.xlu0 %4055
        %4057 = vrot.lane.b32.xlu0 %v2972, 104
        %v4058 = vpop.permute.xlu0 %4057
        %4059 = vrot.lane.b32.xlu0 %v2977, 104
        %v4060 = vpop.permute.xlu0 %4059
        %4061 = vrot.lane.b32.xlu0 %v2982, 104
        %v4062 = vpop.permute.xlu0 %4061
        %v4063 = vsel %vm1075, %v4052, 0
        %v4065 = vsel %vm1075, %v4054, 0
        %v4067 = vsel %vm1075, %v4056, 0
        %v4069 = vsel %vm1075, %v4058, 0
        %v4071 = vsel %vm1075, %v4060, 0
        %v4073 = vsel %vm1075, %v4062, 0
        %4075 = vmatprep.subr.mxu0 0.0
        %4076 = vmatpush1.xpose.msra.mxu0 0.0
        %4077 = vmatprep.subr.mxu0 0.0
        %4078 = vmatpush1.xpose.msra.mxu0 0.0
        %4079 = vmatprep.subr.mxu0 0.0
        %4080 = vmatpush1.xpose.msra.mxu0 0.0
        %4081 = vmatprep.subr.mxu0 0.0
        %4082 = vmatpush1.xpose.msra.mxu0 0.0
        %4083 = vmatprep.subr.mxu0 0.0
        %4084 = vmatpush1.xpose.msra.mxu0 0.0
        %4085 = vmatprep.subr.mxu0 0.0
        %4086 = vmatpush1.xpose.msra.mxu0 0.0
        %4087 = vmatprep.subr.mxu0 0.0
        %4088 = vmatpush1.xpose.msra.mxu0 0.0
        %4089 = vmatprep.subr.mxu0 0.0
        %4090 = vmatpush1.xpose.msra.mxu0 0.0
        %4091 = vmatprep.subr.mxu0 0.0
        %4092 = vmatpush1.xpose.msra.mxu0 0.0
        %4093 = vmatprep.subr.mxu0 0.0
        %4094 = vmatpush1.xpose.msra.mxu0 0.0
        %4095 = vmatprep.subr.mxu0 0.0
        %4096 = vmatpush1.xpose.msra.mxu0 0.0
        %4097 = vmatprep.subr.mxu0 0.0
        %4098 = vmatpush1.xpose.msra.mxu0 0.0
        %4099 = vmatprep.subr.mxu0 0.0
        %4100 = vmatpush1.xpose.msra.mxu0 0.0
        %4101 = vmatprep.subr.mxu0 0.0
        %4102 = vmatpush1.xpose.msra.mxu0 %v4073
        %4103 = vmatprep.subr.mxu0 0.0
        %4104 = vmatpush1.xpose.msra.mxu0 %v4071
        %4105 = vmatprep.subr.mxu0 0.0
        %4106 = vmatpush1.xpose.msra.mxu0 %v4069
        %4107 = vmatprep.subr.mxu0 0.0
        %4108 = vmatpush2.xpose.msra.mxu0 0.0
        %4109 = vmatprep.subr.mxu0 0.0
        %4110 = vmatpush2.xpose.msra.mxu0 0.0
        %4111 = vmatprep.subr.mxu0 0.0
        %4112 = vmatpush2.xpose.msra.mxu0 0.0
        %4113 = vmatprep.subr.mxu0 0.0
        %4114 = vmatpush2.xpose.msra.mxu0 0.0
        %4115 = vmatprep.subr.mxu0 0.0
        %4116 = vmatpush2.xpose.msra.mxu0 0.0
        %4117 = vmatprep.subr.mxu0 0.0
        %4118 = vmatpush2.xpose.msra.mxu0 0.0
        %4119 = vmatprep.subr.mxu0 0.0
        %4120 = vmatpush2.xpose.msra.mxu0 0.0
        %4121 = vmatprep.subr.mxu0 0.0
        %4122 = vmatpush2.xpose.msra.mxu0 0.0
        %4123 = vmatprep.subr.mxu0 0.0
        %4124 = vmatpush2.xpose.msra.mxu0 0.0
        %4125 = vmatprep.subr.mxu0 0.0
        %4126 = vmatpush2.xpose.msra.mxu0 0.0
        %4127 = vmatprep.subr.mxu0 0.0
        %4128 = vmatpush2.xpose.msra.mxu0 0.0
        %4129 = vmatprep.subr.mxu0 0.0
        %4130 = vmatpush2.xpose.msra.mxu0 0.0
        %4131 = vmatprep.subr.mxu0 0.0
        %4132 = vmatpush2.xpose.msra.mxu0 0.0
        %4133 = vmatprep.subr.mxu0 0.0
        %4134 = vmatpush2.xpose.msra.mxu0 0.0
        %4135 = vmatprep.subr.mxu0 0.0
        %4136 = vmatpush2.xpose.msra.mxu0 0.0
        %4137 = vmatprep.subr.mxu0 0.0
        %4138 = vmatpush2.xpose.msra.mxu0 0.0
        %4139 = vmatprep.mubr.f32.mxu0 0.0
        %4140 = vmatmul.mubr.f32.gmra.mxu0 %v4063
        %v4141 = vpop.f32.mrf.mxu0
        %v4142 = vadd.f32 0.0, %v4141
        %v4143 = vpop.f32.mrf.mxu0
        %4144 = vmatprep.mubr.f32.mxu0 0.0
        %4145 = vmatmul.mubr.f32.gmra.mxu0 %v4065
        %v4146 = vpop.f32.mrf.mxu0
        %v4147 = vadd.f32 0.0, %v4146
        %v4148 = vpop.f32.mrf.mxu0
        %4149 = vmatprep.mubr.f32.mxu0 0.0
        %4150 = vmatmul.mubr.f32.gmra.mxu0 %v4067
        %v4151 = vpop.f32.mrf.mxu0
        %v4152 = vadd.f32 0.0, %v4151
        %v4153 = vpop.f32.mrf.mxu0
        %4154 = vdwg.mxu0
        %v4155 = vmul.f32 %v4142, 0.17677669
        %v4156 = vmul.f32 %v4147, 0.17677669
        %v4157 = vmul.f32 %v4152, 0.17677669
        %v4158 = vsel %vm1177, %v4155, -inf
        %4159 = vmax.xlane.f32.xlu0 %v4158
        %v4160 = vpop.xlane.xlu0 %4159
        %v4161 = vsel %vm1177, %v4156, -inf
        %4162 = vmax.xlane.f32.xlu0 %v4161
        %v4163 = vpop.xlane.xlu0 %4162
        %v4164 = vsel %vm1184, %v4157, -inf
        %4165 = vmax.xlane.f32.xlu0 %v4164
        %v4166 = vpop.xlane.xlu0 %4165
        %v4167 = vsub.f32 %v4155, %v4160
        %v4168 = vsub.f32 %v4156, %v4163
        %v4169 = vsub.f32 %v4157, %v4166
        %v4170 = vmul.f32 %v4167, 1.442695
        %v4171 = vpow.pop %v4170
        %v4172 = vmul.f32 %v4168, 1.442695
        %v4173 = vpow.pop %v4172
        %v4174 = vmul.f32 %v4169, 1.442695
        %v4175 = vpow.pop %v4174
        %v4176 = vsel %vm1177, %v4171, 0.0
        %4177 = vadd.xlane.f32.xlu0 %v4176
        %v4178 = vpop.xlane.xlu0 %4177
        %v4179 = vsel %vm1177, %v4173, 0.0
        %4180 = vadd.xlane.f32.xlu0 %v4179
        %v4181 = vpop.xlane.xlu0 %4180
        %v4182 = vsel %vm1184, %v4175, 0.0
        %4183 = vadd.xlane.f32.xlu0 %v4182
        %v4184 = vpop.xlane.xlu0 %4183
        %v4185 = vrcp.pop %v4178
        %v4186 = vmul.f32 %v4171, %v4185
        %v4187 = vrcp.pop %v4181
        %v4188 = vmul.f32 %v4173, %v4187
        %v4189 = vrcp.pop %v4184
        %v4190 = vmul.f32 %v4175, %v4189
        %4191 = vrot.lane.b32.xlu0 %v3057, 104
        %v4192 = vpop.permute.xlu0 %4191
        %4193 = vrot.lane.b32.xlu0 %v3062, 104
        %v4194 = vpop.permute.xlu0 %4193
        %4195 = vrot.lane.b32.xlu0 %v3067, 104
        %v4196 = vpop.permute.xlu0 %4195
        %v4200 = vsel %vm1177, %v4186, 0
        %v4203 = vsel %vm1177, %v4188, 0
        %v4206 = vsel %vm1177, %v4190, 0
        %v4208 = vsel %vm1221, %v4196, 0
        %4210 = vmatprep.subr.mxu0 0.0
        %4211 = vmatpush1.msra.mxu0 0.0
        %4212 = vmatprep.subr.mxu0 0.0
        %4213 = vmatpush1.msra.mxu0 0.0
        %4214 = vmatprep.subr.mxu0 0.0
        %4215 = vmatpush1.msra.mxu0 0.0
        %4216 = vmatprep.subr.mxu0 0.0
        %4217 = vmatpush1.msra.mxu0 0.0
        %4218 = vmatprep.subr.mxu0 0.0
        %4219 = vmatpush1.msra.mxu0 0.0
        %4220 = vmatprep.subr.mxu0 0.0
        %4221 = vmatpush1.msra.mxu0 0.0
        %4222 = vmatprep.subr.mxu0 0.0
        %4223 = vmatpush1.msra.mxu0 0.0
        %4224 = vmatprep.subr.mxu0 0.0
        %4225 = vmatpush1.msra.mxu0 0.0
        %4226 = vmatprep.subr.mxu0 0.0
        %4227 = vmatpush1.msra.mxu0 0.0
        %4228 = vmatprep.subr.mxu0 0.0
        %4229 = vmatpush1.msra.mxu0 0.0
        %4230 = vmatprep.subr.mxu0 0.0
        %4231 = vmatpush1.msra.mxu0 0.0
        %4232 = vmatprep.subr.mxu0 0.0
        %4233 = vmatpush1.msra.mxu0 0.0
        %4234 = vmatprep.subr.mxu0 0.0
        %4235 = vmatpush1.msra.mxu0 0.0
        %4236 = vmatprep.subr.mxu0 0.0
        %4237 = vmatpush1.msra.mxu0 %v4208
        %4238 = vmatprep.subr.mxu0 0.0
        %4239 = vmatpush1.msra.mxu0 %v4194
        %4240 = vmatprep.subr.mxu0 0.0
        %4241 = vmatpush1.msra.mxu0 %v4192
        %4242 = vmatprep.subr.mxu0 0.0
        %4243 = vmatpush2.msra.mxu0 0.0
        %4244 = vmatprep.subr.mxu0 0.0
        %4245 = vmatpush2.msra.mxu0 0.0
        %4246 = vmatprep.subr.mxu0 0.0
        %4247 = vmatpush2.msra.mxu0 0.0
        %4248 = vmatprep.subr.mxu0 0.0
        %4249 = vmatpush2.msra.mxu0 0.0
        %4250 = vmatprep.subr.mxu0 0.0
        %4251 = vmatpush2.msra.mxu0 0.0
        %4252 = vmatprep.subr.mxu0 0.0
        %4253 = vmatpush2.msra.mxu0 0.0
        %4254 = vmatprep.subr.mxu0 0.0
        %4255 = vmatpush2.msra.mxu0 0.0
        %4256 = vmatprep.subr.mxu0 0.0
        %4257 = vmatpush2.msra.mxu0 0.0
        %4258 = vmatprep.subr.mxu0 0.0
        %4259 = vmatpush2.msra.mxu0 0.0
        %4260 = vmatprep.subr.mxu0 0.0
        %4261 = vmatpush2.msra.mxu0 0.0
        %4262 = vmatprep.subr.mxu0 0.0
        %4263 = vmatpush2.msra.mxu0 0.0
        %4264 = vmatprep.subr.mxu0 0.0
        %4265 = vmatpush2.msra.mxu0 0.0
        %4266 = vmatprep.subr.mxu0 0.0
        %4267 = vmatpush2.msra.mxu0 0.0
        %4268 = vmatprep.subr.mxu0 0.0
        %4269 = vmatpush2.msra.mxu0 0.0
        %4270 = vmatprep.subr.mxu0 0.0
        %4271 = vmatpush2.msra.mxu0 0.0
        %4272 = vmatprep.subr.mxu0 0.0
        %4273 = vmatpush2.msra.mxu0 0.0
        %4274 = vmatprep.mubr.f32.mxu0 0.0
        %4275 = vmatmul.mubr.f32.gmra.mxu0 %v4200
        %v4276 = vpop.f32.mrf.mxu0
        %v4277 = vadd.f32 0.0, %v4276
        %v4278 = vpop.f32.mrf.mxu0
        %4279 = vmatprep.mubr.f32.mxu0 0.0
        %4280 = vmatmul.mubr.f32.gmra.mxu0 %v4203
        %v4281 = vpop.f32.mrf.mxu0
        %v4282 = vadd.f32 0.0, %v4281
        %v4283 = vpop.f32.mrf.mxu0
        %4284 = vmatprep.mubr.f32.mxu0 0.0
        %4285 = vmatmul.mubr.f32.gmra.mxu0 %v4206
        %v4286 = vpop.f32.mrf.mxu0
        %v4287 = vadd.f32 0.0, %v4286
        %v4288 = vpop.f32.mrf.mxu0
        %4289 = vdwg.mxu0
        %v4291 = vsel %vm1075, %v4277, 0
        %v4294 = vsel %vm1075, %v4282, 0
        %v4297 = vsel %vm1075, %v4287, 0
        %4299 = vmatprep.subr.mxu0 0.0
        %4300 = vmatpush1.msra.mxu0 0.0
        %4301 = vmatprep.subr.mxu0 0.0
        %4302 = vmatpush1.msra.mxu0 0.0
        %4303 = vmatprep.subr.mxu0 0.0
        %4304 = vmatpush1.msra.mxu0 0.0
        %4305 = vmatprep.subr.mxu0 0.0
        %4306 = vmatpush1.msra.mxu0 0.0
        %4307 = vmatprep.subr.mxu0 0.0
        %4308 = vmatpush1.msra.mxu0 0.0
        %4309 = vmatprep.subr.mxu0 0.0
        %4310 = vmatpush1.msra.mxu0 0.0
        %4311 = vmatprep.subr.mxu0 0.0
        %4312 = vmatpush1.msra.mxu0 0.0
        %4313 = vmatprep.subr.mxu0 0.0
        %4314 = vmatpush1.msra.mxu0 0.0
        %4315 = vmatprep.subr.mxu0 0.0
        %4316 = vmatpush1.msra.mxu0 0.0
        %4317 = vmatprep.subr.mxu0 0.0
        %4318 = vmatpush1.msra.mxu0 0.0
        %4319 = vmatprep.subr.mxu0 0.0
        %4320 = vmatpush1.msra.mxu0 0.0
        %4321 = vmatprep.subr.mxu0 0.0
        %4322 = vmatpush1.msra.mxu0 0.0
        %4323 = vmatprep.subr.mxu0 0.0
        %4324 = vmatpush1.msra.mxu0 0.0
        %4325 = vmatprep.subr.mxu0 0.0
        %4326 = vmatpush1.msra.mxu0 0.0
        %4327 = vmatprep.subr.mxu0 0.0
        %4328 = vmatpush1.msra.mxu0 0.0
        %4329 = vmatprep.subr.mxu0 0.0
        %4330 = vmatpush1.msra.mxu0 %v3074
        %4331 = vmatprep.subr.mxu0 0.0
        %4332 = vmatpush2.msra.mxu0 0.0
        %4333 = vmatprep.subr.mxu0 0.0
        %4334 = vmatpush2.msra.mxu0 0.0
        %4335 = vmatprep.subr.mxu0 0.0
        %4336 = vmatpush2.msra.mxu0 0.0
        %4337 = vmatprep.subr.mxu0 0.0
        %4338 = vmatpush2.msra.mxu0 0.0
        %4339 = vmatprep.subr.mxu0 0.0
        %4340 = vmatpush2.msra.mxu0 0.0
        %4341 = vmatprep.subr.mxu0 0.0
        %4342 = vmatpush2.msra.mxu0 0.0
        %4343 = vmatprep.subr.mxu0 0.0
        %4344 = vmatpush2.msra.mxu0 0.0
        %4345 = vmatprep.subr.mxu0 0.0
        %4346 = vmatpush2.msra.mxu0 0.0
        %4347 = vmatprep.subr.mxu0 0.0
        %4348 = vmatpush2.msra.mxu0 0.0
        %4349 = vmatprep.subr.mxu0 0.0
        %4350 = vmatpush2.msra.mxu0 0.0
        %4351 = vmatprep.subr.mxu0 0.0
        %4352 = vmatpush2.msra.mxu0 0.0
        %4353 = vmatprep.subr.mxu0 0.0
        %4354 = vmatpush2.msra.mxu0 0.0
        %4355 = vmatprep.subr.mxu0 0.0
        %4356 = vmatpush2.msra.mxu0 0.0
        %4357 = vmatprep.subr.mxu0 0.0
        %4358 = vmatpush2.msra.mxu0 0.0
        %4359 = vmatprep.subr.mxu0 0.0
        %4360 = vmatpush2.msra.mxu0 0.0
        %4361 = vmatprep.subr.mxu0 0.0
        %4362 = vmatpush2.msra.mxu0 0.0
        %4363 = vmatprep.mubr.f32.mxu0 0.0
        %4364 = vmatmul.mubr.f32.gmra.mxu0 %v4291
        %v4365 = vpop.f32.mrf.mxu0
        %v4366 = vadd.f32 0.0, %v4365
        %v4367 = vpop.f32.mrf.mxu0
        %4368 = vmatprep.mubr.f32.mxu0 0.0
        %4369 = vmatmul.mubr.f32.gmra.mxu0 %v4294
        %v4370 = vpop.f32.mrf.mxu0
        %v4371 = vadd.f32 0.0, %v4370
        %v4372 = vpop.f32.mrf.mxu0
        %4373 = vmatprep.mubr.f32.mxu0 0.0
        %4374 = vmatmul.mubr.f32.gmra.mxu0 %v4297
        %v4375 = vpop.f32.mrf.mxu0
        %v4376 = vadd.f32 0.0, %v4375
        %v4377 = vpop.f32.mrf.mxu0
        %4378 = vdwg.mxu0
        %v4379 = vadd.f32 %v4048, %v4366
        %v4380 = vadd.f32 %v4049, %v4371
        %v4381 = vadd.f32 %v4050, %v4376
        %v4382 = vadd.f32 %v2742, %v4379
        %v4383 = vadd.f32 %v2743, %v4380
        %v4384 = vadd.f32 %v2744, %v4381
        %s4385 = scalar_lea.vmem %s10, 1
        %v4386 = vld [vmem:[%s4385] sm:$0x1]
        %v4388 = vlaneseq
        %v4389 = vshrl.u32 %v4388, 7
        %v4390 = vsub.s32 0, %v4389
        %v4391 = vrot.slane %v4386, %v4390
        %v4393 = vadd.f32 %v4382, %v4391
        %v4394 = vadd.f32 %v4383, %v4391
        %v4395 = vadd.f32 %v4384, %v4391
        %s4396 = scalar_lea.vmem %s11, 1
        %v4397 = vld [vmem:[%s4396] sm:$0x1]
        %s4398 = scalar_lea.vmem %s12, 1
        %v4399 = vld [vmem:[%s4398] sm:$0x1]
        %v4400 = vsel %vm750, %v4393, 0.0
        %4401 = vadd.xlane.f32.xlu0 %v4400
        %v4402 = vpop.xlane.xlu0 %4401
        %v4403 = vsel %vm750, %v4394, 0.0
        %4404 = vadd.xlane.f32.xlu0 %v4403
        %v4405 = vpop.xlane.xlu0 %4404
        %v4406 = vsel %vm757, %v4395, 0.0
        %4407 = vadd.xlane.f32.xlu0 %v4406
        %v4408 = vpop.xlane.xlu0 %4407
        %v4409 = vmul.f32 %v4402, %v761
        %v4410 = vmul.f32 %v4405, %v761
        %v4411 = vmul.f32 %v4408, %v761
        %v4412 = vsub.f32 %v4393, %v4409
        %v4413 = vsub.f32 %v4394, %v4410
        %v4414 = vsub.f32 %v4395, %v4411
        %v4415 = vmul.f32 %v4412, %v4412
        %v4416 = vmul.f32 %v4413, %v4413
        %v4417 = vmul.f32 %v4414, %v4414
        %v4418 = vsel %vm750, %v4415, 0.0
        %4419 = vadd.xlane.f32.xlu0 %v4418
        %v4420 = vpop.xlane.xlu0 %4419
        %v4421 = vsel %vm750, %v4416, 0.0
        %4422 = vadd.xlane.f32.xlu0 %v4421
        %v4423 = vpop.xlane.xlu0 %4422
        %v4424 = vsel %vm757, %v4417, 0.0
        %4425 = vadd.xlane.f32.xlu0 %v4424
        %v4426 = vpop.xlane.xlu0 %4425
        %v4427 = vmul.f32 %v4420, %v761
        %v4428 = vmul.f32 %v4423, %v761
        %v4429 = vmul.f32 %v4426, %v761
        %v4430 = vadd.f32 %v4427, 1e-05
        %v4431 = vadd.f32 %v4428, 1e-05
        %v4432 = vadd.f32 %v4429, 1e-05
        %v4433 = vrsqrt.pop %v4430
        %v4434 = vrsqrt.pop %v4431
        %v4435 = vrsqrt.pop %v4432
        %v4436 = vmul.f32 %v4412, %v4433
        %v4437 = vmul.f32 %v4413, %v4434
        %v4438 = vmul.f32 %v4414, %v4435
        %v4440 = vlaneseq
        %v4441 = vshrl.u32 %v4440, 7
        %v4442 = vsub.s32 0, %v4441
        %v4443 = vrot.slane %v4397, %v4442
        %v4445 = vmul.f32 %v4436, %v4443
        %v4446 = vmul.f32 %v4437, %v4443
        %v4447 = vmul.f32 %v4438, %v4443
        %v4449 = vlaneseq
        %v4450 = vshrl.u32 %v4449, 7
        %v4451 = vsub.s32 0, %v4450
        %v4452 = vrot.slane %v4399, %v4451
        %v4454 = vadd.f32 %v4445, %v4452
        %v4455 = vadd.f32 %v4446, %v4452
        %v4456 = vadd.f32 %v4447, %v4452
        %s4457 = scalar_lea.vmem %s13, 32
        %v4458 = vld [vmem:[%s4457] sm:$0xff]
        %v4459 = vld [vmem:[%s4457 + $0x8] sm:$0xff]
        %v4460 = vld [vmem:[%s4457 + $0x10] sm:$0xff]
        %v4461 = vld [vmem:[%s4457 + $0x18] sm:$0xff]
        %s4462 = scalar_lea.vmem %s14, 1
        %v4463 = vld [vmem:[%s4462] sm:$0x1]
        %v4465 = vlaneseq
        %v4466 = vshrl.u32 %v4465, 7
        %v4467 = vsub.s32 0, %v4466
        %v4468 = vrot.slane %v4463, %v4467
        %v4471 = vsel %vm750, %v4454, 0
        %v4474 = vsel %vm750, %v4455, 0
        %v4477 = vsel %vm750, %v4456, 0
        %4479 = vmatprep.subr.mxu0 0.0
        %4480 = vmatpush1.msra.mxu0 0.0
        %4481 = vmatprep.subr.mxu0 0.0
        %4482 = vmatpush1.msra.mxu0 0.0
        %4483 = vmatprep.subr.mxu0 0.0
        %4484 = vmatpush1.msra.mxu0 0.0
        %4485 = vmatprep.subr.mxu0 0.0
        %4486 = vmatpush1.msra.mxu0 0.0
        %4487 = vmatprep.subr.mxu0 0.0
        %4488 = vmatpush1.msra.mxu0 0.0
        %4489 = vmatprep.subr.mxu0 0.0
        %4490 = vmatpush1.msra.mxu0 0.0
        %4491 = vmatprep.subr.mxu0 0.0
        %4492 = vmatpush1.msra.mxu0 0.0
        %4493 = vmatprep.subr.mxu0 0.0
        %4494 = vmatpush1.msra.mxu0 0.0
        %4495 = vmatprep.subr.mxu0 0.0
        %4496 = vmatpush1.msra.mxu0 0.0
        %4497 = vmatprep.subr.mxu0 0.0
        %4498 = vmatpush1.msra.mxu0 0.0
        %4499 = vmatprep.subr.mxu0 0.0
        %4500 = vmatpush1.msra.mxu0 0.0
        %4501 = vmatprep.subr.mxu0 0.0
        %4502 = vmatpush1.msra.mxu0 0.0
        %4503 = vmatprep.subr.mxu0 0.0
        %4504 = vmatpush1.msra.mxu0 %v4461
        %4505 = vmatprep.subr.mxu0 0.0
        %4506 = vmatpush1.msra.mxu0 %v4460
        %4507 = vmatprep.subr.mxu0 0.0
        %4508 = vmatpush1.msra.mxu0 %v4459
        %4509 = vmatprep.subr.mxu0 0.0
        %4510 = vmatpush1.msra.mxu0 %v4458
        %4511 = vmatprep.subr.mxu0 0.0
        %4512 = vmatpush2.msra.mxu0 0.0
        %4513 = vmatprep.subr.mxu0 0.0
        %4514 = vmatpush2.msra.mxu0 0.0
        %4515 = vmatprep.subr.mxu0 0.0
        %4516 = vmatpush2.msra.mxu0 0.0
        %4517 = vmatprep.subr.mxu0 0.0
        %4518 = vmatpush2.msra.mxu0 0.0
        %4519 = vmatprep.subr.mxu0 0.0
        %4520 = vmatpush2.msra.mxu0 0.0
        %4521 = vmatprep.subr.mxu0 0.0
        %4522 = vmatpush2.msra.mxu0 0.0
        %4523 = vmatprep.subr.mxu0 0.0
        %4524 = vmatpush2.msra.mxu0 0.0
        %4525 = vmatprep.subr.mxu0 0.0
        %4526 = vmatpush2.msra.mxu0 0.0
        %4527 = vmatprep.subr.mxu0 0.0
        %4528 = vmatpush2.msra.mxu0 0.0
        %4529 = vmatprep.subr.mxu0 0.0
        %4530 = vmatpush2.msra.mxu0 0.0
        %4531 = vmatprep.subr.mxu0 0.0
        %4532 = vmatpush2.msra.mxu0 0.0
        %4533 = vmatprep.subr.mxu0 0.0
        %4534 = vmatpush2.msra.mxu0 0.0
        %4535 = vmatprep.subr.mxu0 0.0
        %4536 = vmatpush2.msra.mxu0 0.0
        %4537 = vmatprep.subr.mxu0 0.0
        %4538 = vmatpush2.msra.mxu0 0.0
        %4539 = vmatprep.subr.mxu0 0.0
        %4540 = vmatpush2.msra.mxu0 0.0
        %4541 = vmatprep.subr.mxu0 0.0
        %4542 = vmatpush2.msra.mxu0 0.0
        %4543 = vmatprep.mubr.f32.mxu0 0.0
        %4544 = vmatmul.mubr.f32.gmra.mxu0 %v4471
        %v4545 = vpop.f32.mrf.mxu0
        %v4546 = vadd.f32 %v4468, %v4545
        %v4547 = vpop.f32.mrf.mxu0
        %4548 = vmatprep.mubr.f32.mxu0 0.0
        %4549 = vmatmul.mubr.f32.gmra.mxu0 %v4474
        %v4550 = vpop.f32.mrf.mxu0
        %v4551 = vadd.f32 %v4468, %v4550
        %v4552 = vpop.f32.mrf.mxu0
        %4553 = vmatprep.mubr.f32.mxu0 0.0
        %4554 = vmatmul.mubr.f32.gmra.mxu0 %v4477
        %v4555 = vpop.f32.mrf.mxu0
        %v4556 = vadd.f32 %v4468, %v4555
        %v4557 = vpop.f32.mrf.mxu0
        %4558 = vdwg.mxu0
        %v4559 = vmul.f32 %v4546, 0.5
        %v4560 = vmul.f32 %v4551, 0.5
        %v4561 = vmul.f32 %v4556, 0.5
        %v4562 = vmul.f32 %v4546, 0.70710677
        %v4563 = vmul.f32 %v4551, 0.70710677
        %v4564 = vmul.f32 %v4556, 0.70710677
        %v4565 = vand.u32 2147483647, %v4562
        %v4566 = vand.u32 2147483647, %v4563
        %v4567 = vand.u32 2147483647, %v4564
        %v4568 = vmul.f32 %v4565, 0.3275911
        %v4569 = vmul.f32 %v4566, 0.3275911
        %v4570 = vmul.f32 %v4567, 0.3275911
        %v4571 = vadd.f32 %v4568, 1.0
        %v4572 = vadd.f32 %v4569, 1.0
        %v4573 = vadd.f32 %v4570, 1.0
        %v4574 = vrcp.pop %v4571
        %v4575 = vmul.f32 1.0, %v4574
        %v4576 = vrcp.pop %v4572
        %v4577 = vmul.f32 1.0, %v4576
        %v4578 = vrcp.pop %v4573
        %v4579 = vmul.f32 1.0, %v4578
        %v4580 = vmul.f32 %v4575, 1.0614054
        %v4581 = vmul.f32 %v4577, 1.0614054
        %v4582 = vmul.f32 %v4579, 1.0614054
        %v4583 = vadd.f32 %v4580, -1.4531521
        %v4584 = vadd.f32 %v4581, -1.4531521
        %v4585 = vadd.f32 %v4582, -1.4531521
        %v4586 = vmul.f32 %v4583, %v4575
        %v4587 = vmul.f32 %v4584, %v4577
        %v4588 = vmul.f32 %v4585, %v4579
        %v4589 = vadd.f32 %v4586, 1.4214138
        %v4590 = vadd.f32 %v4587, 1.4214138
        %v4591 = vadd.f32 %v4588, 1.4214138
        %v4592 = vmul.f32 %v4589, %v4575
        %v4593 = vmul.f32 %v4590, %v4577
        %v4594 = vmul.f32 %v4591, %v4579
        %v4595 = vadd.f32 %v4592, -0.28449672
        %v4596 = vadd.f32 %v4593, -0.28449672
        %v4597 = vadd.f32 %v4594, -0.28449672
        %v4598 = vmul.f32 %v4595, %v4575
        %v4599 = vmul.f32 %v4596, %v4577
        %v4600 = vmul.f32 %v4597, %v4579
        %v4601 = vadd.f32 %v4598, 0.2548296
        %v4602 = vadd.f32 %v4599, 0.2548296
        %v4603 = vadd.f32 %v4600, 0.2548296
        %v4604 = vmul.f32 %v4601, %v4575
        %v4605 = vmul.f32 %v4602, %v4577
        %v4606 = vmul.f32 %v4603, %v4579
        %v4607 = vsub.f32 0.0, %v4565
        %v4608 = vsub.f32 0.0, %v4566
        %v4609 = vsub.f32 0.0, %v4567
        %v4610 = vmul.f32 %v4607, %v4565
        %v4611 = vmul.f32 %v4608, %v4566
        %v4612 = vmul.f32 %v4609, %v4567
        %v4613 = vmul.f32 %v4610, 1.442695
        %v4614 = vpow.pop %v4613
        %v4615 = vmul.f32 %v4611, 1.442695
        %v4616 = vpow.pop %v4615
        %v4617 = vmul.f32 %v4612, 1.442695
        %v4618 = vpow.pop %v4617
        %v4619 = vmul.f32 %v4604, %v4614
        %v4620 = vmul.f32 %v4605, %v4616
        %v4621 = vmul.f32 %v4606, %v4618
        %v4622 = vsub.f32 1.0, %v4619
        %v4623 = vsub.f32 1.0, %v4620
        %v4624 = vsub.f32 1.0, %v4621
        %vm4625 = vcmp.lt.f32.partialorder %v4562, 0.0
        %vm4626 = vcmp.lt.f32.partialorder %v4563, 0.0
        %vm4627 = vcmp.lt.f32.partialorder %v4564, 0.0
        %v4628 = vsub.f32 0.0, %v4622
        %v4629 = vsub.f32 0.0, %v4623
        %v4630 = vsub.f32 0.0, %v4624
        %v4631 = vsel %vm4625, %v4628, %v4622
        %v4632 = vsel %vm4626, %v4629, %v4623
        %v4633 = vsel %vm4627, %v4630, %v4624
        %v4634 = vadd.f32 %v4631, 1.0
        %v4635 = vadd.f32 %v4632, 1.0
        %v4636 = vadd.f32 %v4633, 1.0
        %v4637 = vmul.f32 %v4559, %v4634
        %v4638 = vmul.f32 %v4560, %v4635
        %v4639 = vmul.f32 %v4561, %v4636
        %s4640 = scalar_lea.vmem %s15, 128
        %v4641 = vld [vmem:[%s4640] sm:$0xff]
        %v4642 = vld [vmem:[%s4640 + $0x8] sm:$0xff]
        %v4643 = vld [vmem:[%s4640 + $0x10] sm:$0xff]
        %v4644 = vld [vmem:[%s4640 + $0x18] sm:$0xff]
        %v4645 = vld [vmem:[%s4640 + $0x20] sm:$0xff]
        %v4646 = vld [vmem:[%s4640 + $0x28] sm:$0xff]
        %v4647 = vld [vmem:[%s4640 + $0x30] sm:$0xff]
        %v4648 = vld [vmem:[%s4640 + $0x38] sm:$0xff]
        %v4649 = vld [vmem:[%s4640 + $0x40] sm:$0xff]
        %v4650 = vld [vmem:[%s4640 + $0x48] sm:$0xff]
        %v4651 = vld [vmem:[%s4640 + $0x50] sm:$0xff]
        %v4652 = vld [vmem:[%s4640 + $0x58] sm:$0xff]
        %v4653 = vld [vmem:[%s4640 + $0x60] sm:$0xff]
        %v4654 = vld [vmem:[%s4640 + $0x68] sm:$0xff]
        %v4655 = vld [vmem:[%s4640 + $0x70] sm:$0xff]
        %v4656 = vld [vmem:[%s4640 + $0x78] sm:$0xff]
        %s4657 = scalar_lea.vmem [#allocation5], 1
        %v4658 = vld [vmem:[%s4657] sm:$0x1]
        %v4660 = vlaneseq
        %v4661 = vshrl.u32 %v4660, 7
        %v4662 = vsub.s32 0, %v4661
        %v4663 = vrot.slane %v4658, %v4662
        %4665 = vmatprep.subr.mxu0 0.0
        %4666 = vmatpush1.msra.mxu0 %v4656
        %4667 = vmatprep.subr.mxu0 0.0
        %4668 = vmatpush1.msra.mxu0 %v4655
        %4669 = vmatprep.subr.mxu0 0.0
        %4670 = vmatpush1.msra.mxu0 %v4654
        %4671 = vmatprep.subr.mxu0 0.0
        %4672 = vmatpush1.msra.mxu0 %v4653
        %4673 = vmatprep.subr.mxu0 0.0
        %4674 = vmatpush1.msra.mxu0 %v4652
        %4675 = vmatprep.subr.mxu0 0.0
        %4676 = vmatpush1.msra.mxu0 %v4651
        %4677 = vmatprep.subr.mxu0 0.0
        %4678 = vmatpush1.msra.mxu0 %v4650
        %4679 = vmatprep.subr.mxu0 0.0
        %4680 = vmatpush1.msra.mxu0 %v4649
        %4681 = vmatprep.subr.mxu0 0.0
        %4682 = vmatpush1.msra.mxu0 %v4648
        %4683 = vmatprep.subr.mxu0 0.0
        %4684 = vmatpush1.msra.mxu0 %v4647
        %4685 = vmatprep.subr.mxu0 0.0
        %4686 = vmatpush1.msra.mxu0 %v4646
        %4687 = vmatprep.subr.mxu0 0.0
        %4688 = vmatpush1.msra.mxu0 %v4645
        %4689 = vmatprep.subr.mxu0 0.0
        %4690 = vmatpush1.msra.mxu0 %v4644
        %4691 = vmatprep.subr.mxu0 0.0
        %4692 = vmatpush1.msra.mxu0 %v4643
        %4693 = vmatprep.subr.mxu0 0.0
        %4694 = vmatpush1.msra.mxu0 %v4642
        %4695 = vmatprep.subr.mxu0 0.0
        %4696 = vmatpush1.msra.mxu0 %v4641
        %4697 = vmatprep.subr.mxu0 0.0
        %4698 = vmatpush2.msra.mxu0 0.0
        %4699 = vmatprep.subr.mxu0 0.0
        %4700 = vmatpush2.msra.mxu0 0.0
        %4701 = vmatprep.subr.mxu0 0.0
        %4702 = vmatpush2.msra.mxu0 0.0
        %4703 = vmatprep.subr.mxu0 0.0
        %4704 = vmatpush2.msra.mxu0 0.0
        %4705 = vmatprep.subr.mxu0 0.0
        %4706 = vmatpush2.msra.mxu0 0.0
        %4707 = vmatprep.subr.mxu0 0.0
        %4708 = vmatpush2.msra.mxu0 0.0
        %4709 = vmatprep.subr.mxu0 0.0
        %4710 = vmatpush2.msra.mxu0 0.0
        %4711 = vmatprep.subr.mxu0 0.0
        %4712 = vmatpush2.msra.mxu0 0.0
        %4713 = vmatprep.subr.mxu0 0.0
        %4714 = vmatpush2.msra.mxu0 0.0
        %4715 = vmatprep.subr.mxu0 0.0
        %4716 = vmatpush2.msra.mxu0 0.0
        %4717 = vmatprep.subr.mxu0 0.0
        %4718 = vmatpush2.msra.mxu0 0.0
        %4719 = vmatprep.subr.mxu0 0.0
        %4720 = vmatpush2.msra.mxu0 0.0
        %4721 = vmatprep.subr.mxu0 0.0
        %4722 = vmatpush2.msra.mxu0 0.0
        %4723 = vmatprep.subr.mxu0 0.0
        %4724 = vmatpush2.msra.mxu0 0.0
        %4725 = vmatprep.subr.mxu0 0.0
        %4726 = vmatpush2.msra.mxu0 0.0
        %4727 = vmatprep.subr.mxu0 0.0
        %4728 = vmatpush2.msra.mxu0 0.0
        %4729 = vmatprep.mubr.f32.mxu0 0.0
        %4730 = vmatmul.mubr.f32.gmra.mxu0 %v4637
        %v4731 = vpop.f32.mrf.mxu0
        %v4732 = vadd.f32 %v4663, %v4731
        %v4733 = vpop.f32.mrf.mxu0
        %4734 = vmatprep.mubr.f32.mxu0 0.0
        %4735 = vmatmul.mubr.f32.gmra.mxu0 %v4638
        %v4736 = vpop.f32.mrf.mxu0
        %v4737 = vadd.f32 %v4663, %v4736
        %v4738 = vpop.f32.mrf.mxu0
        %4739 = vmatprep.mubr.f32.mxu0 0.0
        %4740 = vmatmul.mubr.f32.gmra.mxu0 %v4639
        %v4741 = vpop.f32.mrf.mxu0
        %v4742 = vadd.f32 %v4663, %v4741
        %v4743 = vpop.f32.mrf.mxu0
        %4744 = vdwg.mxu0
        %v4745 = vadd.f32 %v4393, %v4732
        %v4746 = vadd.f32 %v4394, %v4737
        %v4747 = vadd.f32 %v4395, %v4742
        %v4748 = vld [vmem:[#allocation7] sm:$0x1]
        %v4749 = vld [vmem:[%s18] sm:$0x1]
        %v4750 = vsel %vm750, %v4745, 0.0
        %4751 = vadd.xlane.f32.xlu0 %v4750
        %v4752 = vpop.xlane.xlu0 %4751
        %v4753 = vsel %vm750, %v4746, 0.0
        %4754 = vadd.xlane.f32.xlu0 %v4753
        %v4755 = vpop.xlane.xlu0 %4754
        %v4756 = vsel %vm757, %v4747, 0.0
        %4757 = vadd.xlane.f32.xlu0 %v4756
        %v4758 = vpop.xlane.xlu0 %4757
        %v4759 = vmul.f32 %v4752, %v761
        %v4760 = vmul.f32 %v4755, %v761
        %v4761 = vmul.f32 %v4758, %v761
        %v4762 = vsub.f32 %v4745, %v4759
        %v4763 = vsub.f32 %v4746, %v4760
        %v4764 = vsub.f32 %v4747, %v4761
        %v4765 = vmul.f32 %v4762, %v4762
        %v4766 = vmul.f32 %v4763, %v4763
        %v4767 = vmul.f32 %v4764, %v4764
        %v4768 = vsel %vm750, %v4765, 0.0
        %4769 = vadd.xlane.f32.xlu0 %v4768
        %v4770 = vpop.xlane.xlu0 %4769
        %v4771 = vsel %vm750, %v4766, 0.0
        %4772 = vadd.xlane.f32.xlu0 %v4771
        %v4773 = vpop.xlane.xlu0 %4772
        %v4774 = vsel %vm757, %v4767, 0.0
        %4775 = vadd.xlane.f32.xlu0 %v4774
        %v4776 = vpop.xlane.xlu0 %4775
        %v4777 = vmul.f32 %v4770, %v761
        %v4778 = vmul.f32 %v4773, %v761
        %v4779 = vmul.f32 %v4776, %v761
        %v4780 = vadd.f32 %v4777, 1e-05
        %v4781 = vadd.f32 %v4778, 1e-05
        %v4782 = vadd.f32 %v4779, 1e-05
        %v4783 = vrsqrt.pop %v4780
        %v4784 = vrsqrt.pop %v4781
        %v4785 = vrsqrt.pop %v4782
        %v4786 = vmul.f32 %v4762, %v4783
        %v4787 = vmul.f32 %v4763, %v4784
        %v4788 = vmul.f32 %v4764, %v4785
        %v4790 = vlaneseq
        %v4791 = vshrl.u32 %v4790, 7
        %v4792 = vsub.s32 0, %v4791
        %v4793 = vrot.slane %v4748, %v4792
        %v4795 = vmul.f32 %v4786, %v4793
        %v4796 = vmul.f32 %v4787, %v4793
        %v4797 = vmul.f32 %v4788, %v4793
        %v4799 = vlaneseq
        %v4800 = vshrl.u32 %v4799, 7
        %v4801 = vsub.s32 0, %v4800
        %v4802 = vrot.slane %v4749, %v4801
        %v4804 = vadd.f32 %v4795, %v4802
        %v4805 = vadd.f32 %v4796, %v4802
        %v4806 = vadd.f32 %v4797, %v4802
        %v4807 = vmul.f32 %v4804, %v726
        %v4808 = vmul.f32 %v4805, %v727
        %v4809 = vmul.f32 %v4806, %v728
        %v4810 = vsel %vm750, %v4807, 0.0
        %v4811 = vsel %vm750, %v4808, 0.0
        %v4812 = vadd.f32 %v4810, %v4811
        %v4813 = vsel %vm757, %v4809, 0.0
        %v4814 = vadd.f32 %v4812, %v4813
        %v4815 = vrot.slane %v4814, 4
        %v4816 = vadd.f32 %v4814, %v4815
        %v4817 = vrot.slane %v4816, 2
        %v4818 = vadd.f32 %v4816, %v4817
        %v4819 = vrot.slane %v4818, 1
        %v4820 = vadd.f32 %v4818, %v4819
        %v4821 = vrcp.pop 16.0
        %v4822 = vmul.f32 %v4820, %v4821
        %v4823 = vsel %vm750, %v4822, 0.0
        %4824 = vadd.xlane.f32.xlu0 %v4823
        %v4825 = vpop.xlane.xlu0 %4824
        %v4826 = vmul.f32 %v4825, %v761
        %v4827 = vsub.f32 %v4822, %v4826
        %v4828 = vmul.f32 %v4827, %v4827
        %v4829 = vsel %vm750, %v4828, 0.0
        %4830 = vadd.xlane.f32.xlu0 %v4829
        %v4831 = vpop.xlane.xlu0 %4830
        %v4832 = vmul.f32 %v4831, %v761
        %v4833 = vadd.f32 %v4832, 1e-05
        %v4834 = vrsqrt.pop %v4833
        %v4835 = vmul.f32 %v4827, %v4834
        %v4836 = vmul.f32 %v4835, %v4748
        %v4837 = vadd.f32 %v4836, %v4749
        %4838 = vst.msk [vmem:[%s637] sm:$0x1] %vm757, %v4837
        %4839 = vst.msk [vmem:[%s637 + $0x1] sm:$0x1] %vm757, %v4804
        %s4840 = sand.u32 %s447, 1
        %s4841 = scalar_lea.sflag [#allocation4], %s4840
        %s4842 = sand.u32 %s447, 1
        %s4843 = smul.addr %s4842, 2
        %s4844 = scalar_lea.vmem [#allocation8], %s4843
        // Predicated region
        $region109: #{tpu_custom_call.1} parent=95 // pred_check
          %p4845 = pneg %p457
        $region110: #{tpu_custom_call.1} parent=95 // pred_check_branch
          %4847 = sbr.rel (%p4845) target = $region112
        $region111: #{tpu_custom_call.1} parent=95 // pred_region
          %s4849 = ssub.s32 32, 32
          %4850 = vsyncadd %s4841, %s4849
          %s4851 = smul.addr %s35, 32
          %s4852 = scalar_lea.hbm %s19, %s4851
          %s4854 = sshll.u32 %s4844, 4
          %s4855 = int_to_ptr.vmem [resolvable:$true] %s4854
          %4857 = dma.vmem_to_hbm [thread:$0]  %s4855, 32, %s4852, %s4841
        $region112: #{tpu_custom_call.1} parent=95 // pred_fallthru
          _
      $region96: #{tpu_custom_call.1} parent=5 // pred_fallthru
        _
      %p4858 = scmp.le.s32.totalorder 2, %s30
      // Predicated region
      $region113: #{tpu_custom_call.1} parent=5 // pred_check
        %p4859 = pneg %p4858
      $region114: #{tpu_custom_call.1} parent=5 // pred_check_branch
        %4861 = sbr.rel (%p4859) target = $region116
      $region115: #{tpu_custom_call.1} parent=5 // pred_region
        %s4862 = ssub.s32 %s30, 2
        // Predicated region
        $region117: #{tpu_custom_call.1} parent=115 // pred_check
          %p4863 = pneg %p463
        $region118: #{tpu_custom_call.1} parent=115 // pred_check_branch
          %4865 = sbr.rel (%p4863) target = $region120
        $region119: #{tpu_custom_call.1} parent=115 // pred_region
          %s4866 = sand.u32 %s448, 1
          %s4867 = scalar_lea.sflag [#allocation4], %s4866
          %s4868 = sand.u32 %s448, 1
          %s4869 = smul.addr %s4868, 2
          %s4870 = scalar_lea.vmem [#allocation8], %s4869
          %4871 = dma.done %s4867, 32
        $region120: #{tpu_custom_call.1} parent=115 // pred_fallthru
          _
      $region116: #{tpu_custom_call.1} parent=5 // pred_fallthru
        _
    $region6: #{tpu_custom_call.1} parent=1 // loop_footer
      %s34 = sadd.s32 1, %s30
    $region7: #{tpu_custom_call.1} parent=1 // loop_footer_branch
      %29 = sbr.rel target = $region3
    $region8: #{tpu_custom_call.1} parent=1 // loop_exit
      _
    %4872 = vsyncpa [#allocation3], 1
    %s4873 = scalar_lea.sflag [#allocation3], 1
    %4874 = vsyncpa %s4873, 1
    %4875 = vsyncpa [#allocation6], 1
    %4876 = vsyncpa [#allocation4], 1
    %s4877 = scalar_lea.sflag [#allocation4], 1
    %4878 = vsyncpa %s4877, 1

</llo_original>
